<compile_context>
chip_gen: v6e
topology: v6e:2x2x1
jax: 0.10.0
libtpu: 0.0.40
codegen_flags: <defaults>
</compile_context>

<pallas_src>
import math
from functools import partial

import jax
import jax.numpy as jnp
from jax.experimental import pallas as pl
from jax.experimental.pallas import tpu as pltpu  # TPU backend (kept for CompilerParams if tiling is reintroduced)

NEG_INF = -1e9  # finite "minus infinity": exp() underflows to 0, no inf-inf NaN


def _layer_norm(y, gamma, beta, eps):
    mu = jnp.mean(y, axis=-1, keepdims=True)
    var = jnp.mean(jnp.square(y - mu), axis=-1, keepdims=True)
    return (y - mu) * jax.lax.rsqrt(var + eps) * gamma + beta


def _pack_rows(rows, n_rows=8):
    """Stack small (E,) vectors into one (n_rows, E) f32 operand (zero-padded)."""
    mat = jnp.stack([r.astype(jnp.float32) for r in rows], axis=0)
    pad = n_rows - mat.shape[0]
    if pad:
        mat = jnp.concatenate([mat, jnp.zeros((pad, mat.shape[1]), jnp.float32)], axis=0)
    return mat


def _entity_encoder_kernel(x_ref, bias_ref, w_in_ref, io_ref,
                           wqkv_ref, wo_ref, lvec_ref, w_out_ref,
                           o_ref, *, num_layers, num_heads, eps):
    """Whole EntityEncoder forward on a (B*N, d_model) token slab (single step)."""
    E = w_in_ref.shape[1]
    Dh = E // num_heads
    scale = 1.0 / math.sqrt(Dh)
    mm_dtype = w_in_ref.dtype            # matmul operand dtype (bf16), f32 accumulation

    io = io_ref[...]                     # (8, E) f32: b_in, g_in, b_in_ln, b_out, g_out, b_out_ln
    bias = bias_ref[...]                 # (BN, BN) f32 additive attention bias

    # ---- input projection: Linear -> LayerNorm -> ReLU (Dropout: eval = identity) ----
    # TODO(synk): Dropout(p=0.1) is a training-time stochastic op; eval-mode identity here.
    h = jnp.dot(x_ref[...].astype(mm_dtype), w_in_ref[...],
                preferred_element_type=jnp.float32) + io[0:1, :]
    x = jnp.maximum(_layer_norm(h, io[1:2, :], io[2:3, :], eps), 0.0)    # (BN, E) f32

    # ---- transformer layers: self-attention + residual + LayerNorm ----
    for l in range(num_layers):
        wqkv = wqkv_ref[l]               # (E, 3E) pre-transposed, bf16
        wo = wo_ref[l]                   # (E, E)  pre-transposed, bf16
        lv = lvec_ref[l]                 # (8, E)  f32: bq, bk, bv, bo, gamma, beta

        # fused QKV projection: one MXU push with N = 3E
        qkv = jnp.dot(x.astype(mm_dtype), wqkv,
                      preferred_element_type=jnp.float32)                # (BN, 3E)
        q = (qkv[:, 0:E] + lv[0:1, :]) * scale
        k = qkv[:, E:2 * E] + lv[1:2, :]
        v = qkv[:, 2 * E:3 * E] + lv[2:3, :]

        # per-head attention; head outputs accumulate directly into the output
        # projection (no concatenate, no in-kernel weight transposes).
        attn = jnp.zeros((x.shape[0], E), jnp.float32)
        for hh in range(num_heads):
            lo = hh * Dh
            qh = q[:, lo:lo + Dh]
            kh = k[:, lo:lo + Dh]
            vh = v[:, lo:lo + Dh]
            s = jnp.einsum("ld,md->lm", qh, kh,
                           preferred_element_type=jnp.float32) + bias     # (BN, BN)
            p = jnp.exp(s - jnp.max(s, axis=-1, keepdims=True))
            p = p * pl.reciprocal(jnp.sum(p, axis=-1, keepdims=True), approx=True)
            ctx = jnp.dot(p, vh, preferred_element_type=jnp.float32)      # (BN, Dh)
            attn = attn + jnp.dot(ctx.astype(mm_dtype), wo[lo:lo + Dh, :],
                                  preferred_element_type=jnp.float32)
        attn = attn + lv[3:4, :]

        x = _layer_norm(x + attn, lv[4:5, :], lv[5:6, :], eps)

    # ---- output projection: Linear -> LayerNorm ----
    out = jnp.dot(x.astype(mm_dtype), w_out_ref[...],
                  preferred_element_type=jnp.float32) + io[3:4, :]
    o_ref[...] = _layer_norm(out, io[4:5, :], io[5:6, :], eps)


def entity_encoder_forward(entities, mask, params, *, num_heads,
                           eps=1e-5, matmul_dtype=jnp.bfloat16):
    """entities: (B, N, input_dim) f32; mask: (B, N) bool (True == ignore key) or None.
    Returns (B, N, d_model) f32."""
    B, N, _ = entities.shape
    E = params["w_in"].shape[0]
    num_layers = len(params["layers"])
    BN = B * N

    # Batch folded into the matmul M dimension.
    x_flat = entities.reshape(BN, -1).astype(jnp.float32)

    # Additive attention bias (finite, precomputed once): key-padding mask plus
    # batch block-diagonal structure over the folded (B*N) token axis.
    key_mask = jnp.zeros((B, N), bool) if mask is None else mask.astype(bool)
    batch_id = jnp.repeat(jnp.arange(B), N)                                # (BN,)
    allowed = (batch_id[:, None] == batch_id[None, :]) & (~key_mask.reshape(BN))[None, :]
    attn_bias = jnp.where(allowed, 0.0, NEG_INF).astype(jnp.float32)       # (BN, BN)

    # Pre-transposed (bf16) weights; packed bias / LayerNorm vectors.
    w_in_t = params["w_in"].T.astype(matmul_dtype)                         # (Din, E)
    w_out_t = params["w_out"].T.astype(matmul_dtype)                       # (E, E)
    io_vecs = _pack_rows([params["b_in"], params["ln_in_g"], params["ln_in_b"],
                          params["b_out"], params["ln_out_g"], params["ln_out_b"]])
    wqkv_t = jnp.stack([lp["w_qkv"].T for lp in params["layers"]]).astype(matmul_dtype)  # (L, E, 3E)
    wo_t = jnp.stack([lp["w_o"].T for lp in params["layers"]]).astype(matmul_dtype)      # (L, E, E)
    lvecs = jnp.stack([
        _pack_rows([lp["b_qkv"][0:E], lp["b_qkv"][E:2 * E], lp["b_qkv"][2 * E:3 * E],
                    lp["b_o"], lp["ln_g"], lp["ln_b"]])
        for lp in params["layers"]])                                       # (L, 8, E)

    kernel = partial(_entity_encoder_kernel, num_layers=num_layers,
                     num_heads=num_heads, eps=eps)

    # Single grid-less call: all operands fit comfortably in VMEM at these
    # shapes, so the full forward is one fused step (no per-step pipeline
    # overhead, one lane/sublane-friendly (B*N, E) output store).
    # For large B, reintroduce a batch-parallel grid axis (dimension_semantics
    # =("parallel",)) so both v7x TensorCores get work; for large N, tile the
    # (L, L) scores flash-style to respect v7x's 64 MiB VMEM.
    out_flat = pl.pallas_call(
        kernel,
        out_shape=jax.ShapeDtypeStruct((BN, E), jnp.float32),
    )(x_flat, attn_bias, w_in_t, io_vecs, wqkv_t, wo_t, lvecs, w_out_t)

    return out_flat.reshape(B, N, E)


def _reference(entities, mask, params, *, num_heads, eps=1e-5,
               matmul_dtype=jnp.bfloat16):
    """Pure-JAX reference for EntityEncoder.forward (eval mode), using the same
    matmul operand dtype as the kernel so the comparison is apples-to-apples."""
    B, N, _ = entities.shape
    E = params["w_in"].shape[0]
    H = num_heads
    Dh = E // H

    def lin(x, w, b):                    # PyTorch Linear: y = x @ W^T + b
        return jnp.dot(x.astype(matmul_dtype), w.T.astype(matmul_dtype),
                       preferred_element_type=jnp.float32) + b

    def ln(y, g, b):
        mu = jnp.mean(y, axis=-1, keepdims=True)
        var = jnp.mean((y - mu) ** 2, axis=-1, keepdims=True)
        return (y - mu) / jnp.sqrt(var + eps) * g + b

    x = jnp.maximum(ln(lin(entities, params["w_in"], params["b_in"]),
                       params["ln_in_g"], params["ln_in_b"]), 0.0)        # (B, N, E)

    if mask is None:
        addm = jnp.zeros((B, 1, 1, N), jnp.float32)
    else:
        addm = jnp.where(mask[:, None, None, :], NEG_INF, 0.0)

    for lp in params["layers"]:
        qkv = lin(x, lp["w_qkv"], lp["b_qkv"])                            # (B, N, 3E)
        q = qkv[..., 0:E].reshape(B, N, H, Dh) / math.sqrt(Dh)
        k = qkv[..., E:2 * E].reshape(B, N, H, Dh)
        v = qkv[..., 2 * E:3 * E].reshape(B, N, H, Dh)
        s = jnp.einsum("bqhd,bkhd->bhqk", q, k,
                       preferred_element_type=jnp.float32) + addm
        p = jax.nn.softmax(s, axis=-1)
        ctx = jnp.einsum("bhqk,bkhd->bqhd", p, v,
                         preferred_element_type=jnp.float32).reshape(B, N, E)
        o = lin(ctx, lp["w_o"], lp["b_o"])
        x = ln(x + o, lp["ln_g"], lp["ln_b"])

    out = ln(lin(x, params["w_out"], params["b_out"]),
             params["ln_out_g"], params["ln_out_b"])
    return out


if __name__ == "__main__":
    B, N, DIN = 2, 8, 16          # batch, num_entities, input_dim
    E, H, L = 32, 4, 3            # d_model, num_heads, num_layers

    key = jax.random.PRNGKey(0)
    kit = iter(jax.random.split(key, 40))

    def u(shape, s):
        return jax.random.uniform(next(kit), shape, jnp.float32, -s, s)

    s_in = 1.0 / math.sqrt(DIN)
    s_e = 1.0 / math.sqrt(E)

    params = {
        "w_in": u((E, DIN), s_in),
        "b_in": u((E,), s_in),
        "ln_in_g": 1.0 + 0.1 * u((E,), 1.0),
        "ln_in_b": 0.1 * u((E,), 1.0),
        "w_out": u((E, E), s_e),
        "b_out": u((E,), s_e),
        "ln_out_g": 1.0 + 0.1 * u((E,), 1.0),
        "ln_out_b": 0.1 * u((E,), 1.0),
        "layers": [
            {
                "w_qkv": u((3 * E, E), s_e),
                "b_qkv": u((3 * E,), s_e),
                "w_o": u((E, E), s_e),
                "b_o": u((E,), s_e),
                "ln_g": 1.0 + 0.1 * u((E,), 1.0),
                "ln_b": 0.1 * u((E,), 1.0),
            }
            for _ in range(L)
        ],
    }

    entities = jax.random.normal(next(kit), (B, N, DIN), jnp.float32)
    # key_padding_mask: True == ignore that entity (mask last 2 entities of batch 1)
    mask = jnp.zeros((B, N), bool).at[1, -2:].set(True)

    out = entity_encoder_forward(entities, mask, params, num_heads=H)
    out = jax.block_until_ready(out)

    ref = _reference(entities, mask, params, num_heads=H)
    assert out.shape == (B, N, E)
    assert bool(jnp.all(jnp.isfinite(out)))
    # tolerance accounts for bf16 matmul operands + EUP approx reciprocal
    assert jnp.allclose(out, ref, atol=1e-2, rtol=1e-2), (
        f"mismatch vs reference, max abs err = {jnp.max(jnp.abs(out - ref))}")

    print("KERNEL_OK")
</pallas_src>

<mosaic_0001>
module attributes {stable_mosaic.version = 11 : i64} {
  func.func @_entity_encoder_kernel(%arg0: memref<16x16xf32, #tpu.memory_space<vmem>>, %arg1: memref<16x16xf32, #tpu.memory_space<vmem>>, %arg2: memref<16x32xbf16, #tpu.memory_space<vmem>>, %arg3: memref<8x32xf32, #tpu.memory_space<vmem>>, %arg4: memref<3x32x96xbf16, #tpu.memory_space<vmem>>, %arg5: memref<3x32x32xbf16, #tpu.memory_space<vmem>>, %arg6: memref<3x8x32xf32, #tpu.memory_space<vmem>>, %arg7: memref<32x32xbf16, #tpu.memory_space<vmem>>, %arg8: memref<16x32xf32, #tpu.memory_space<vmem>>) attributes {dimension_semantics = [], scalar_prefetch = 0 : i64, scratch_operands = 0 : i64, tpu.core_type = #tpu.core_type<tc>} {
    %c0 = arith.constant 0 : index
    %c0_0 = arith.constant 0 : index
    %0 = vector.load %arg3[%c0, %c0_0] : memref<8x32xf32, #tpu.memory_space<vmem>>, vector<8x32xf32>
    %c0_1 = arith.constant 0 : index
    %c0_2 = arith.constant 0 : index
    %1 = vector.load %arg1[%c0_1, %c0_2] : memref<16x16xf32, #tpu.memory_space<vmem>>, vector<16x16xf32>
    %c0_3 = arith.constant 0 : index
    %c0_4 = arith.constant 0 : index
    %2 = vector.load %arg0[%c0_3, %c0_4] : memref<16x16xf32, #tpu.memory_space<vmem>>, vector<16x16xf32>
    %3 = arith.truncf %2 : vector<16x16xf32> to vector<16x16xbf16>
    %c0_5 = arith.constant 0 : index
    %c0_6 = arith.constant 0 : index
    %4 = vector.load %arg2[%c0_5, %c0_6] : memref<16x32xbf16, #tpu.memory_space<vmem>>, vector<16x32xbf16>
    %cst = arith.constant dense<0.000000e+00> : vector<16x32xf32>
    %5 = tpu.matmul %3, %4, %cst {dimension_numbers = #tpu.dot_dimension_numbers<[1], [0], [0], [1], [0, 0, 1, 1], [], []>} : vector<16x16xbf16>, vector<16x32xbf16>, vector<16x32xf32> -> vector<16x32xf32>
    %6 = vector.extract_strided_slice %0 {offsets = [0, 0], sizes = [1, 32], strides = [1, 1]} : vector<8x32xf32> to vector<1x32xf32>
    %7 = vector.broadcast %6 : vector<1x32xf32> to vector<16x32xf32>
    %8 = arith.addf %5, %7 : vector<16x32xf32>
    %9 = vector.extract_strided_slice %0 {offsets = [1, 0], sizes = [1, 32], strides = [1, 1]} : vector<8x32xf32> to vector<1x32xf32>
    %10 = vector.extract_strided_slice %0 {offsets = [2, 0], sizes = [1, 32], strides = [1, 1]} : vector<8x32xf32> to vector<1x32xf32>
    %cst_7 = arith.constant dense<0.000000e+00> : vector<16xf32>
    %11 = vector.multi_reduction <add>, %8, %cst_7 [1] : vector<16x32xf32> to vector<16xf32>
    %12 = vector.shape_cast %11 : vector<16xf32> to vector<16x1xf32>
    %cst_8 = arith.constant 3.200000e+01 : f32
    %13 = vector.broadcast %cst_8 : f32 to vector<16x1xf32>
    %14 = arith.divf %12, %13 : vector<16x1xf32>
    %15 = vector.broadcast %14 : vector<16x1xf32> to vector<16x32xf32>
    %16 = arith.subf %8, %15 : vector<16x32xf32>
    %17 = arith.mulf %16, %16 : vector<16x32xf32>
    %cst_9 = arith.constant dense<0.000000e+00> : vector<16xf32>
    %18 = vector.multi_reduction <add>, %17, %cst_9 [1] : vector<16x32xf32> to vector<16xf32>
    %19 = vector.shape_cast %18 : vector<16xf32> to vector<16x1xf32>
    %cst_10 = arith.constant 3.200000e+01 : f32
    %20 = vector.broadcast %cst_10 : f32 to vector<16x1xf32>
    %21 = arith.divf %19, %20 : vector<16x1xf32>
    %22 = vector.broadcast %14 : vector<16x1xf32> to vector<16x32xf32>
    %23 = arith.subf %8, %22 : vector<16x32xf32>
    %cst_11 = arith.constant 9.99999974E-6 : f32
    %24 = vector.broadcast %cst_11 : f32 to vector<16x1xf32>
    %25 = arith.addf %21, %24 : vector<16x1xf32>
    %26 = math.rsqrt %25 : vector<16x1xf32>
    %27 = vector.broadcast %26 : vector<16x1xf32> to vector<16x32xf32>
    %28 = arith.mulf %23, %27 : vector<16x32xf32>
    %29 = vector.broadcast %9 : vector<1x32xf32> to vector<16x32xf32>
    %30 = arith.mulf %28, %29 : vector<16x32xf32>
    %31 = vector.broadcast %10 : vector<1x32xf32> to vector<16x32xf32>
    %32 = arith.addf %30, %31 : vector<16x32xf32>
    %cst_12 = arith.constant 0.000000e+00 : f32
    %33 = vector.broadcast %cst_12 : f32 to vector<16x32xf32>
    %34 = arith.maximumf %32, %33 : vector<16x32xf32>
    %c0_13 = arith.constant 0 : index
    %c0_14 = arith.constant 0 : index
    %c0_15 = arith.constant 0 : index
    %35 = vector.load %arg4[%c0_13, %c0_14, %c0_15] : memref<3x32x96xbf16, #tpu.memory_space<vmem>>, vector<1x32x96xbf16>
    %36 = vector.shape_cast %35 : vector<1x32x96xbf16> to vector<32x96xbf16>
    %c0_16 = arith.constant 0 : index
    %c0_17 = arith.constant 0 : index
    %c0_18 = arith.constant 0 : index
    %37 = vector.load %arg5[%c0_16, %c0_17, %c0_18] : memref<3x32x32xbf16, #tpu.memory_space<vmem>>, vector<1x32x32xbf16>
    %38 = vector.shape_cast %37 : vector<1x32x32xbf16> to vector<32x32xbf16>
    %c0_19 = arith.constant 0 : index
    %c0_20 = arith.constant 0 : index
    %c0_21 = arith.constant 0 : index
    %39 = vector.load %arg6[%c0_19, %c0_20, %c0_21] : memref<3x8x32xf32, #tpu.memory_space<vmem>>, vector<1x8x32xf32>
    %40 = vector.shape_cast %39 : vector<1x8x32xf32> to vector<8x32xf32>
    %41 = arith.truncf %34 : vector<16x32xf32> to vector<16x32xbf16>
    %cst_22 = arith.constant dense<0.000000e+00> : vector<16x96xf32>
    %42 = tpu.matmul %41, %36, %cst_22 {dimension_numbers = #tpu.dot_dimension_numbers<[1], [0], [0], [1], [0, 0, 1, 1], [], []>} : vector<16x32xbf16>, vector<32x96xbf16>, vector<16x96xf32> -> vector<16x96xf32>
    %43 = vector.extract_strided_slice %42 {offsets = [0, 0], sizes = [16, 32], strides = [1, 1]} : vector<16x96xf32> to vector<16x32xf32>
    %44 = vector.extract_strided_slice %40 {offsets = [0, 0], sizes = [1, 32], strides = [1, 1]} : vector<8x32xf32> to vector<1x32xf32>
    %45 = vector.broadcast %44 : vector<1x32xf32> to vector<16x32xf32>
    %46 = arith.addf %43, %45 : vector<16x32xf32>
    %cst_23 = arith.constant 0.353553385 : f32
    %47 = vector.broadcast %cst_23 : f32 to vector<16x32xf32>
    %48 = arith.mulf %46, %47 : vector<16x32xf32>
    %49 = vector.extract_strided_slice %42 {offsets = [0, 32], sizes = [16, 32], strides = [1, 1]} : vector<16x96xf32> to vector<16x32xf32>
    %50 = vector.extract_strided_slice %40 {offsets = [1, 0], sizes = [1, 32], strides = [1, 1]} : vector<8x32xf32> to vector<1x32xf32>
    %51 = vector.broadcast %50 : vector<1x32xf32> to vector<16x32xf32>
    %52 = arith.addf %49, %51 : vector<16x32xf32>
    %53 = vector.extract_strided_slice %42 {offsets = [0, 64], sizes = [16, 32], strides = [1, 1]} : vector<16x96xf32> to vector<16x32xf32>
    %54 = vector.extract_strided_slice %40 {offsets = [2, 0], sizes = [1, 32], strides = [1, 1]} : vector<8x32xf32> to vector<1x32xf32>
    %55 = vector.broadcast %54 : vector<1x32xf32> to vector<16x32xf32>
    %56 = arith.addf %53, %55 : vector<16x32xf32>
    %cst_24 = arith.constant 0.000000e+00 : f32
    %57 = vector.broadcast %cst_24 : f32 to vector<16x32xf32>
    %58 = vector.extract_strided_slice %48 {offsets = [0, 0], sizes = [16, 8], strides = [1, 1]} : vector<16x32xf32> to vector<16x8xf32>
    %59 = vector.extract_strided_slice %52 {offsets = [0, 0], sizes = [16, 8], strides = [1, 1]} : vector<16x32xf32> to vector<16x8xf32>
    %60 = vector.extract_strided_slice %56 {offsets = [0, 0], sizes = [16, 8], strides = [1, 1]} : vector<16x32xf32> to vector<16x8xf32>
    "tpu.trace_start"() <{level = 10 : i32, message = "ld,md->lm"}> : () -> ()
    %cst_25 = arith.constant dense<0.000000e+00> : vector<16x16xf32>
    %61 = tpu.matmul %58, %59, %cst_25 {dimension_numbers = #tpu.dot_dimension_numbers<[1], [1], [0], [0], [0, 0, 1, 0], [], []>} : vector<16x8xf32>, vector<16x8xf32>, vector<16x16xf32> -> vector<16x16xf32>
    "tpu.trace_stop"() : () -> ()
    %62 = arith.addf %61, %1 : vector<16x16xf32>
    %cst_26 = arith.constant dense<0xFF800000> : vector<16xf32>
    %63 = vector.multi_reduction <maximumf>, %62, %cst_26 [1] : vector<16x16xf32> to vector<16xf32>
    %64 = vector.shape_cast %63 : vector<16xf32> to vector<16x1xf32>
    %65 = vector.broadcast %64 : vector<16x1xf32> to vector<16x16xf32>
    %66 = arith.subf %62, %65 : vector<16x16xf32>
    %67 = math.exp %66 : vector<16x16xf32>
    %cst_27 = arith.constant dense<0.000000e+00> : vector<16xf32>
    %68 = vector.multi_reduction <add>, %67, %cst_27 [1] : vector<16x16xf32> to vector<16xf32>
    %69 = vector.shape_cast %68 : vector<16xf32> to vector<16x1xf32>
    %70 = tpu.reciprocal %69 {approx = true} : vector<16x1xf32> -> vector<16x1xf32>
    %71 = vector.broadcast %70 : vector<16x1xf32> to vector<16x16xf32>
    %72 = arith.mulf %67, %71 : vector<16x16xf32>
    %cst_28 = arith.constant dense<0.000000e+00> : vector<16x8xf32>
    %73 = tpu.matmul %72, %60, %cst_28 {dimension_numbers = #tpu.dot_dimension_numbers<[1], [0], [0], [1], [0, 0, 1, 1], [], []>} : vector<16x16xf32>, vector<16x8xf32>, vector<16x8xf32> -> vector<16x8xf32>
    %74 = arith.truncf %73 : vector<16x8xf32> to vector<16x8xbf16>
    %75 = vector.extract_strided_slice %38 {offsets = [0, 0], sizes = [8, 32], strides = [1, 1]} : vector<32x32xbf16> to vector<8x32xbf16>
    %cst_29 = arith.constant dense<0.000000e+00> : vector<16x32xf32>
    %76 = tpu.matmul %74, %75, %cst_29 {dimension_numbers = #tpu.dot_dimension_numbers<[1], [0], [0], [1], [0, 0, 1, 1], [], []>} : vector<16x8xbf16>, vector<8x32xbf16>, vector<16x32xf32> -> vector<16x32xf32>
    %77 = arith.addf %57, %76 : vector<16x32xf32>
    %78 = vector.extract_strided_slice %48 {offsets = [0, 8], sizes = [16, 8], strides = [1, 1]} : vector<16x32xf32> to vector<16x8xf32>
    %79 = vector.extract_strided_slice %52 {offsets = [0, 8], sizes = [16, 8], strides = [1, 1]} : vector<16x32xf32> to vector<16x8xf32>
    %80 = vector.extract_strided_slice %56 {offsets = [0, 8], sizes = [16, 8], strides = [1, 1]} : vector<16x32xf32> to vector<16x8xf32>
    "tpu.trace_start"() <{level = 10 : i32, message = "ld,md->lm"}> : () -> ()
    %cst_30 = arith.constant dense<0.000000e+00> : vector<16x16xf32>
    %81 = tpu.matmul %78, %79, %cst_30 {dimension_numbers = #tpu.dot_dimension_numbers<[1], [1], [0], [0], [0, 0, 1, 0], [], []>} : vector<16x8xf32>, vector<16x8xf32>, vector<16x16xf32> -> vector<16x16xf32>
    "tpu.trace_stop"() : () -> ()
    %82 = arith.addf %81, %1 : vector<16x16xf32>
    %cst_31 = arith.constant dense<0xFF800000> : vector<16xf32>
    %83 = vector.multi_reduction <maximumf>, %82, %cst_31 [1] : vector<16x16xf32> to vector<16xf32>
    %84 = vector.shape_cast %83 : vector<16xf32> to vector<16x1xf32>
    %85 = vector.broadcast %84 : vector<16x1xf32> to vector<16x16xf32>
    %86 = arith.subf %82, %85 : vector<16x16xf32>
    %87 = math.exp %86 : vector<16x16xf32>
    %cst_32 = arith.constant dense<0.000000e+00> : vector<16xf32>
    %88 = vector.multi_reduction <add>, %87, %cst_32 [1] : vector<16x16xf32> to vector<16xf32>
    %89 = vector.shape_cast %88 : vector<16xf32> to vector<16x1xf32>
    %90 = tpu.reciprocal %89 {approx = true} : vector<16x1xf32> -> vector<16x1xf32>
    %91 = vector.broadcast %90 : vector<16x1xf32> to vector<16x16xf32>
    %92 = arith.mulf %87, %91 : vector<16x16xf32>
    %cst_33 = arith.constant dense<0.000000e+00> : vector<16x8xf32>
    %93 = tpu.matmul %92, %80, %cst_33 {dimension_numbers = #tpu.dot_dimension_numbers<[1], [0], [0], [1], [0, 0, 1, 1], [], []>} : vector<16x16xf32>, vector<16x8xf32>, vector<16x8xf32> -> vector<16x8xf32>
    %94 = arith.truncf %93 : vector<16x8xf32> to vector<16x8xbf16>
    %95 = vector.extract_strided_slice %38 {offsets = [8, 0], sizes = [8, 32], strides = [1, 1]} : vector<32x32xbf16> to vector<8x32xbf16>
    %cst_34 = arith.constant dense<0.000000e+00> : vector<16x32xf32>
    %96 = tpu.matmul %94, %95, %cst_34 {dimension_numbers = #tpu.dot_dimension_numbers<[1], [0], [0], [1], [0, 0, 1, 1], [], []>} : vector<16x8xbf16>, vector<8x32xbf16>, vector<16x32xf32> -> vector<16x32xf32>
    %97 = arith.addf %77, %96 : vector<16x32xf32>
    %98 = vector.extract_strided_slice %48 {offsets = [0, 16], sizes = [16, 8], strides = [1, 1]} : vector<16x32xf32> to vector<16x8xf32>
    %99 = vector.extract_strided_slice %52 {offsets = [0, 16], sizes = [16, 8], strides = [1, 1]} : vector<16x32xf32> to vector<16x8xf32>
    %100 = vector.extract_strided_slice %56 {offsets = [0, 16], sizes = [16, 8], strides = [1, 1]} : vector<16x32xf32> to vector<16x8xf32>
    "tpu.trace_start"() <{level = 10 : i32, message = "ld,md->lm"}> : () -> ()
    %cst_35 = arith.constant dense<0.000000e+00> : vector<16x16xf32>
    %101 = tpu.matmul %98, %99, %cst_35 {dimension_numbers = #tpu.dot_dimension_numbers<[1], [1], [0], [0], [0, 0, 1, 0], [], []>} : vector<16x8xf32>, vector<16x8xf32>, vector<16x16xf32> -> vector<16x16xf32>
    "tpu.trace_stop"() : () -> ()
    %102 = arith.addf %101, %1 : vector<16x16xf32>
    %cst_36 = arith.constant dense<0xFF800000> : vector<16xf32>
    %103 = vector.multi_reduction <maximumf>, %102, %cst_36 [1] : vector<16x16xf32> to vector<16xf32>
    %104 = vector.shape_cast %103 : vector<16xf32> to vector<16x1xf32>
    %105 = vector.broadcast %104 : vector<16x1xf32> to vector<16x16xf32>
    %106 = arith.subf %102, %105 : vector<16x16xf32>
    %107 = math.exp %106 : vector<16x16xf32>
    %cst_37 = arith.constant dense<0.000000e+00> : vector<16xf32>
    %108 = vector.multi_reduction <add>, %107, %cst_37 [1] : vector<16x16xf32> to vector<16xf32>
    %109 = vector.shape_cast %108 : vector<16xf32> to vector<16x1xf32>
    %110 = tpu.reciprocal %109 {approx = true} : vector<16x1xf32> -> vector<16x1xf32>
    %111 = vector.broadcast %110 : vector<16x1xf32> to vector<16x16xf32>
    %112 = arith.mulf %107, %111 : vector<16x16xf32>
    %cst_38 = arith.constant dense<0.000000e+00> : vector<16x8xf32>
    %113 = tpu.matmul %112, %100, %cst_38 {dimension_numbers = #tpu.dot_dimension_numbers<[1], [0], [0], [1], [0, 0, 1, 1], [], []>} : vector<16x16xf32>, vector<16x8xf32>, vector<16x8xf32> -> vector<16x8xf32>
    %114 = arith.truncf %113 : vector<16x8xf32> to vector<16x8xbf16>
    %115 = vector.extract_strided_slice %38 {offsets = [16, 0], sizes = [8, 32], strides = [1, 1]} : vector<32x32xbf16> to vector<8x32xbf16>
    %cst_39 = arith.constant dense<0.000000e+00> : vector<16x32xf32>
    %116 = tpu.matmul %114, %115, %cst_39 {dimension_numbers = #tpu.dot_dimension_numbers<[1], [0], [0], [1], [0, 0, 1, 1], [], []>} : vector<16x8xbf16>, vector<8x32xbf16>, vector<16x32xf32> -> vector<16x32xf32>
    %117 = arith.addf %97, %116 : vector<16x32xf32>
    %118 = vector.extract_strided_slice %48 {offsets = [0, 24], sizes = [16, 8], strides = [1, 1]} : vector<16x32xf32> to vector<16x8xf32>
    %119 = vector.extract_strided_slice %52 {offsets = [0, 24], sizes = [16, 8], strides = [1, 1]} : vector<16x32xf32> to vector<16x8xf32>
    %120 = vector.extract_strided_slice %56 {offsets = [0, 24], sizes = [16, 8], strides = [1, 1]} : vector<16x32xf32> to vector<16x8xf32>
    "tpu.trace_start"() <{level = 10 : i32, message = "ld,md->lm"}> : () -> ()
    %cst_40 = arith.constant dense<0.000000e+00> : vector<16x16xf32>
    %121 = tpu.matmul %118, %119, %cst_40 {dimension_numbers = #tpu.dot_dimension_numbers<[1], [1], [0], [0], [0, 0, 1, 0], [], []>} : vector<16x8xf32>, vector<16x8xf32>, vector<16x16xf32> -> vector<16x16xf32>
    "tpu.trace_stop"() : () -> ()
    %122 = arith.addf %121, %1 : vector<16x16xf32>
    %cst_41 = arith.constant dense<0xFF800000> : vector<16xf32>
    %123 = vector.multi_reduction <maximumf>, %122, %cst_41 [1] : vector<16x16xf32> to vector<16xf32>
    %124 = vector.shape_cast %123 : vector<16xf32> to vector<16x1xf32>
    %125 = vector.broadcast %124 : vector<16x1xf32> to vector<16x16xf32>
    %126 = arith.subf %122, %125 : vector<16x16xf32>
    %127 = math.exp %126 : vector<16x16xf32>
    %cst_42 = arith.constant dense<0.000000e+00> : vector<16xf32>
    %128 = vector.multi_reduction <add>, %127, %cst_42 [1] : vector<16x16xf32> to vector<16xf32>
    %129 = vector.shape_cast %128 : vector<16xf32> to vector<16x1xf32>
    %130 = tpu.reciprocal %129 {approx = true} : vector<16x1xf32> -> vector<16x1xf32>
    %131 = vector.broadcast %130 : vector<16x1xf32> to vector<16x16xf32>
    %132 = arith.mulf %127, %131 : vector<16x16xf32>
    %cst_43 = arith.constant dense<0.000000e+00> : vector<16x8xf32>
    %133 = tpu.matmul %132, %120, %cst_43 {dimension_numbers = #tpu.dot_dimension_numbers<[1], [0], [0], [1], [0, 0, 1, 1], [], []>} : vector<16x16xf32>, vector<16x8xf32>, vector<16x8xf32> -> vector<16x8xf32>
    %134 = arith.truncf %133 : vector<16x8xf32> to vector<16x8xbf16>
    %135 = vector.extract_strided_slice %38 {offsets = [24, 0], sizes = [8, 32], strides = [1, 1]} : vector<32x32xbf16> to vector<8x32xbf16>
    %cst_44 = arith.constant dense<0.000000e+00> : vector<16x32xf32>
    %136 = tpu.matmul %134, %135, %cst_44 {dimension_numbers = #tpu.dot_dimension_numbers<[1], [0], [0], [1], [0, 0, 1, 1], [], []>} : vector<16x8xbf16>, vector<8x32xbf16>, vector<16x32xf32> -> vector<16x32xf32>
    %137 = arith.addf %117, %136 : vector<16x32xf32>
    %138 = vector.extract_strided_slice %40 {offsets = [3, 0], sizes = [1, 32], strides = [1, 1]} : vector<8x32xf32> to vector<1x32xf32>
    %139 = vector.broadcast %138 : vector<1x32xf32> to vector<16x32xf32>
    %140 = arith.addf %137, %139 : vector<16x32xf32>
    %141 = arith.addf %34, %140 : vector<16x32xf32>
    %142 = vector.extract_strided_slice %40 {offsets = [4, 0], sizes = [1, 32], strides = [1, 1]} : vector<8x32xf32> to vector<1x32xf32>
    %143 = vector.extract_strided_slice %40 {offsets = [5, 0], sizes = [1, 32], strides = [1, 1]} : vector<8x32xf32> to vector<1x32xf32>
    %cst_45 = arith.constant dense<0.000000e+00> : vector<16xf32>
    %144 = vector.multi_reduction <add>, %141, %cst_45 [1] : vector<16x32xf32> to vector<16xf32>
    %145 = vector.shape_cast %144 : vector<16xf32> to vector<16x1xf32>
    %cst_46 = arith.constant 3.200000e+01 : f32
    %146 = vector.broadcast %cst_46 : f32 to vector<16x1xf32>
    %147 = arith.divf %145, %146 : vector<16x1xf32>
    %148 = vector.broadcast %147 : vector<16x1xf32> to vector<16x32xf32>
    %149 = arith.subf %141, %148 : vector<16x32xf32>
    %150 = arith.mulf %149, %149 : vector<16x32xf32>
    %cst_47 = arith.constant dense<0.000000e+00> : vector<16xf32>
    %151 = vector.multi_reduction <add>, %150, %cst_47 [1] : vector<16x32xf32> to vector<16xf32>
    %152 = vector.shape_cast %151 : vector<16xf32> to vector<16x1xf32>
    %cst_48 = arith.constant 3.200000e+01 : f32
    %153 = vector.broadcast %cst_48 : f32 to vector<16x1xf32>
    %154 = arith.divf %152, %153 : vector<16x1xf32>
    %155 = vector.broadcast %147 : vector<16x1xf32> to vector<16x32xf32>
    %156 = arith.subf %141, %155 : vector<16x32xf32>
    %cst_49 = arith.constant 9.99999974E-6 : f32
    %157 = vector.broadcast %cst_49 : f32 to vector<16x1xf32>
    %158 = arith.addf %154, %157 : vector<16x1xf32>
    %159 = math.rsqrt %158 : vector<16x1xf32>
    %160 = vector.broadcast %159 : vector<16x1xf32> to vector<16x32xf32>
    %161 = arith.mulf %156, %160 : vector<16x32xf32>
    %162 = vector.broadcast %142 : vector<1x32xf32> to vector<16x32xf32>
    %163 = arith.mulf %161, %162 : vector<16x32xf32>
    %164 = vector.broadcast %143 : vector<1x32xf32> to vector<16x32xf32>
    %165 = arith.addf %163, %164 : vector<16x32xf32>
    %c1 = arith.constant 1 : index
    %c0_50 = arith.constant 0 : index
    %c0_51 = arith.constant 0 : index
    %166 = vector.load %arg4[%c1, %c0_50, %c0_51] : memref<3x32x96xbf16, #tpu.memory_space<vmem>>, vector<1x32x96xbf16>
    %167 = vector.shape_cast %166 : vector<1x32x96xbf16> to vector<32x96xbf16>
    %c1_52 = arith.constant 1 : index
    %c0_53 = arith.constant 0 : index
    %c0_54 = arith.constant 0 : index
    %168 = vector.load %arg5[%c1_52, %c0_53, %c0_54] : memref<3x32x32xbf16, #tpu.memory_space<vmem>>, vector<1x32x32xbf16>
    %169 = vector.shape_cast %168 : vector<1x32x32xbf16> to vector<32x32xbf16>
    %c1_55 = arith.constant 1 : index
    %c0_56 = arith.constant 0 : index
    %c0_57 = arith.constant 0 : index
    %170 = vector.load %arg6[%c1_55, %c0_56, %c0_57] : memref<3x8x32xf32, #tpu.memory_space<vmem>>, vector<1x8x32xf32>
    %171 = vector.shape_cast %170 : vector<1x8x32xf32> to vector<8x32xf32>
    %172 = arith.truncf %165 : vector<16x32xf32> to vector<16x32xbf16>
    %cst_58 = arith.constant dense<0.000000e+00> : vector<16x96xf32>
    %173 = tpu.matmul %172, %167, %cst_58 {dimension_numbers = #tpu.dot_dimension_numbers<[1], [0], [0], [1], [0, 0, 1, 1], [], []>} : vector<16x32xbf16>, vector<32x96xbf16>, vector<16x96xf32> -> vector<16x96xf32>
    %174 = vector.extract_strided_slice %173 {offsets = [0, 0], sizes = [16, 32], strides = [1, 1]} : vector<16x96xf32> to vector<16x32xf32>
    %175 = vector.extract_strided_slice %171 {offsets = [0, 0], sizes = [1, 32], strides = [1, 1]} : vector<8x32xf32> to vector<1x32xf32>
    %176 = vector.broadcast %175 : vector<1x32xf32> to vector<16x32xf32>
    %177 = arith.addf %174, %176 : vector<16x32xf32>
    %cst_59 = arith.constant 0.353553385 : f32
    %178 = vector.broadcast %cst_59 : f32 to vector<16x32xf32>
    %179 = arith.mulf %177, %178 : vector<16x32xf32>
    %180 = vector.extract_strided_slice %173 {offsets = [0, 32], sizes = [16, 32], strides = [1, 1]} : vector<16x96xf32> to vector<16x32xf32>
    %181 = vector.extract_strided_slice %171 {offsets = [1, 0], sizes = [1, 32], strides = [1, 1]} : vector<8x32xf32> to vector<1x32xf32>
    %182 = vector.broadcast %181 : vector<1x32xf32> to vector<16x32xf32>
    %183 = arith.addf %180, %182 : vector<16x32xf32>
    %184 = vector.extract_strided_slice %173 {offsets = [0, 64], sizes = [16, 32], strides = [1, 1]} : vector<16x96xf32> to vector<16x32xf32>
    %185 = vector.extract_strided_slice %171 {offsets = [2, 0], sizes = [1, 32], strides = [1, 1]} : vector<8x32xf32> to vector<1x32xf32>
    %186 = vector.broadcast %185 : vector<1x32xf32> to vector<16x32xf32>
    %187 = arith.addf %184, %186 : vector<16x32xf32>
    %cst_60 = arith.constant 0.000000e+00 : f32
    %188 = vector.broadcast %cst_60 : f32 to vector<16x32xf32>
    %189 = vector.extract_strided_slice %179 {offsets = [0, 0], sizes = [16, 8], strides = [1, 1]} : vector<16x32xf32> to vector<16x8xf32>
    %190 = vector.extract_strided_slice %183 {offsets = [0, 0], sizes = [16, 8], strides = [1, 1]} : vector<16x32xf32> to vector<16x8xf32>
    %191 = vector.extract_strided_slice %187 {offsets = [0, 0], sizes = [16, 8], strides = [1, 1]} : vector<16x32xf32> to vector<16x8xf32>
    "tpu.trace_start"() <{level = 10 : i32, message = "ld,md->lm"}> : () -> ()
    %cst_61 = arith.constant dense<0.000000e+00> : vector<16x16xf32>
    %192 = tpu.matmul %189, %190, %cst_61 {dimension_numbers = #tpu.dot_dimension_numbers<[1], [1], [0], [0], [0, 0, 1, 0], [], []>} : vector<16x8xf32>, vector<16x8xf32>, vector<16x16xf32> -> vector<16x16xf32>
    "tpu.trace_stop"() : () -> ()
    %193 = arith.addf %192, %1 : vector<16x16xf32>
    %cst_62 = arith.constant dense<0xFF800000> : vector<16xf32>
    %194 = vector.multi_reduction <maximumf>, %193, %cst_62 [1] : vector<16x16xf32> to vector<16xf32>
    %195 = vector.shape_cast %194 : vector<16xf32> to vector<16x1xf32>
    %196 = vector.broadcast %195 : vector<16x1xf32> to vector<16x16xf32>
    %197 = arith.subf %193, %196 : vector<16x16xf32>
    %198 = math.exp %197 : vector<16x16xf32>
    %cst_63 = arith.constant dense<0.000000e+00> : vector<16xf32>
    %199 = vector.multi_reduction <add>, %198, %cst_63 [1] : vector<16x16xf32> to vector<16xf32>
    %200 = vector.shape_cast %199 : vector<16xf32> to vector<16x1xf32>
    %201 = tpu.reciprocal %200 {approx = true} : vector<16x1xf32> -> vector<16x1xf32>
    %202 = vector.broadcast %201 : vector<16x1xf32> to vector<16x16xf32>
    %203 = arith.mulf %198, %202 : vector<16x16xf32>
    %cst_64 = arith.constant dense<0.000000e+00> : vector<16x8xf32>
    %204 = tpu.matmul %203, %191, %cst_64 {dimension_numbers = #tpu.dot_dimension_numbers<[1], [0], [0], [1], [0, 0, 1, 1], [], []>} : vector<16x16xf32>, vector<16x8xf32>, vector<16x8xf32> -> vector<16x8xf32>
    %205 = arith.truncf %204 : vector<16x8xf32> to vector<16x8xbf16>
    %206 = vector.extract_strided_slice %169 {offsets = [0, 0], sizes = [8, 32], strides = [1, 1]} : vector<32x32xbf16> to vector<8x32xbf16>
    %cst_65 = arith.constant dense<0.000000e+00> : vector<16x32xf32>
    %207 = tpu.matmul %205, %206, %cst_65 {dimension_numbers = #tpu.dot_dimension_numbers<[1], [0], [0], [1], [0, 0, 1, 1], [], []>} : vector<16x8xbf16>, vector<8x32xbf16>, vector<16x32xf32> -> vector<16x32xf32>
    %208 = arith.addf %188, %207 : vector<16x32xf32>
    %209 = vector.extract_strided_slice %179 {offsets = [0, 8], sizes = [16, 8], strides = [1, 1]} : vector<16x32xf32> to vector<16x8xf32>
    %210 = vector.extract_strided_slice %183 {offsets = [0, 8], sizes = [16, 8], strides = [1, 1]} : vector<16x32xf32> to vector<16x8xf32>
    %211 = vector.extract_strided_slice %187 {offsets = [0, 8], sizes = [16, 8], strides = [1, 1]} : vector<16x32xf32> to vector<16x8xf32>
    "tpu.trace_start"() <{level = 10 : i32, message = "ld,md->lm"}> : () -> ()
    %cst_66 = arith.constant dense<0.000000e+00> : vector<16x16xf32>
    %212 = tpu.matmul %209, %210, %cst_66 {dimension_numbers = #tpu.dot_dimension_numbers<[1], [1], [0], [0], [0, 0, 1, 0], [], []>} : vector<16x8xf32>, vector<16x8xf32>, vector<16x16xf32> -> vector<16x16xf32>
    "tpu.trace_stop"() : () -> ()
    %213 = arith.addf %212, %1 : vector<16x16xf32>
    %cst_67 = arith.constant dense<0xFF800000> : vector<16xf32>
    %214 = vector.multi_reduction <maximumf>, %213, %cst_67 [1] : vector<16x16xf32> to vector<16xf32>
    %215 = vector.shape_cast %214 : vector<16xf32> to vector<16x1xf32>
    %216 = vector.broadcast %215 : vector<16x1xf32> to vector<16x16xf32>
    %217 = arith.subf %213, %216 : vector<16x16xf32>
    %218 = math.exp %217 : vector<16x16xf32>
    %cst_68 = arith.constant dense<0.000000e+00> : vector<16xf32>
    %219 = vector.multi_reduction <add>, %218, %cst_68 [1] : vector<16x16xf32> to vector<16xf32>
    %220 = vector.shape_cast %219 : vector<16xf32> to vector<16x1xf32>
    %221 = tpu.reciprocal %220 {approx = true} : vector<16x1xf32> -> vector<16x1xf32>
    %222 = vector.broadcast %221 : vector<16x1xf32> to vector<16x16xf32>
    %223 = arith.mulf %218, %222 : vector<16x16xf32>
    %cst_69 = arith.constant dense<0.000000e+00> : vector<16x8xf32>
    %224 = tpu.matmul %223, %211, %cst_69 {dimension_numbers = #tpu.dot_dimension_numbers<[1], [0], [0], [1], [0, 0, 1, 1], [], []>} : vector<16x16xf32>, vector<16x8xf32>, vector<16x8xf32> -> vector<16x8xf32>
    %225 = arith.truncf %224 : vector<16x8xf32> to vector<16x8xbf16>
    %226 = vector.extract_strided_slice %169 {offsets = [8, 0], sizes = [8, 32], strides = [1, 1]} : vector<32x32xbf16> to vector<8x32xbf16>
    %cst_70 = arith.constant dense<0.000000e+00> : vector<16x32xf32>
    %227 = tpu.matmul %225, %226, %cst_70 {dimension_numbers = #tpu.dot_dimension_numbers<[1], [0], [0], [1], [0, 0, 1, 1], [], []>} : vector<16x8xbf16>, vector<8x32xbf16>, vector<16x32xf32> -> vector<16x32xf32>
    %228 = arith.addf %208, %227 : vector<16x32xf32>
    %229 = vector.extract_strided_slice %179 {offsets = [0, 16], sizes = [16, 8], strides = [1, 1]} : vector<16x32xf32> to vector<16x8xf32>
    %230 = vector.extract_strided_slice %183 {offsets = [0, 16], sizes = [16, 8], strides = [1, 1]} : vector<16x32xf32> to vector<16x8xf32>
    %231 = vector.extract_strided_slice %187 {offsets = [0, 16], sizes = [16, 8], strides = [1, 1]} : vector<16x32xf32> to vector<16x8xf32>
    "tpu.trace_start"() <{level = 10 : i32, message = "ld,md->lm"}> : () -> ()
    %cst_71 = arith.constant dense<0.000000e+00> : vector<16x16xf32>
    %232 = tpu.matmul %229, %230, %cst_71 {dimension_numbers = #tpu.dot_dimension_numbers<[1], [1], [0], [0], [0, 0, 1, 0], [], []>} : vector<16x8xf32>, vector<16x8xf32>, vector<16x16xf32> -> vector<16x16xf32>
    "tpu.trace_stop"() : () -> ()
    %233 = arith.addf %232, %1 : vector<16x16xf32>
    %cst_72 = arith.constant dense<0xFF800000> : vector<16xf32>
    %234 = vector.multi_reduction <maximumf>, %233, %cst_72 [1] : vector<16x16xf32> to vector<16xf32>
    %235 = vector.shape_cast %234 : vector<16xf32> to vector<16x1xf32>
    %236 = vector.broadcast %235 : vector<16x1xf32> to vector<16x16xf32>
    %237 = arith.subf %233, %236 : vector<16x16xf32>
    %238 = math.exp %237 : vector<16x16xf32>
    %cst_73 = arith.constant dense<0.000000e+00> : vector<16xf32>
    %239 = vector.multi_reduction <add>, %238, %cst_73 [1] : vector<16x16xf32> to vector<16xf32>
    %240 = vector.shape_cast %239 : vector<16xf32> to vector<16x1xf32>
    %241 = tpu.reciprocal %240 {approx = true} : vector<16x1xf32> -> vector<16x1xf32>
    %242 = vector.broadcast %241 : vector<16x1xf32> to vector<16x16xf32>
    %243 = arith.mulf %238, %242 : vector<16x16xf32>
    %cst_74 = arith.constant dense<0.000000e+00> : vector<16x8xf32>
    %244 = tpu.matmul %243, %231, %cst_74 {dimension_numbers = #tpu.dot_dimension_numbers<[1], [0], [0], [1], [0, 0, 1, 1], [], []>} : vector<16x16xf32>, vector<16x8xf32>, vector<16x8xf32> -> vector<16x8xf32>
    %245 = arith.truncf %244 : vector<16x8xf32> to vector<16x8xbf16>
    %246 = vector.extract_strided_slice %169 {offsets = [16, 0], sizes = [8, 32], strides = [1, 1]} : vector<32x32xbf16> to vector<8x32xbf16>
    %cst_75 = arith.constant dense<0.000000e+00> : vector<16x32xf32>
    %247 = tpu.matmul %245, %246, %cst_75 {dimension_numbers = #tpu.dot_dimension_numbers<[1], [0], [0], [1], [0, 0, 1, 1], [], []>} : vector<16x8xbf16>, vector<8x32xbf16>, vector<16x32xf32> -> vector<16x32xf32>
    %248 = arith.addf %228, %247 : vector<16x32xf32>
    %249 = vector.extract_strided_slice %179 {offsets = [0, 24], sizes = [16, 8], strides = [1, 1]} : vector<16x32xf32> to vector<16x8xf32>
    %250 = vector.extract_strided_slice %183 {offsets = [0, 24], sizes = [16, 8], strides = [1, 1]} : vector<16x32xf32> to vector<16x8xf32>
    %251 = vector.extract_strided_slice %187 {offsets = [0, 24], sizes = [16, 8], strides = [1, 1]} : vector<16x32xf32> to vector<16x8xf32>
    "tpu.trace_start"() <{level = 10 : i32, message = "ld,md->lm"}> : () -> ()
    %cst_76 = arith.constant dense<0.000000e+00> : vector<16x16xf32>
    %252 = tpu.matmul %249, %250, %cst_76 {dimension_numbers = #tpu.dot_dimension_numbers<[1], [1], [0], [0], [0, 0, 1, 0], [], []>} : vector<16x8xf32>, vector<16x8xf32>, vector<16x16xf32> -> vector<16x16xf32>
    "tpu.trace_stop"() : () -> ()
    %253 = arith.addf %252, %1 : vector<16x16xf32>
    %cst_77 = arith.constant dense<0xFF800000> : vector<16xf32>
    %254 = vector.multi_reduction <maximumf>, %253, %cst_77 [1] : vector<16x16xf32> to vector<16xf32>
    %255 = vector.shape_cast %254 : vector<16xf32> to vector<16x1xf32>
    %256 = vector.broadcast %255 : vector<16x1xf32> to vector<16x16xf32>
    %257 = arith.subf %253, %256 : vector<16x16xf32>
    %258 = math.exp %257 : vector<16x16xf32>
    %cst_78 = arith.constant dense<0.000000e+00> : vector<16xf32>
    %259 = vector.multi_reduction <add>, %258, %cst_78 [1] : vector<16x16xf32> to vector<16xf32>
    %260 = vector.shape_cast %259 : vector<16xf32> to vector<16x1xf32>
    %261 = tpu.reciprocal %260 {approx = true} : vector<16x1xf32> -> vector<16x1xf32>
    %262 = vector.broadcast %261 : vector<16x1xf32> to vector<16x16xf32>
    %263 = arith.mulf %258, %262 : vector<16x16xf32>
    %cst_79 = arith.constant dense<0.000000e+00> : vector<16x8xf32>
    %264 = tpu.matmul %263, %251, %cst_79 {dimension_numbers = #tpu.dot_dimension_numbers<[1], [0], [0], [1], [0, 0, 1, 1], [], []>} : vector<16x16xf32>, vector<16x8xf32>, vector<16x8xf32> -> vector<16x8xf32>
    %265 = arith.truncf %264 : vector<16x8xf32> to vector<16x8xbf16>
    %266 = vector.extract_strided_slice %169 {offsets = [24, 0], sizes = [8, 32], strides = [1, 1]} : vector<32x32xbf16> to vector<8x32xbf16>
    %cst_80 = arith.constant dense<0.000000e+00> : vector<16x32xf32>
    %267 = tpu.matmul %265, %266, %cst_80 {dimension_numbers = #tpu.dot_dimension_numbers<[1], [0], [0], [1], [0, 0, 1, 1], [], []>} : vector<16x8xbf16>, vector<8x32xbf16>, vector<16x32xf32> -> vector<16x32xf32>
    %268 = arith.addf %248, %267 : vector<16x32xf32>
    %269 = vector.extract_strided_slice %171 {offsets = [3, 0], sizes = [1, 32], strides = [1, 1]} : vector<8x32xf32> to vector<1x32xf32>
    %270 = vector.broadcast %269 : vector<1x32xf32> to vector<16x32xf32>
    %271 = arith.addf %268, %270 : vector<16x32xf32>
    %272 = arith.addf %165, %271 : vector<16x32xf32>
    %273 = vector.extract_strided_slice %171 {offsets = [4, 0], sizes = [1, 32], strides = [1, 1]} : vector<8x32xf32> to vector<1x32xf32>
    %274 = vector.extract_strided_slice %171 {offsets = [5, 0], sizes = [1, 32], strides = [1, 1]} : vector<8x32xf32> to vector<1x32xf32>
    %cst_81 = arith.constant dense<0.000000e+00> : vector<16xf32>
    %275 = vector.multi_reduction <add>, %272, %cst_81 [1] : vector<16x32xf32> to vector<16xf32>
    %276 = vector.shape_cast %275 : vector<16xf32> to vector<16x1xf32>
    %cst_82 = arith.constant 3.200000e+01 : f32
    %277 = vector.broadcast %cst_82 : f32 to vector<16x1xf32>
    %278 = arith.divf %276, %277 : vector<16x1xf32>
    %279 = vector.broadcast %278 : vector<16x1xf32> to vector<16x32xf32>
    %280 = arith.subf %272, %279 : vector<16x32xf32>
    %281 = arith.mulf %280, %280 : vector<16x32xf32>
    %cst_83 = arith.constant dense<0.000000e+00> : vector<16xf32>
    %282 = vector.multi_reduction <add>, %281, %cst_83 [1] : vector<16x32xf32> to vector<16xf32>
    %283 = vector.shape_cast %282 : vector<16xf32> to vector<16x1xf32>
    %cst_84 = arith.constant 3.200000e+01 : f32
    %284 = vector.broadcast %cst_84 : f32 to vector<16x1xf32>
    %285 = arith.divf %283, %284 : vector<16x1xf32>
    %286 = vector.broadcast %278 : vector<16x1xf32> to vector<16x32xf32>
    %287 = arith.subf %272, %286 : vector<16x32xf32>
    %cst_85 = arith.constant 9.99999974E-6 : f32
    %288 = vector.broadcast %cst_85 : f32 to vector<16x1xf32>
    %289 = arith.addf %285, %288 : vector<16x1xf32>
    %290 = math.rsqrt %289 : vector<16x1xf32>
    %291 = vector.broadcast %290 : vector<16x1xf32> to vector<16x32xf32>
    %292 = arith.mulf %287, %291 : vector<16x32xf32>
    %293 = vector.broadcast %273 : vector<1x32xf32> to vector<16x32xf32>
    %294 = arith.mulf %292, %293 : vector<16x32xf32>
    %295 = vector.broadcast %274 : vector<1x32xf32> to vector<16x32xf32>
    %296 = arith.addf %294, %295 : vector<16x32xf32>
    %c2 = arith.constant 2 : index
    %c0_86 = arith.constant 0 : index
    %c0_87 = arith.constant 0 : index
    %297 = vector.load %arg4[%c2, %c0_86, %c0_87] : memref<3x32x96xbf16, #tpu.memory_space<vmem>>, vector<1x32x96xbf16>
    %298 = vector.shape_cast %297 : vector<1x32x96xbf16> to vector<32x96xbf16>
    %c2_88 = arith.constant 2 : index
    %c0_89 = arith.constant 0 : index
    %c0_90 = arith.constant 0 : index
    %299 = vector.load %arg5[%c2_88, %c0_89, %c0_90] : memref<3x32x32xbf16, #tpu.memory_space<vmem>>, vector<1x32x32xbf16>
    %300 = vector.shape_cast %299 : vector<1x32x32xbf16> to vector<32x32xbf16>
    %c2_91 = arith.constant 2 : index
    %c0_92 = arith.constant 0 : index
    %c0_93 = arith.constant 0 : index
    %301 = vector.load %arg6[%c2_91, %c0_92, %c0_93] : memref<3x8x32xf32, #tpu.memory_space<vmem>>, vector<1x8x32xf32>
    %302 = vector.shape_cast %301 : vector<1x8x32xf32> to vector<8x32xf32>
    %303 = arith.truncf %296 : vector<16x32xf32> to vector<16x32xbf16>
    %cst_94 = arith.constant dense<0.000000e+00> : vector<16x96xf32>
    %304 = tpu.matmul %303, %298, %cst_94 {dimension_numbers = #tpu.dot_dimension_numbers<[1], [0], [0], [1], [0, 0, 1, 1], [], []>} : vector<16x32xbf16>, vector<32x96xbf16>, vector<16x96xf32> -> vector<16x96xf32>
    %305 = vector.extract_strided_slice %304 {offsets = [0, 0], sizes = [16, 32], strides = [1, 1]} : vector<16x96xf32> to vector<16x32xf32>
    %306 = vector.extract_strided_slice %302 {offsets = [0, 0], sizes = [1, 32], strides = [1, 1]} : vector<8x32xf32> to vector<1x32xf32>
    %307 = vector.broadcast %306 : vector<1x32xf32> to vector<16x32xf32>
    %308 = arith.addf %305, %307 : vector<16x32xf32>
    %cst_95 = arith.constant 0.353553385 : f32
    %309 = vector.broadcast %cst_95 : f32 to vector<16x32xf32>
    %310 = arith.mulf %308, %309 : vector<16x32xf32>
    %311 = vector.extract_strided_slice %304 {offsets = [0, 32], sizes = [16, 32], strides = [1, 1]} : vector<16x96xf32> to vector<16x32xf32>
    %312 = vector.extract_strided_slice %302 {offsets = [1, 0], sizes = [1, 32], strides = [1, 1]} : vector<8x32xf32> to vector<1x32xf32>
    %313 = vector.broadcast %312 : vector<1x32xf32> to vector<16x32xf32>
    %314 = arith.addf %311, %313 : vector<16x32xf32>
    %315 = vector.extract_strided_slice %304 {offsets = [0, 64], sizes = [16, 32], strides = [1, 1]} : vector<16x96xf32> to vector<16x32xf32>
    %316 = vector.extract_strided_slice %302 {offsets = [2, 0], sizes = [1, 32], strides = [1, 1]} : vector<8x32xf32> to vector<1x32xf32>
    %317 = vector.broadcast %316 : vector<1x32xf32> to vector<16x32xf32>
    %318 = arith.addf %315, %317 : vector<16x32xf32>
    %cst_96 = arith.constant 0.000000e+00 : f32
    %319 = vector.broadcast %cst_96 : f32 to vector<16x32xf32>
    %320 = vector.extract_strided_slice %310 {offsets = [0, 0], sizes = [16, 8], strides = [1, 1]} : vector<16x32xf32> to vector<16x8xf32>
    %321 = vector.extract_strided_slice %314 {offsets = [0, 0], sizes = [16, 8], strides = [1, 1]} : vector<16x32xf32> to vector<16x8xf32>
    %322 = vector.extract_strided_slice %318 {offsets = [0, 0], sizes = [16, 8], strides = [1, 1]} : vector<16x32xf32> to vector<16x8xf32>
    "tpu.trace_start"() <{level = 10 : i32, message = "ld,md->lm"}> : () -> ()
    %cst_97 = arith.constant dense<0.000000e+00> : vector<16x16xf32>
    %323 = tpu.matmul %320, %321, %cst_97 {dimension_numbers = #tpu.dot_dimension_numbers<[1], [1], [0], [0], [0, 0, 1, 0], [], []>} : vector<16x8xf32>, vector<16x8xf32>, vector<16x16xf32> -> vector<16x16xf32>
    "tpu.trace_stop"() : () -> ()
    %324 = arith.addf %323, %1 : vector<16x16xf32>
    %cst_98 = arith.constant dense<0xFF800000> : vector<16xf32>
    %325 = vector.multi_reduction <maximumf>, %324, %cst_98 [1] : vector<16x16xf32> to vector<16xf32>
    %326 = vector.shape_cast %325 : vector<16xf32> to vector<16x1xf32>
    %327 = vector.broadcast %326 : vector<16x1xf32> to vector<16x16xf32>
    %328 = arith.subf %324, %327 : vector<16x16xf32>
    %329 = math.exp %328 : vector<16x16xf32>
    %cst_99 = arith.constant dense<0.000000e+00> : vector<16xf32>
    %330 = vector.multi_reduction <add>, %329, %cst_99 [1] : vector<16x16xf32> to vector<16xf32>
    %331 = vector.shape_cast %330 : vector<16xf32> to vector<16x1xf32>
    %332 = tpu.reciprocal %331 {approx = true} : vector<16x1xf32> -> vector<16x1xf32>
    %333 = vector.broadcast %332 : vector<16x1xf32> to vector<16x16xf32>
    %334 = arith.mulf %329, %333 : vector<16x16xf32>
    %cst_100 = arith.constant dense<0.000000e+00> : vector<16x8xf32>
    %335 = tpu.matmul %334, %322, %cst_100 {dimension_numbers = #tpu.dot_dimension_numbers<[1], [0], [0], [1], [0, 0, 1, 1], [], []>} : vector<16x16xf32>, vector<16x8xf32>, vector<16x8xf32> -> vector<16x8xf32>
    %336 = arith.truncf %335 : vector<16x8xf32> to vector<16x8xbf16>
    %337 = vector.extract_strided_slice %300 {offsets = [0, 0], sizes = [8, 32], strides = [1, 1]} : vector<32x32xbf16> to vector<8x32xbf16>
    %cst_101 = arith.constant dense<0.000000e+00> : vector<16x32xf32>
    %338 = tpu.matmul %336, %337, %cst_101 {dimension_numbers = #tpu.dot_dimension_numbers<[1], [0], [0], [1], [0, 0, 1, 1], [], []>} : vector<16x8xbf16>, vector<8x32xbf16>, vector<16x32xf32> -> vector<16x32xf32>
    %339 = arith.addf %319, %338 : vector<16x32xf32>
    %340 = vector.extract_strided_slice %310 {offsets = [0, 8], sizes = [16, 8], strides = [1, 1]} : vector<16x32xf32> to vector<16x8xf32>
    %341 = vector.extract_strided_slice %314 {offsets = [0, 8], sizes = [16, 8], strides = [1, 1]} : vector<16x32xf32> to vector<16x8xf32>
    %342 = vector.extract_strided_slice %318 {offsets = [0, 8], sizes = [16, 8], strides = [1, 1]} : vector<16x32xf32> to vector<16x8xf32>
    "tpu.trace_start"() <{level = 10 : i32, message = "ld,md->lm"}> : () -> ()
    %cst_102 = arith.constant dense<0.000000e+00> : vector<16x16xf32>
    %343 = tpu.matmul %340, %341, %cst_102 {dimension_numbers = #tpu.dot_dimension_numbers<[1], [1], [0], [0], [0, 0, 1, 0], [], []>} : vector<16x8xf32>, vector<16x8xf32>, vector<16x16xf32> -> vector<16x16xf32>
    "tpu.trace_stop"() : () -> ()
    %344 = arith.addf %343, %1 : vector<16x16xf32>
    %cst_103 = arith.constant dense<0xFF800000> : vector<16xf32>
    %345 = vector.multi_reduction <maximumf>, %344, %cst_103 [1] : vector<16x16xf32> to vector<16xf32>
    %346 = vector.shape_cast %345 : vector<16xf32> to vector<16x1xf32>
    %347 = vector.broadcast %346 : vector<16x1xf32> to vector<16x16xf32>
    %348 = arith.subf %344, %347 : vector<16x16xf32>
    %349 = math.exp %348 : vector<16x16xf32>
    %cst_104 = arith.constant dense<0.000000e+00> : vector<16xf32>
    %350 = vector.multi_reduction <add>, %349, %cst_104 [1] : vector<16x16xf32> to vector<16xf32>
    %351 = vector.shape_cast %350 : vector<16xf32> to vector<16x1xf32>
    %352 = tpu.reciprocal %351 {approx = true} : vector<16x1xf32> -> vector<16x1xf32>
    %353 = vector.broadcast %352 : vector<16x1xf32> to vector<16x16xf32>
    %354 = arith.mulf %349, %353 : vector<16x16xf32>
    %cst_105 = arith.constant dense<0.000000e+00> : vector<16x8xf32>
    %355 = tpu.matmul %354, %342, %cst_105 {dimension_numbers = #tpu.dot_dimension_numbers<[1], [0], [0], [1], [0, 0, 1, 1], [], []>} : vector<16x16xf32>, vector<16x8xf32>, vector<16x8xf32> -> vector<16x8xf32>
    %356 = arith.truncf %355 : vector<16x8xf32> to vector<16x8xbf16>
    %357 = vector.extract_strided_slice %300 {offsets = [8, 0], sizes = [8, 32], strides = [1, 1]} : vector<32x32xbf16> to vector<8x32xbf16>
    %cst_106 = arith.constant dense<0.000000e+00> : vector<16x32xf32>
    %358 = tpu.matmul %356, %357, %cst_106 {dimension_numbers = #tpu.dot_dimension_numbers<[1], [0], [0], [1], [0, 0, 1, 1], [], []>} : vector<16x8xbf16>, vector<8x32xbf16>, vector<16x32xf32> -> vector<16x32xf32>
    %359 = arith.addf %339, %358 : vector<16x32xf32>
    %360 = vector.extract_strided_slice %310 {offsets = [0, 16], sizes = [16, 8], strides = [1, 1]} : vector<16x32xf32> to vector<16x8xf32>
    %361 = vector.extract_strided_slice %314 {offsets = [0, 16], sizes = [16, 8], strides = [1, 1]} : vector<16x32xf32> to vector<16x8xf32>
    %362 = vector.extract_strided_slice %318 {offsets = [0, 16], sizes = [16, 8], strides = [1, 1]} : vector<16x32xf32> to vector<16x8xf32>
    "tpu.trace_start"() <{level = 10 : i32, message = "ld,md->lm"}> : () -> ()
    %cst_107 = arith.constant dense<0.000000e+00> : vector<16x16xf32>
    %363 = tpu.matmul %360, %361, %cst_107 {dimension_numbers = #tpu.dot_dimension_numbers<[1], [1], [0], [0], [0, 0, 1, 0], [], []>} : vector<16x8xf32>, vector<16x8xf32>, vector<16x16xf32> -> vector<16x16xf32>
    "tpu.trace_stop"() : () -> ()
    %364 = arith.addf %363, %1 : vector<16x16xf32>
    %cst_108 = arith.constant dense<0xFF800000> : vector<16xf32>
    %365 = vector.multi_reduction <maximumf>, %364, %cst_108 [1] : vector<16x16xf32> to vector<16xf32>
    %366 = vector.shape_cast %365 : vector<16xf32> to vector<16x1xf32>
    %367 = vector.broadcast %366 : vector<16x1xf32> to vector<16x16xf32>
    %368 = arith.subf %364, %367 : vector<16x16xf32>
    %369 = math.exp %368 : vector<16x16xf32>
    %cst_109 = arith.constant dense<0.000000e+00> : vector<16xf32>
    %370 = vector.multi_reduction <add>, %369, %cst_109 [1] : vector<16x16xf32> to vector<16xf32>
    %371 = vector.shape_cast %370 : vector<16xf32> to vector<16x1xf32>
    %372 = tpu.reciprocal %371 {approx = true} : vector<16x1xf32> -> vector<16x1xf32>
    %373 = vector.broadcast %372 : vector<16x1xf32> to vector<16x16xf32>
    %374 = arith.mulf %369, %373 : vector<16x16xf32>
    %cst_110 = arith.constant dense<0.000000e+00> : vector<16x8xf32>
    %375 = tpu.matmul %374, %362, %cst_110 {dimension_numbers = #tpu.dot_dimension_numbers<[1], [0], [0], [1], [0, 0, 1, 1], [], []>} : vector<16x16xf32>, vector<16x8xf32>, vector<16x8xf32> -> vector<16x8xf32>
    %376 = arith.truncf %375 : vector<16x8xf32> to vector<16x8xbf16>
    %377 = vector.extract_strided_slice %300 {offsets = [16, 0], sizes = [8, 32], strides = [1, 1]} : vector<32x32xbf16> to vector<8x32xbf16>
    %cst_111 = arith.constant dense<0.000000e+00> : vector<16x32xf32>
    %378 = tpu.matmul %376, %377, %cst_111 {dimension_numbers = #tpu.dot_dimension_numbers<[1], [0], [0], [1], [0, 0, 1, 1], [], []>} : vector<16x8xbf16>, vector<8x32xbf16>, vector<16x32xf32> -> vector<16x32xf32>
    %379 = arith.addf %359, %378 : vector<16x32xf32>
    %380 = vector.extract_strided_slice %310 {offsets = [0, 24], sizes = [16, 8], strides = [1, 1]} : vector<16x32xf32> to vector<16x8xf32>
    %381 = vector.extract_strided_slice %314 {offsets = [0, 24], sizes = [16, 8], strides = [1, 1]} : vector<16x32xf32> to vector<16x8xf32>
    %382 = vector.extract_strided_slice %318 {offsets = [0, 24], sizes = [16, 8], strides = [1, 1]} : vector<16x32xf32> to vector<16x8xf32>
    "tpu.trace_start"() <{level = 10 : i32, message = "ld,md->lm"}> : () -> ()
    %cst_112 = arith.constant dense<0.000000e+00> : vector<16x16xf32>
    %383 = tpu.matmul %380, %381, %cst_112 {dimension_numbers = #tpu.dot_dimension_numbers<[1], [1], [0], [0], [0, 0, 1, 0], [], []>} : vector<16x8xf32>, vector<16x8xf32>, vector<16x16xf32> -> vector<16x16xf32>
    "tpu.trace_stop"() : () -> ()
    %384 = arith.addf %383, %1 : vector<16x16xf32>
    %cst_113 = arith.constant dense<0xFF800000> : vector<16xf32>
    %385 = vector.multi_reduction <maximumf>, %384, %cst_113 [1] : vector<16x16xf32> to vector<16xf32>
    %386 = vector.shape_cast %385 : vector<16xf32> to vector<16x1xf32>
    %387 = vector.broadcast %386 : vector<16x1xf32> to vector<16x16xf32>
    %388 = arith.subf %384, %387 : vector<16x16xf32>
    %389 = math.exp %388 : vector<16x16xf32>
    %cst_114 = arith.constant dense<0.000000e+00> : vector<16xf32>
    %390 = vector.multi_reduction <add>, %389, %cst_114 [1] : vector<16x16xf32> to vector<16xf32>
    %391 = vector.shape_cast %390 : vector<16xf32> to vector<16x1xf32>
    %392 = tpu.reciprocal %391 {approx = true} : vector<16x1xf32> -> vector<16x1xf32>
    %393 = vector.broadcast %392 : vector<16x1xf32> to vector<16x16xf32>
    %394 = arith.mulf %389, %393 : vector<16x16xf32>
    %cst_115 = arith.constant dense<0.000000e+00> : vector<16x8xf32>
    %395 = tpu.matmul %394, %382, %cst_115 {dimension_numbers = #tpu.dot_dimension_numbers<[1], [0], [0], [1], [0, 0, 1, 1], [], []>} : vector<16x16xf32>, vector<16x8xf32>, vector<16x8xf32> -> vector<16x8xf32>
    %396 = arith.truncf %395 : vector<16x8xf32> to vector<16x8xbf16>
    %397 = vector.extract_strided_slice %300 {offsets = [24, 0], sizes = [8, 32], strides = [1, 1]} : vector<32x32xbf16> to vector<8x32xbf16>
    %cst_116 = arith.constant dense<0.000000e+00> : vector<16x32xf32>
    %398 = tpu.matmul %396, %397, %cst_116 {dimension_numbers = #tpu.dot_dimension_numbers<[1], [0], [0], [1], [0, 0, 1, 1], [], []>} : vector<16x8xbf16>, vector<8x32xbf16>, vector<16x32xf32> -> vector<16x32xf32>
    %399 = arith.addf %379, %398 : vector<16x32xf32>
    %400 = vector.extract_strided_slice %302 {offsets = [3, 0], sizes = [1, 32], strides = [1, 1]} : vector<8x32xf32> to vector<1x32xf32>
    %401 = vector.broadcast %400 : vector<1x32xf32> to vector<16x32xf32>
    %402 = arith.addf %399, %401 : vector<16x32xf32>
    %403 = arith.addf %296, %402 : vector<16x32xf32>
    %404 = vector.extract_strided_slice %302 {offsets = [4, 0], sizes = [1, 32], strides = [1, 1]} : vector<8x32xf32> to vector<1x32xf32>
    %405 = vector.extract_strided_slice %302 {offsets = [5, 0], sizes = [1, 32], strides = [1, 1]} : vector<8x32xf32> to vector<1x32xf32>
    %cst_117 = arith.constant dense<0.000000e+00> : vector<16xf32>
    %406 = vector.multi_reduction <add>, %403, %cst_117 [1] : vector<16x32xf32> to vector<16xf32>
    %407 = vector.shape_cast %406 : vector<16xf32> to vector<16x1xf32>
    %cst_118 = arith.constant 3.200000e+01 : f32
    %408 = vector.broadcast %cst_118 : f32 to vector<16x1xf32>
    %409 = arith.divf %407, %408 : vector<16x1xf32>
    %410 = vector.broadcast %409 : vector<16x1xf32> to vector<16x32xf32>
    %411 = arith.subf %403, %410 : vector<16x32xf32>
    %412 = arith.mulf %411, %411 : vector<16x32xf32>
    %cst_119 = arith.constant dense<0.000000e+00> : vector<16xf32>
    %413 = vector.multi_reduction <add>, %412, %cst_119 [1] : vector<16x32xf32> to vector<16xf32>
    %414 = vector.shape_cast %413 : vector<16xf32> to vector<16x1xf32>
    %cst_120 = arith.constant 3.200000e+01 : f32
    %415 = vector.broadcast %cst_120 : f32 to vector<16x1xf32>
    %416 = arith.divf %414, %415 : vector<16x1xf32>
    %417 = vector.broadcast %409 : vector<16x1xf32> to vector<16x32xf32>
    %418 = arith.subf %403, %417 : vector<16x32xf32>
    %cst_121 = arith.constant 9.99999974E-6 : f32
    %419 = vector.broadcast %cst_121 : f32 to vector<16x1xf32>
    %420 = arith.addf %416, %419 : vector<16x1xf32>
    %421 = math.rsqrt %420 : vector<16x1xf32>
    %422 = vector.broadcast %421 : vector<16x1xf32> to vector<16x32xf32>
    %423 = arith.mulf %418, %422 : vector<16x32xf32>
    %424 = vector.broadcast %404 : vector<1x32xf32> to vector<16x32xf32>
    %425 = arith.mulf %423, %424 : vector<16x32xf32>
    %426 = vector.broadcast %405 : vector<1x32xf32> to vector<16x32xf32>
    %427 = arith.addf %425, %426 : vector<16x32xf32>
    %428 = arith.truncf %427 : vector<16x32xf32> to vector<16x32xbf16>
    %c0_122 = arith.constant 0 : index
    %c0_123 = arith.constant 0 : index
    %429 = vector.load %arg7[%c0_122, %c0_123] : memref<32x32xbf16, #tpu.memory_space<vmem>>, vector<32x32xbf16>
    %cst_124 = arith.constant dense<0.000000e+00> : vector<16x32xf32>
    %430 = tpu.matmul %428, %429, %cst_124 {dimension_numbers = #tpu.dot_dimension_numbers<[1], [0], [0], [1], [0, 0, 1, 1], [], []>} : vector<16x32xbf16>, vector<32x32xbf16>, vector<16x32xf32> -> vector<16x32xf32>
    %431 = vector.extract_strided_slice %0 {offsets = [3, 0], sizes = [1, 32], strides = [1, 1]} : vector<8x32xf32> to vector<1x32xf32>
    %432 = vector.broadcast %431 : vector<1x32xf32> to vector<16x32xf32>
    %433 = arith.addf %430, %432 : vector<16x32xf32>
    %434 = vector.extract_strided_slice %0 {offsets = [4, 0], sizes = [1, 32], strides = [1, 1]} : vector<8x32xf32> to vector<1x32xf32>
    %435 = vector.extract_strided_slice %0 {offsets = [5, 0], sizes = [1, 32], strides = [1, 1]} : vector<8x32xf32> to vector<1x32xf32>
    %cst_125 = arith.constant dense<0.000000e+00> : vector<16xf32>
    %436 = vector.multi_reduction <add>, %433, %cst_125 [1] : vector<16x32xf32> to vector<16xf32>
    %437 = vector.shape_cast %436 : vector<16xf32> to vector<16x1xf32>
    %cst_126 = arith.constant 3.200000e+01 : f32
    %438 = vector.broadcast %cst_126 : f32 to vector<16x1xf32>
    %439 = arith.divf %437, %438 : vector<16x1xf32>
    %440 = vector.broadcast %439 : vector<16x1xf32> to vector<16x32xf32>
    %441 = arith.subf %433, %440 : vector<16x32xf32>
    %442 = arith.mulf %441, %441 : vector<16x32xf32>
    %cst_127 = arith.constant dense<0.000000e+00> : vector<16xf32>
    %443 = vector.multi_reduction <add>, %442, %cst_127 [1] : vector<16x32xf32> to vector<16xf32>
    %444 = vector.shape_cast %443 : vector<16xf32> to vector<16x1xf32>
    %cst_128 = arith.constant 3.200000e+01 : f32
    %445 = vector.broadcast %cst_128 : f32 to vector<16x1xf32>
    %446 = arith.divf %444, %445 : vector<16x1xf32>
    %447 = vector.broadcast %439 : vector<16x1xf32> to vector<16x32xf32>
    %448 = arith.subf %433, %447 : vector<16x32xf32>
    %cst_129 = arith.constant 9.99999974E-6 : f32
    %449 = vector.broadcast %cst_129 : f32 to vector<16x1xf32>
    %450 = arith.addf %446, %449 : vector<16x1xf32>
    %451 = math.rsqrt %450 : vector<16x1xf32>
    %452 = vector.broadcast %451 : vector<16x1xf32> to vector<16x32xf32>
    %453 = arith.mulf %448, %452 : vector<16x32xf32>
    %454 = vector.broadcast %434 : vector<1x32xf32> to vector<16x32xf32>
    %455 = arith.mulf %453, %454 : vector<16x32xf32>
    %456 = vector.broadcast %435 : vector<1x32xf32> to vector<16x32xf32>
    %457 = arith.addf %455, %456 : vector<16x32xf32>
    %c0_130 = arith.constant 0 : index
    %c0_131 = arith.constant 0 : index
    %458 = vector.load %arg8[%c0_130, %c0_131] : memref<16x32xf32, #tpu.memory_space<vmem>>, vector<16x32xf32>
    tpu.vector_store %arg8[%c0_130, %c0_131], %457 {strides = array<i32>} : memref<16x32xf32, #tpu.memory_space<vmem>>, vector<16x32xf32>,
    return
  }
}

</mosaic_0001>

<llo_original>
// kernel: tpu_custom_call.1
$region0: #{tpu_custom_call.1}
  #allocation0 [shape = 'u32[]', space=smem, size = 0x4, offset = 0x4, fixed_abs, tag = 'smem constant byte address 0x4 - core index']
  #allocation1 [shape = 'u32[144,128]{1,0:T(1,128)}', space=vmem, size = 0x12000, scoped, tag = 'internal scratch']
  %s0 = inlined_call_operand.hbm [shape: f32[16,16], index: 0, kind: input, shape index: {}]
  %s1 = inlined_call_operand.hbm [shape: f32[16,16], index: 1, kind: input, shape index: {}]
  %s2 = inlined_call_operand.hbm [shape: bf16[16,32], index: 2, kind: input, shape index: {}]
  %s3 = inlined_call_operand.hbm [shape: f32[8,32], index: 3, kind: input, shape index: {}]
  %s4 = inlined_call_operand.hbm [shape: bf16[3,32,96], index: 4, kind: input, shape index: {}]
  %s5 = inlined_call_operand.hbm [shape: bf16[3,32,32], index: 5, kind: input, shape index: {}]
  %s6 = inlined_call_operand.hbm [shape: f32[3,8,32], index: 6, kind: input, shape index: {}]
  %s7 = inlined_call_operand.hbm [shape: bf16[32,32], index: 7, kind: input, shape index: {}]
  %s8 = inlined_call_operand.hbm [shape: f32[16,32], index: 8, kind: output, shape index: {}]
  %s9 = sld [smem:[#allocation0]]
  $region74: #{tpu_custom_call.1} parent=0
    _
  %s11 = ssub.s32 1, %s9
  %s12 = scalar_select 0, %s11, %s9
  $region1: #{tpu_custom_call.1} parent=0
    #allocation2 [shape = 'u8[8192]{0}', space=vmem, size = 0x2000, scoped, tag = 'input window, operand 0, single buffered']
    #allocation3 [shape = 's32[1]{0}', space=sflag, size = 0x4, scoped, tag = 'scoped memory for tpu_custom_call.1']
    #allocation4 [shape = 's32[1]{0}', space=sflag, size = 0x4, scoped, tag = 'scoped memory for tpu_custom_call.1']
    #allocation5 [shape = 'u8[8192]{0}', space=vmem, size = 0x2000, scoped, tag = 'input window, operand 1, single buffered']
    #allocation6 [shape = 's32[1]{0}', space=sflag, size = 0x4, scoped, tag = 'scoped memory for tpu_custom_call.1']
    #allocation7 [shape = 'u8[4096]{0}', space=vmem, size = 0x1000, scoped, tag = 'input window, operand 2, single buffered']
    #allocation8 [shape = 'u8[4096]{0}', space=vmem, size = 0x1000, scoped, tag = 'input window, operand 3, single buffered']
    #allocation9 [shape = 's32[1]{0}', space=sflag, size = 0x4, scoped, tag = 'scoped memory for tpu_custom_call.1']
    #allocation10 [shape = 'u8[24576]{0}', space=vmem, size = 0x6000, scoped, tag = 'input window, operand 4, single buffered']
    #allocation11 [shape = 'u8[24576]{0}', space=vmem, size = 0x6000, scoped, tag = 'input window, operand 5, single buffered']
    #allocation12 [shape = 's32[1]{0}', space=sflag, size = 0x4, scoped, tag = 'scoped memory for tpu_custom_call.1']
    #allocation13 [shape = 'u8[12288]{0}', space=vmem, size = 0x3000, scoped, tag = 'input window, operand 6, single buffered']
    #allocation14 [shape = 'u8[8192]{0}', space=vmem, size = 0x2000, scoped, tag = 'input window, operand 7, single buffered']
    #allocation15 [shape = 's32[1]{0}', space=sflag, size = 0x4, scoped, tag = 'scoped memory for tpu_custom_call.1']
    #allocation16 [shape = 'u8[8192]{0}', space=vmem, size = 0x2000, scoped, tag = 'output window, operand 0, single buffered']
    %13 = vsyncpa [#allocation3], 0
    %14 = vsyncpa [#allocation6], 0
    %15 = vsyncpa [#allocation9], 0
    %16 = vsyncpa [#allocation12], 0
    %17 = vsyncpa [#allocation15], 0
    %18 = vsyncpa [#allocation4], 0
    // Predicated region
    $region2: #{tpu_custom_call.1} parent=1 // pred_check
      _
    $region3: #{tpu_custom_call.1} parent=1 // pred_check_branch
      %20 = sbr.rel (0) target = $region5
    $region4: #{tpu_custom_call.1} parent=1 // pred_region
      %s22 = ssub.s32 256, 256
      %23 = vsyncadd [#allocation3], %s22
      %s24 = sshll.u32 [#allocation2], 4
      %s25 = int_to_ptr.vmem [resolvable:$true] %s24
      %30 = dma.hbm_to_vmem [thread:$0]  %s0, 256, %s25, [#allocation3], 128, 128, 8
    $region5: #{tpu_custom_call.1} parent=1 // pred_fallthru
      _
    // Predicated region
    $region6: #{tpu_custom_call.1} parent=1 // pred_check
      _
    $region7: #{tpu_custom_call.1} parent=1 // pred_check_branch
      %32 = sbr.rel (0) target = $region9
    $region8: #{tpu_custom_call.1} parent=1 // pred_region
      %s34 = ssub.s32 256, 256
      %35 = vsyncadd [#allocation6], %s34
      %s36 = sshll.u32 [#allocation5], 4
      %s37 = int_to_ptr.vmem [resolvable:$true] %s36
      %42 = dma.hbm_to_vmem [thread:$0]  %s1, 256, %s37, [#allocation6], 128, 128, 8
    $region9: #{tpu_custom_call.1} parent=1 // pred_fallthru
      _
    // Predicated region
    $region10: #{tpu_custom_call.1} parent=1 // pred_check
      _
    $region11: #{tpu_custom_call.1} parent=1 // pred_check_branch
      %44 = sbr.rel (0) target = $region13
    $region12: #{tpu_custom_call.1} parent=1 // pred_region
      %s46 = ssub.s32 128, 128
      %47 = vsyncadd [#allocation6], %s46
      %s48 = sshll.u32 [#allocation7], 4
      %s49 = int_to_ptr.vmem [resolvable:$true] %s48
      %54 = dma.hbm_to_vmem [thread:$0]  %s2, 128, %s49, [#allocation6], 64, 64, 4
    $region13: #{tpu_custom_call.1} parent=1 // pred_fallthru
      _
    // Predicated region
    $region14: #{tpu_custom_call.1} parent=1 // pred_check
      _
    $region15: #{tpu_custom_call.1} parent=1 // pred_check_branch
      %56 = sbr.rel (0) target = $region17
    $region16: #{tpu_custom_call.1} parent=1 // pred_region
      %s58 = ssub.s32 128, 128
      %59 = vsyncadd [#allocation9], %s58
      %s61 = sshll.u32 [#allocation8], 4
      %s62 = int_to_ptr.vmem [resolvable:$true] %s61
      %64 = dma.hbm_to_vmem [thread:$0]  %s3, 128, %s62, [#allocation9]
    $region17: #{tpu_custom_call.1} parent=1 // pred_fallthru
      _
    // Predicated region
    $region18: #{tpu_custom_call.1} parent=1 // pred_check
      _
    $region19: #{tpu_custom_call.1} parent=1 // pred_check_branch
      %66 = sbr.rel (0) target = $region21
    $region20: #{tpu_custom_call.1} parent=1 // pred_region
      %s68 = ssub.s32 768, 768
      %69 = vsyncadd [#allocation9], %s68
      %s70 = sshll.u32 [#allocation10], 4
      %s71 = int_to_ptr.vmem [resolvable:$true] %s70
      %76 = dma.hbm_to_vmem [thread:$0]  %s4, 768, %s71, [#allocation9], 64, 64, 4
    $region21: #{tpu_custom_call.1} parent=1 // pred_fallthru
      _
    // Predicated region
    $region22: #{tpu_custom_call.1} parent=1 // pred_check
      _
    $region23: #{tpu_custom_call.1} parent=1 // pred_check_branch
      %78 = sbr.rel (0) target = $region25
    $region24: #{tpu_custom_call.1} parent=1 // pred_region
      %s80 = ssub.s32 768, 768
      %81 = vsyncadd [#allocation12], %s80
      %s82 = sshll.u32 [#allocation11], 4
      %s83 = int_to_ptr.vmem [resolvable:$true] %s82
      %88 = dma.hbm_to_vmem [thread:$0]  %s5, 768, %s83, [#allocation12], 64, 64, 4
    $region25: #{tpu_custom_call.1} parent=1 // pred_fallthru
      _
    // Predicated region
    $region26: #{tpu_custom_call.1} parent=1 // pred_check
      _
    $region27: #{tpu_custom_call.1} parent=1 // pred_check_branch
      %90 = sbr.rel (0) target = $region29
    $region28: #{tpu_custom_call.1} parent=1 // pred_region
      %s92 = ssub.s32 384, 384
      %93 = vsyncadd [#allocation12], %s92
      %s94 = sshll.u32 [#allocation13], 4
      %s95 = int_to_ptr.vmem [resolvable:$true] %s94
      %100 = dma.hbm_to_vmem [thread:$0]  %s6, 384, %s95, [#allocation12], 128, 128, 8
    $region29: #{tpu_custom_call.1} parent=1 // pred_fallthru
      _
    // Predicated region
    $region30: #{tpu_custom_call.1} parent=1 // pred_check
      _
    $region31: #{tpu_custom_call.1} parent=1 // pred_check_branch
      %102 = sbr.rel (0) target = $region33
    $region32: #{tpu_custom_call.1} parent=1 // pred_region
      %s104 = ssub.s32 256, 256
      %105 = vsyncadd [#allocation15], %s104
      %s106 = sshll.u32 [#allocation14], 4
      %s107 = int_to_ptr.vmem [resolvable:$true] %s106
      %112 = dma.hbm_to_vmem [thread:$0]  %s7, 256, %s107, [#allocation15], 64, 64, 4
    $region33: #{tpu_custom_call.1} parent=1 // pred_fallthru
      _
    // Predicated region
    $region34: #{tpu_custom_call.1} parent=1 // pred_check
      _
    $region35: #{tpu_custom_call.1} parent=1 // pred_check_branch
      %114 = sbr.rel (0) target = $region37
    $region36: #{tpu_custom_call.1} parent=1 // pred_region
      %115 = dma.done [#allocation3], 256
    $region37: #{tpu_custom_call.1} parent=1 // pred_fallthru
      _
    // Predicated region
    $region38: #{tpu_custom_call.1} parent=1 // pred_check
      _
    $region39: #{tpu_custom_call.1} parent=1 // pred_check_branch
      %117 = sbr.rel (0) target = $region41
    $region40: #{tpu_custom_call.1} parent=1 // pred_region
      %118 = dma.done [#allocation6], 256
    $region41: #{tpu_custom_call.1} parent=1 // pred_fallthru
      _
    // Predicated region
    $region42: #{tpu_custom_call.1} parent=1 // pred_check
      _
    $region43: #{tpu_custom_call.1} parent=1 // pred_check_branch
      %120 = sbr.rel (0) target = $region45
    $region44: #{tpu_custom_call.1} parent=1 // pred_region
      %121 = dma.done [#allocation6], 128
    $region45: #{tpu_custom_call.1} parent=1 // pred_fallthru
      _
    // Predicated region
    $region46: #{tpu_custom_call.1} parent=1 // pred_check
      _
    $region47: #{tpu_custom_call.1} parent=1 // pred_check_branch
      %123 = sbr.rel (0) target = $region49
    $region48: #{tpu_custom_call.1} parent=1 // pred_region
      %124 = dma.done [#allocation9], 128
    $region49: #{tpu_custom_call.1} parent=1 // pred_fallthru
      _
    // Predicated region
    $region50: #{tpu_custom_call.1} parent=1 // pred_check
      _
    $region51: #{tpu_custom_call.1} parent=1 // pred_check_branch
      %126 = sbr.rel (0) target = $region53
    $region52: #{tpu_custom_call.1} parent=1 // pred_region
      %127 = dma.done [#allocation9], 768
    $region53: #{tpu_custom_call.1} parent=1 // pred_fallthru
      _
    // Predicated region
    $region54: #{tpu_custom_call.1} parent=1 // pred_check
      _
    $region55: #{tpu_custom_call.1} parent=1 // pred_check_branch
      %129 = sbr.rel (0) target = $region57
    $region56: #{tpu_custom_call.1} parent=1 // pred_region
      %130 = dma.done [#allocation12], 768
    $region57: #{tpu_custom_call.1} parent=1 // pred_fallthru
      _
    // Predicated region
    $region58: #{tpu_custom_call.1} parent=1 // pred_check
      _
    $region59: #{tpu_custom_call.1} parent=1 // pred_check_branch
      %132 = sbr.rel (0) target = $region61
    $region60: #{tpu_custom_call.1} parent=1 // pred_region
      %133 = dma.done [#allocation12], 384
    $region61: #{tpu_custom_call.1} parent=1 // pred_fallthru
      _
    // Predicated region
    $region62: #{tpu_custom_call.1} parent=1 // pred_check
      _
    $region63: #{tpu_custom_call.1} parent=1 // pred_check_branch
      %135 = sbr.rel (0) target = $region65
    $region64: #{tpu_custom_call.1} parent=1 // pred_region
      %136 = dma.done [#allocation15], 256
    $region65: #{tpu_custom_call.1} parent=1 // pred_fallthru
      _
    %v138 = vld [vmem:[#allocation8] sm:$0xff]
    %v139 = vld [vmem:[#allocation5] sm:$0xff]
    %v140 = vld [vmem:[#allocation5 + $0x8] sm:$0xff]
    %v141 = vld [vmem:[#allocation2] sm:$0xff]
    %v142 = vld [vmem:[#allocation2 + $0x8] sm:$0xff]
    %v143 = vpack.c.bf16 %v142, %v141
    %v144 = vld [vmem:[#allocation7] sm:$0xf]
    %v145 = vld [vmem:[#allocation7 + $0x4] sm:$0xf]
    %v146 = vlaneseq
    %v147 = vshrl.u32 %v146, 7
    %v148 = vsub.s32 0, %v147
    %v149 = vrot.slane %v138, %v148
    %v152 = vunpack.c.l.b16 %v144
    %v153 = vunpack.c.l.b16 %v145
    %v154 = vpack.c.b16 %v153, %v152
    %vm156 = vcmask 130048
    %v158 = vsel %vm156, %v143, 0
    %160 = vmatprep.subr.bf16.mxu0 0
    %161 = vmatpush1.bf16.msra.mxu0 0
    %162 = vmatprep.subr.bf16.mxu0 0
    %163 = vmatpush1.bf16.msra.mxu0 0
    %164 = vmatprep.subr.bf16.mxu0 0
    %165 = vmatpush1.bf16.msra.mxu0 0
    %166 = vmatprep.subr.bf16.mxu0 0
    %167 = vmatpush1.bf16.msra.mxu0 0
    %168 = vmatprep.subr.bf16.mxu0 0
    %169 = vmatpush1.bf16.msra.mxu0 0
    %170 = vmatprep.subr.bf16.mxu0 0
    %171 = vmatpush1.bf16.msra.mxu0 0
    %172 = vmatprep.subr.bf16.mxu0 0
    %173 = vmatpush1.bf16.msra.mxu0 0
    %174 = vmatprep.subr.bf16.mxu0 0
    %175 = vmatpush1.bf16.msra.mxu0 %v154
    %176 = vmatprep.subr.bf16.mxu0 0
    %177 = vmatpush2.bf16.msra.mxu0 0
    %178 = vmatprep.subr.bf16.mxu0 0
    %179 = vmatpush2.bf16.msra.mxu0 0
    %180 = vmatprep.subr.bf16.mxu0 0
    %181 = vmatpush2.bf16.msra.mxu0 0
    %182 = vmatprep.subr.bf16.mxu0 0
    %183 = vmatpush2.bf16.msra.mxu0 0
    %184 = vmatprep.subr.bf16.mxu0 0
    %185 = vmatpush2.bf16.msra.mxu0 0
    %186 = vmatprep.subr.bf16.mxu0 0
    %187 = vmatpush2.bf16.msra.mxu0 0
    %188 = vmatprep.subr.bf16.mxu0 0
    %189 = vmatpush2.bf16.msra.mxu0 0
    %190 = vmatprep.subr.bf16.mxu0 0
    %191 = vmatpush2.bf16.msra.mxu0 0
    %192 = vmatprep.mubr.bf16.mxu0 0
    %193 = vmatmul.mubr.bf16.gmra.mxu0 %v158
    %v194 = vpop.f32.mrf.mxu0
    %v195 = vadd.f32 %v149, %v194
    %v196 = vpop.f32.mrf.mxu0
    %v197 = vpop.f32.mrf.mxu0
    %v198 = vadd.f32 %v149, %v197
    %v199 = vpop.f32.mrf.mxu0
    %200 = vdwg.mxu0
    %vm201 = vcmask 261120
    %v202 = vsel %vm201, %v195, 0.0
    %203 = vadd.xlane.f32.xlu0 %v202
    %v204 = vpop.xlane.xlu0 %203
    %v205 = vsel %vm201, %v198, 0.0
    %206 = vadd.xlane.f32.xlu0 %v205
    %v207 = vpop.xlane.xlu0 %206
    %v208 = vrcp.pop 32.0
    %v209 = vmul.f32 %v204, %v208
    %v210 = vmul.f32 %v207, %v208
    %v211 = vsub.f32 %v195, %v209
    %v212 = vsub.f32 %v198, %v210
    %v213 = vmul.f32 %v211, %v211
    %v214 = vmul.f32 %v212, %v212
    %v215 = vsel %vm201, %v213, 0.0
    %216 = vadd.xlane.f32.xlu0 %v215
    %v217 = vpop.xlane.xlu0 %216
    %v218 = vsel %vm201, %v214, 0.0
    %219 = vadd.xlane.f32.xlu0 %v218
    %v220 = vpop.xlane.xlu0 %219
    %v221 = vmul.f32 %v217, %v208
    %v222 = vmul.f32 %v220, %v208
    %v223 = vadd.f32 %v221, 1e-05
    %v224 = vadd.f32 %v222, 1e-05
    %v225 = vrsqrt.pop %v223
    %v226 = vrsqrt.pop %v224
    %v227 = vmul.f32 %v211, %v225
    %v228 = vmul.f32 %v212, %v226
    %v229 = vlaneseq
    %v230 = vshrl.u32 %v229, 7
    %v231 = vsub.s32 1, %v230
    %v232 = vrot.slane %v138, %v231
    %v233 = vmul.f32 %v227, %v232
    %v234 = vmul.f32 %v228, %v232
    %v235 = vlaneseq
    %v236 = vshrl.u32 %v235, 7
    %v237 = vsub.s32 2, %v236
    %v238 = vrot.slane %v138, %v237
    %v239 = vadd.f32 %v233, %v238
    %v240 = vadd.f32 %v234, %v238
    %v241 = vmax.f32 %v239, 0.0
    %v242 = vmax.f32 %v240, 0.0
    %v243 = vld [vmem:[#allocation10] sm:$0xf]
    %v244 = vld [vmem:[#allocation10 + $0x4] sm:$0xf]
    %v245 = vld [vmem:[#allocation10 + $0x8] sm:$0xf]
    %v246 = vld [vmem:[#allocation10 + $0xc] sm:$0xf]
    %v247 = vld [vmem:[#allocation11] sm:$0xf]
    %v248 = vld [vmem:[#allocation11 + $0x4] sm:$0xf]
    %v249 = vld [vmem:[#allocation11 + $0x8] sm:$0xf]
    %v250 = vld [vmem:[#allocation11 + $0xc] sm:$0xf]
    %v251 = vld [vmem:[#allocation13] sm:$0xff]
    %v252 = vpack.c.bf16 %v242, %v241
    %v257 = vunpack.c.l.b16 %v243
    %v258 = vunpack.c.l.b16 %v244
    %v259 = vunpack.c.l.b16 %v245
    %v260 = vunpack.c.l.b16 %v246
    %v261 = vpack.c.b16 %v258, %v257
    %v262 = vpack.c.b16 %v260, %v259
    %v266 = vsel %vm201, %v252, 0
    %268 = vmatprep.subr.bf16.mxu0 0
    %269 = vmatpush1.bf16.msra.mxu0 0
    %270 = vmatprep.subr.bf16.mxu0 0
    %271 = vmatpush1.bf16.msra.mxu0 0
    %272 = vmatprep.subr.bf16.mxu0 0
    %273 = vmatpush1.bf16.msra.mxu0 0
    %274 = vmatprep.subr.bf16.mxu0 0
    %275 = vmatpush1.bf16.msra.mxu0 0
    %276 = vmatprep.subr.bf16.mxu0 0
    %277 = vmatpush1.bf16.msra.mxu0 0
    %278 = vmatprep.subr.bf16.mxu0 0
    %279 = vmatpush1.bf16.msra.mxu0 0
    %280 = vmatprep.subr.bf16.mxu0 0
    %281 = vmatpush1.bf16.msra.mxu0 %v262
    %282 = vmatprep.subr.bf16.mxu0 0
    %283 = vmatpush1.bf16.msra.mxu0 %v261
    %284 = vmatprep.subr.bf16.mxu0 0
    %285 = vmatpush2.bf16.msra.mxu0 0
    %286 = vmatprep.subr.bf16.mxu0 0
    %287 = vmatpush2.bf16.msra.mxu0 0
    %288 = vmatprep.subr.bf16.mxu0 0
    %289 = vmatpush2.bf16.msra.mxu0 0
    %290 = vmatprep.subr.bf16.mxu0 0
    %291 = vmatpush2.bf16.msra.mxu0 0
    %292 = vmatprep.subr.bf16.mxu0 0
    %293 = vmatpush2.bf16.msra.mxu0 0
    %294 = vmatprep.subr.bf16.mxu0 0
    %295 = vmatpush2.bf16.msra.mxu0 0
    %296 = vmatprep.subr.bf16.mxu0 0
    %297 = vmatpush2.bf16.msra.mxu0 0
    %298 = vmatprep.subr.bf16.mxu0 0
    %299 = vmatpush2.bf16.msra.mxu0 0
    %300 = vmatprep.mubr.bf16.mxu0 0
    %301 = vmatmul.mubr.bf16.gmra.mxu0 %v266
    %v302 = vpop.f32.mrf.mxu0
    %v303 = vadd.f32 0.0, %v302
    %v304 = vpop.f32.mrf.mxu0
    %v305 = vpop.f32.mrf.mxu0
    %v306 = vadd.f32 0.0, %v305
    %v307 = vpop.f32.mrf.mxu0
    %308 = vdwg.mxu0
    %v309 = vlaneseq
    %v310 = vshrl.u32 %v309, 7
    %v311 = vsub.s32 0, %v310
    %v312 = vrot.slane %v251, %v311
    %v313 = vadd.f32 %v303, %v312
    %v314 = vadd.f32 %v306, %v312
    %v315 = vmul.f32 %v313, 0.35355338
    %v316 = vmul.f32 %v314, 0.35355338
    %v317 = vlaneseq
    %v318 = vshrl.u32 %v317, 7
    %v319 = vsub.s32 1, %v318
    %v320 = vrot.slane %v251, %v319
    %322 = vrot.lane.b32.xlu0 %v320, 32
    %v323 = vpop.permute.xlu0 %322
    %v325 = vadd.f32 %v303, %v323
    %v326 = vadd.f32 %v306, %v323
    %v327 = vlaneseq
    %v328 = vshrl.u32 %v327, 7
    %v329 = vsub.s32 2, %v328
    %v330 = vrot.slane %v251, %v329
    %332 = vrot.lane.b32.xlu0 %v330, 64
    %v333 = vpop.permute.xlu0 %332
    %v335 = vadd.f32 %v303, %v333
    %v336 = vadd.f32 %v306, %v333
    %339 = vrot.lane.b32.xlu0 %v325, 96
    %v340 = vpop.permute.xlu0 %339
    %341 = vrot.lane.b32.xlu0 %v326, 96
    %v342 = vpop.permute.xlu0 %341
    %vm343 = vcmask 64512
    %v345 = vsel %vm343, %v315, 0
    %v348 = vsel %vm343, %v316, 0
    %v350 = vsel %vm343, %v340, 0
    %v352 = vsel %vm343, %v342, 0
    %354 = vmatprep.subr.mxu0 0.0
    %355 = vmatpush1.xpose.msra.mxu0 0.0
    %356 = vmatprep.subr.mxu0 0.0
    %357 = vmatpush1.xpose.msra.mxu0 0.0
    %358 = vmatprep.subr.mxu0 0.0
    %359 = vmatpush1.xpose.msra.mxu0 0.0
    %360 = vmatprep.subr.mxu0 0.0
    %361 = vmatpush1.xpose.msra.mxu0 0.0
    %362 = vmatprep.subr.mxu0 0.0
    %363 = vmatpush1.xpose.msra.mxu0 0.0
    %364 = vmatprep.subr.mxu0 0.0
    %365 = vmatpush1.xpose.msra.mxu0 0.0
    %366 = vmatprep.subr.mxu0 0.0
    %367 = vmatpush1.xpose.msra.mxu0 0.0
    %368 = vmatprep.subr.mxu0 0.0
    %369 = vmatpush1.xpose.msra.mxu0 0.0
    %370 = vmatprep.subr.mxu0 0.0
    %371 = vmatpush1.xpose.msra.mxu0 0.0
    %372 = vmatprep.subr.mxu0 0.0
    %373 = vmatpush1.xpose.msra.mxu0 0.0
    %374 = vmatprep.subr.mxu0 0.0
    %375 = vmatpush1.xpose.msra.mxu0 0.0
    %376 = vmatprep.subr.mxu0 0.0
    %377 = vmatpush1.xpose.msra.mxu0 0.0
    %378 = vmatprep.subr.mxu0 0.0
    %379 = vmatpush1.xpose.msra.mxu0 0.0
    %380 = vmatprep.subr.mxu0 0.0
    %381 = vmatpush1.xpose.msra.mxu0 0.0
    %382 = vmatprep.subr.mxu0 0.0
    %383 = vmatpush1.xpose.msra.mxu0 %v352
    %384 = vmatprep.subr.mxu0 0.0
    %385 = vmatpush1.xpose.msra.mxu0 %v350
    %386 = vmatprep.subr.mxu0 0.0
    %387 = vmatpush2.xpose.msra.mxu0 0.0
    %388 = vmatprep.subr.mxu0 0.0
    %389 = vmatpush2.xpose.msra.mxu0 0.0
    %390 = vmatprep.subr.mxu0 0.0
    %391 = vmatpush2.xpose.msra.mxu0 0.0
    %392 = vmatprep.subr.mxu0 0.0
    %393 = vmatpush2.xpose.msra.mxu0 0.0
    %394 = vmatprep.subr.mxu0 0.0
    %395 = vmatpush2.xpose.msra.mxu0 0.0
    %396 = vmatprep.subr.mxu0 0.0
    %397 = vmatpush2.xpose.msra.mxu0 0.0
    %398 = vmatprep.subr.mxu0 0.0
    %399 = vmatpush2.xpose.msra.mxu0 0.0
    %400 = vmatprep.subr.mxu0 0.0
    %401 = vmatpush2.xpose.msra.mxu0 0.0
    %402 = vmatprep.subr.mxu0 0.0
    %403 = vmatpush2.xpose.msra.mxu0 0.0
    %404 = vmatprep.subr.mxu0 0.0
    %405 = vmatpush2.xpose.msra.mxu0 0.0
    %406 = vmatprep.subr.mxu0 0.0
    %407 = vmatpush2.xpose.msra.mxu0 0.0
    %408 = vmatprep.subr.mxu0 0.0
    %409 = vmatpush2.xpose.msra.mxu0 0.0
    %410 = vmatprep.subr.mxu0 0.0
    %411 = vmatpush2.xpose.msra.mxu0 0.0
    %412 = vmatprep.subr.mxu0 0.0
    %413 = vmatpush2.xpose.msra.mxu0 0.0
    %414 = vmatprep.subr.mxu0 0.0
    %415 = vmatpush2.xpose.msra.mxu0 0.0
    %416 = vmatprep.subr.mxu0 0.0
    %417 = vmatpush2.xpose.msra.mxu0 0.0
    %418 = vmatprep.mubr.f32.mxu0 0.0
    %419 = vmatmul.mubr.f32.gmra.mxu0 %v345
    %v420 = vpop.f32.mrf.mxu0
    %v421 = vadd.f32 %v139, %v420
    %v422 = vpop.f32.mrf.mxu0
    %423 = vmatprep.mubr.f32.mxu0 0.0
    %424 = vmatmul.mubr.f32.gmra.mxu0 %v348
    %v425 = vpop.f32.mrf.mxu0
    %v426 = vadd.f32 %v140, %v425
    %v427 = vpop.f32.mrf.mxu0
    %428 = vdwg.mxu0
    %v429 = vsel %vm156, %v421, -inf
    %430 = vmax.xlane.f32.xlu0 %v429
    %v431 = vpop.xlane.xlu0 %430
    %v432 = vsel %vm156, %v426, -inf
    %433 = vmax.xlane.f32.xlu0 %v432
    %v434 = vpop.xlane.xlu0 %433
    %v435 = vsub.f32 %v421, %v431
    %v436 = vsub.f32 %v426, %v434
    %v437 = vmul.f32 %v435, 1.442695
    %v438 = vpow.pop %v437
    %v439 = vmul.f32 %v436, 1.442695
    %v440 = vpow.pop %v439
    %v441 = vsel %vm156, %v438, 0.0
    %442 = vadd.xlane.f32.xlu0 %v441
    %v443 = vpop.xlane.xlu0 %442
    %v444 = vsel %vm156, %v440, 0.0
    %445 = vadd.xlane.f32.xlu0 %v444
    %v446 = vpop.xlane.xlu0 %445
    %v447 = vrcp.pop %v443
    %v448 = vrcp.pop %v446
    %v449 = vmul.f32 %v438, %v447
    %v450 = vmul.f32 %v440, %v448
    %453 = vrot.lane.b32.xlu0 %v335, 64
    %v454 = vpop.permute.xlu0 %453
    %455 = vrot.lane.b32.xlu0 %v336, 64
    %v456 = vpop.permute.xlu0 %455
    %v460 = vsel %vm156, %v449, 0
    %v463 = vsel %vm156, %v450, 0
    %465 = vmatprep.subr.mxu0 0.0
    %466 = vmatpush1.msra.mxu0 0.0
    %467 = vmatprep.subr.mxu0 0.0
    %468 = vmatpush1.msra.mxu0 0.0
    %469 = vmatprep.subr.mxu0 0.0
    %470 = vmatpush1.msra.mxu0 0.0
    %471 = vmatprep.subr.mxu0 0.0
    %472 = vmatpush1.msra.mxu0 0.0
    %473 = vmatprep.subr.mxu0 0.0
    %474 = vmatpush1.msra.mxu0 0.0
    %475 = vmatprep.subr.mxu0 0.0
    %476 = vmatpush1.msra.mxu0 0.0
    %477 = vmatprep.subr.mxu0 0.0
    %478 = vmatpush1.msra.mxu0 0.0
    %479 = vmatprep.subr.mxu0 0.0
    %480 = vmatpush1.msra.mxu0 0.0
    %481 = vmatprep.subr.mxu0 0.0
    %482 = vmatpush1.msra.mxu0 0.0
    %483 = vmatprep.subr.mxu0 0.0
    %484 = vmatpush1.msra.mxu0 0.0
    %485 = vmatprep.subr.mxu0 0.0
    %486 = vmatpush1.msra.mxu0 0.0
    %487 = vmatprep.subr.mxu0 0.0
    %488 = vmatpush1.msra.mxu0 0.0
    %489 = vmatprep.subr.mxu0 0.0
    %490 = vmatpush1.msra.mxu0 0.0
    %491 = vmatprep.subr.mxu0 0.0
    %492 = vmatpush1.msra.mxu0 0.0
    %493 = vmatprep.subr.mxu0 0.0
    %494 = vmatpush1.msra.mxu0 %v456
    %495 = vmatprep.subr.mxu0 0.0
    %496 = vmatpush1.msra.mxu0 %v454
    %497 = vmatprep.subr.mxu0 0.0
    %498 = vmatpush2.msra.mxu0 0.0
    %499 = vmatprep.subr.mxu0 0.0
    %500 = vmatpush2.msra.mxu0 0.0
    %501 = vmatprep.subr.mxu0 0.0
    %502 = vmatpush2.msra.mxu0 0.0
    %503 = vmatprep.subr.mxu0 0.0
    %504 = vmatpush2.msra.mxu0 0.0
    %505 = vmatprep.subr.mxu0 0.0
    %506 = vmatpush2.msra.mxu0 0.0
    %507 = vmatprep.subr.mxu0 0.0
    %508 = vmatpush2.msra.mxu0 0.0
    %509 = vmatprep.subr.mxu0 0.0
    %510 = vmatpush2.msra.mxu0 0.0
    %511 = vmatprep.subr.mxu0 0.0
    %512 = vmatpush2.msra.mxu0 0.0
    %513 = vmatprep.subr.mxu0 0.0
    %514 = vmatpush2.msra.mxu0 0.0
    %515 = vmatprep.subr.mxu0 0.0
    %516 = vmatpush2.msra.mxu0 0.0
    %517 = vmatprep.subr.mxu0 0.0
    %518 = vmatpush2.msra.mxu0 0.0
    %519 = vmatprep.subr.mxu0 0.0
    %520 = vmatpush2.msra.mxu0 0.0
    %521 = vmatprep.subr.mxu0 0.0
    %522 = vmatpush2.msra.mxu0 0.0
    %523 = vmatprep.subr.mxu0 0.0
    %524 = vmatpush2.msra.mxu0 0.0
    %525 = vmatprep.subr.mxu0 0.0
    %526 = vmatpush2.msra.mxu0 0.0
    %527 = vmatprep.subr.mxu0 0.0
    %528 = vmatpush2.msra.mxu0 0.0
    %529 = vmatprep.mubr.f32.mxu0 0.0
    %530 = vmatmul.mubr.f32.gmra.mxu0 %v460
    %v531 = vpop.f32.mrf.mxu0
    %v532 = vadd.f32 0.0, %v531
    %v533 = vpop.f32.mrf.mxu0
    %534 = vmatprep.mubr.f32.mxu0 0.0
    %535 = vmatmul.mubr.f32.gmra.mxu0 %v463
    %v536 = vpop.f32.mrf.mxu0
    %v537 = vadd.f32 0.0, %v536
    %v538 = vpop.f32.mrf.mxu0
    %539 = vdwg.mxu0
    %v540 = vpack.c.bf16 %v537, %v532
    %541 = vrot.lane.b32.xlu0 %v315, 120
    %v542 = vpop.permute.xlu0 %541
    %543 = vrot.lane.b32.xlu0 %v316, 120
    %v544 = vpop.permute.xlu0 %543
    %545 = vrot.lane.b32.xlu0 %v325, 88
    %v546 = vpop.permute.xlu0 %545
    %547 = vrot.lane.b32.xlu0 %v326, 88
    %v548 = vpop.permute.xlu0 %547
    %v549 = vsel %vm343, %v542, 0
    %v551 = vsel %vm343, %v544, 0
    %v553 = vsel %vm343, %v546, 0
    %v555 = vsel %vm343, %v548, 0
    %557 = vmatprep.subr.mxu0 0.0
    %558 = vmatpush1.xpose.msra.mxu0 0.0
    %559 = vmatprep.subr.mxu0 0.0
    %560 = vmatpush1.xpose.msra.mxu0 0.0
    %561 = vmatprep.subr.mxu0 0.0
    %562 = vmatpush1.xpose.msra.mxu0 0.0
    %563 = vmatprep.subr.mxu0 0.0
    %564 = vmatpush1.xpose.msra.mxu0 0.0
    %565 = vmatprep.subr.mxu0 0.0
    %566 = vmatpush1.xpose.msra.mxu0 0.0
    %567 = vmatprep.subr.mxu0 0.0
    %568 = vmatpush1.xpose.msra.mxu0 0.0
    %569 = vmatprep.subr.mxu0 0.0
    %570 = vmatpush1.xpose.msra.mxu0 0.0
    %571 = vmatprep.subr.mxu0 0.0
    %572 = vmatpush1.xpose.msra.mxu0 0.0
    %573 = vmatprep.subr.mxu0 0.0
    %574 = vmatpush1.xpose.msra.mxu0 0.0
    %575 = vmatprep.subr.mxu0 0.0
    %576 = vmatpush1.xpose.msra.mxu0 0.0
    %577 = vmatprep.subr.mxu0 0.0
    %578 = vmatpush1.xpose.msra.mxu0 0.0
    %579 = vmatprep.subr.mxu0 0.0
    %580 = vmatpush1.xpose.msra.mxu0 0.0
    %581 = vmatprep.subr.mxu0 0.0
    %582 = vmatpush1.xpose.msra.mxu0 0.0
    %583 = vmatprep.subr.mxu0 0.0
    %584 = vmatpush1.xpose.msra.mxu0 0.0
    %585 = vmatprep.subr.mxu0 0.0
    %586 = vmatpush1.xpose.msra.mxu0 %v555
    %587 = vmatprep.subr.mxu0 0.0
    %588 = vmatpush1.xpose.msra.mxu0 %v553
    %589 = vmatprep.subr.mxu0 0.0
    %590 = vmatpush2.xpose.msra.mxu0 0.0
    %591 = vmatprep.subr.mxu0 0.0
    %592 = vmatpush2.xpose.msra.mxu0 0.0
    %593 = vmatprep.subr.mxu0 0.0
    %594 = vmatpush2.xpose.msra.mxu0 0.0
    %595 = vmatprep.subr.mxu0 0.0
    %596 = vmatpush2.xpose.msra.mxu0 0.0
    %597 = vmatprep.subr.mxu0 0.0
    %598 = vmatpush2.xpose.msra.mxu0 0.0
    %599 = vmatprep.subr.mxu0 0.0
    %600 = vmatpush2.xpose.msra.mxu0 0.0
    %601 = vmatprep.subr.mxu0 0.0
    %602 = vmatpush2.xpose.msra.mxu0 0.0
    %603 = vmatprep.subr.mxu0 0.0
    %604 = vmatpush2.xpose.msra.mxu0 0.0
    %605 = vmatprep.subr.mxu0 0.0
    %606 = vmatpush2.xpose.msra.mxu0 0.0
    %607 = vmatprep.subr.mxu0 0.0
    %608 = vmatpush2.xpose.msra.mxu0 0.0
    %609 = vmatprep.subr.mxu0 0.0
    %610 = vmatpush2.xpose.msra.mxu0 0.0
    %611 = vmatprep.subr.mxu0 0.0
    %612 = vmatpush2.xpose.msra.mxu0 0.0
    %613 = vmatprep.subr.mxu0 0.0
    %614 = vmatpush2.xpose.msra.mxu0 0.0
    %615 = vmatprep.subr.mxu0 0.0
    %616 = vmatpush2.xpose.msra.mxu0 0.0
    %617 = vmatprep.subr.mxu0 0.0
    %618 = vmatpush2.xpose.msra.mxu0 0.0
    %619 = vmatprep.subr.mxu0 0.0
    %620 = vmatpush2.xpose.msra.mxu0 0.0
    %621 = vmatprep.mubr.f32.mxu0 0.0
    %622 = vmatmul.mubr.f32.gmra.mxu0 %v549
    %v623 = vpop.f32.mrf.mxu0
    %v624 = vadd.f32 %v139, %v623
    %v625 = vpop.f32.mrf.mxu0
    %626 = vmatprep.mubr.f32.mxu0 0.0
    %627 = vmatmul.mubr.f32.gmra.mxu0 %v551
    %v628 = vpop.f32.mrf.mxu0
    %v629 = vadd.f32 %v140, %v628
    %v630 = vpop.f32.mrf.mxu0
    %631 = vdwg.mxu0
    %v632 = vsel %vm156, %v624, -inf
    %633 = vmax.xlane.f32.xlu0 %v632
    %v634 = vpop.xlane.xlu0 %633
    %v635 = vsel %vm156, %v629, -inf
    %636 = vmax.xlane.f32.xlu0 %v635
    %v637 = vpop.xlane.xlu0 %636
    %v638 = vsub.f32 %v624, %v634
    %v639 = vsub.f32 %v629, %v637
    %v640 = vmul.f32 %v638, 1.442695
    %v641 = vpow.pop %v640
    %v642 = vmul.f32 %v639, 1.442695
    %v643 = vpow.pop %v642
    %v644 = vsel %vm156, %v641, 0.0
    %645 = vadd.xlane.f32.xlu0 %v644
    %v646 = vpop.xlane.xlu0 %645
    %v647 = vsel %vm156, %v643, 0.0
    %648 = vadd.xlane.f32.xlu0 %v647
    %v649 = vpop.xlane.xlu0 %648
    %v650 = vrcp.pop %v646
    %v651 = vrcp.pop %v649
    %v652 = vmul.f32 %v641, %v650
    %v653 = vmul.f32 %v643, %v651
    %654 = vrot.lane.b32.xlu0 %v335, 56
    %v655 = vpop.permute.xlu0 %654
    %656 = vrot.lane.b32.xlu0 %v336, 56
    %v657 = vpop.permute.xlu0 %656
    %v661 = vsel %vm156, %v652, 0
    %v664 = vsel %vm156, %v653, 0
    %666 = vmatprep.subr.mxu0 0.0
    %667 = vmatpush1.msra.mxu0 0.0
    %668 = vmatprep.subr.mxu0 0.0
    %669 = vmatpush1.msra.mxu0 0.0
    %670 = vmatprep.subr.mxu0 0.0
    %671 = vmatpush1.msra.mxu0 0.0
    %672 = vmatprep.subr.mxu0 0.0
    %673 = vmatpush1.msra.mxu0 0.0
    %674 = vmatprep.subr.mxu0 0.0
    %675 = vmatpush1.msra.mxu0 0.0
    %676 = vmatprep.subr.mxu0 0.0
    %677 = vmatpush1.msra.mxu0 0.0
    %678 = vmatprep.subr.mxu0 0.0
    %679 = vmatpush1.msra.mxu0 0.0
    %680 = vmatprep.subr.mxu0 0.0
    %681 = vmatpush1.msra.mxu0 0.0
    %682 = vmatprep.subr.mxu0 0.0
    %683 = vmatpush1.msra.mxu0 0.0
    %684 = vmatprep.subr.mxu0 0.0
    %685 = vmatpush1.msra.mxu0 0.0
    %686 = vmatprep.subr.mxu0 0.0
    %687 = vmatpush1.msra.mxu0 0.0
    %688 = vmatprep.subr.mxu0 0.0
    %689 = vmatpush1.msra.mxu0 0.0
    %690 = vmatprep.subr.mxu0 0.0
    %691 = vmatpush1.msra.mxu0 0.0
    %692 = vmatprep.subr.mxu0 0.0
    %693 = vmatpush1.msra.mxu0 0.0
    %694 = vmatprep.subr.mxu0 0.0
    %695 = vmatpush1.msra.mxu0 %v657
    %696 = vmatprep.subr.mxu0 0.0
    %697 = vmatpush1.msra.mxu0 %v655
    %698 = vmatprep.subr.mxu0 0.0
    %699 = vmatpush2.msra.mxu0 0.0
    %700 = vmatprep.subr.mxu0 0.0
    %701 = vmatpush2.msra.mxu0 0.0
    %702 = vmatprep.subr.mxu0 0.0
    %703 = vmatpush2.msra.mxu0 0.0
    %704 = vmatprep.subr.mxu0 0.0
    %705 = vmatpush2.msra.mxu0 0.0
    %706 = vmatprep.subr.mxu0 0.0
    %707 = vmatpush2.msra.mxu0 0.0
    %708 = vmatprep.subr.mxu0 0.0
    %709 = vmatpush2.msra.mxu0 0.0
    %710 = vmatprep.subr.mxu0 0.0
    %711 = vmatpush2.msra.mxu0 0.0
    %712 = vmatprep.subr.mxu0 0.0
    %713 = vmatpush2.msra.mxu0 0.0
    %714 = vmatprep.subr.mxu0 0.0
    %715 = vmatpush2.msra.mxu0 0.0
    %716 = vmatprep.subr.mxu0 0.0
    %717 = vmatpush2.msra.mxu0 0.0
    %718 = vmatprep.subr.mxu0 0.0
    %719 = vmatpush2.msra.mxu0 0.0
    %720 = vmatprep.subr.mxu0 0.0
    %721 = vmatpush2.msra.mxu0 0.0
    %722 = vmatprep.subr.mxu0 0.0
    %723 = vmatpush2.msra.mxu0 0.0
    %724 = vmatprep.subr.mxu0 0.0
    %725 = vmatpush2.msra.mxu0 0.0
    %726 = vmatprep.subr.mxu0 0.0
    %727 = vmatpush2.msra.mxu0 0.0
    %728 = vmatprep.subr.mxu0 0.0
    %729 = vmatpush2.msra.mxu0 0.0
    %730 = vmatprep.mubr.f32.mxu0 0.0
    %731 = vmatmul.mubr.f32.gmra.mxu0 %v661
    %v732 = vpop.f32.mrf.mxu0
    %v733 = vadd.f32 0.0, %v732
    %v734 = vpop.f32.mrf.mxu0
    %735 = vmatprep.mubr.f32.mxu0 0.0
    %736 = vmatmul.mubr.f32.gmra.mxu0 %v664
    %v737 = vpop.f32.mrf.mxu0
    %v738 = vadd.f32 0.0, %v737
    %v739 = vpop.f32.mrf.mxu0
    %740 = vdwg.mxu0
    %v741 = vpack.c.bf16 %v738, %v733
    %v743 = vsel %vm343, %v741, 0
    %vm745 = vcmask 1043456
    %v747 = vsel %vm745, %v248, 0
    %749 = vmatprep.subr.bf16.mxu0 0
    %750 = vmatpush1.bf16.msra.mxu0 0
    %751 = vmatprep.subr.bf16.mxu0 0
    %752 = vmatpush1.bf16.msra.mxu0 0
    %753 = vmatprep.subr.bf16.mxu0 0
    %754 = vmatpush1.bf16.msra.mxu0 0
    %755 = vmatprep.subr.bf16.mxu0 0
    %756 = vmatpush1.bf16.msra.mxu0 0
    %757 = vmatprep.subr.bf16.mxu0 0
    %758 = vmatpush1.bf16.msra.mxu0 0
    %759 = vmatprep.subr.bf16.mxu0 0
    %760 = vmatpush1.bf16.msra.mxu0 0
    %761 = vmatprep.subr.bf16.mxu0 0
    %762 = vmatpush1.bf16.msra.mxu0 0
    %763 = vmatprep.subr.bf16.mxu0 0
    %764 = vmatpush1.bf16.msra.mxu0 %v747
    %765 = vmatprep.subr.bf16.mxu0 0
    %766 = vmatpush2.bf16.msra.mxu0 0
    %767 = vmatprep.subr.bf16.mxu0 0
    %768 = vmatpush2.bf16.msra.mxu0 0
    %769 = vmatprep.subr.bf16.mxu0 0
    %770 = vmatpush2.bf16.msra.mxu0 0
    %771 = vmatprep.subr.bf16.mxu0 0
    %772 = vmatpush2.bf16.msra.mxu0 0
    %773 = vmatprep.subr.bf16.mxu0 0
    %774 = vmatpush2.bf16.msra.mxu0 0
    %775 = vmatprep.subr.bf16.mxu0 0
    %776 = vmatpush2.bf16.msra.mxu0 0
    %777 = vmatprep.subr.bf16.mxu0 0
    %778 = vmatpush2.bf16.msra.mxu0 0
    %779 = vmatprep.subr.bf16.mxu0 0
    %780 = vmatpush2.bf16.msra.mxu0 0
    %781 = vmatprep.mubr.bf16.mxu0 0
    %782 = vmatmul.mubr.bf16.gmra.mxu0 %v743
    %v783 = vpop.f32.mrf.mxu0
    %v784 = vadd.f32 0.0, %v783
    %v785 = vpop.f32.mrf.mxu0
    %v786 = vpop.f32.mrf.mxu0
    %v787 = vadd.f32 0.0, %v786
    %v788 = vpop.f32.mrf.mxu0
    %789 = vdwg.mxu0
    %v791 = vsel %vm343, %v540, 0
    %v794 = vsel %vm745, %v247, 0
    %796 = vmatprep.subr.bf16.mxu0 0
    %797 = vmatpush1.bf16.msra.mxu0 0
    %798 = vmatprep.subr.bf16.mxu0 0
    %799 = vmatpush1.bf16.msra.mxu0 0
    %800 = vmatprep.subr.bf16.mxu0 0
    %801 = vmatpush1.bf16.msra.mxu0 0
    %802 = vmatprep.subr.bf16.mxu0 0
    %803 = vmatpush1.bf16.msra.mxu0 0
    %804 = vmatprep.subr.bf16.mxu0 0
    %805 = vmatpush1.bf16.msra.mxu0 0
    %806 = vmatprep.subr.bf16.mxu0 0
    %807 = vmatpush1.bf16.msra.mxu0 0
    %808 = vmatprep.subr.bf16.mxu0 0
    %809 = vmatpush1.bf16.msra.mxu0 0
    %810 = vmatprep.subr.bf16.mxu0 0
    %811 = vmatpush1.bf16.msra.mxu0 %v794
    %812 = vmatprep.subr.bf16.mxu0 0
    %813 = vmatpush2.bf16.msra.mxu0 0
    %814 = vmatprep.subr.bf16.mxu0 0
    %815 = vmatpush2.bf16.msra.mxu0 0
    %816 = vmatprep.subr.bf16.mxu0 0
    %817 = vmatpush2.bf16.msra.mxu0 0
    %818 = vmatprep.subr.bf16.mxu0 0
    %819 = vmatpush2.bf16.msra.mxu0 0
    %820 = vmatprep.subr.bf16.mxu0 0
    %821 = vmatpush2.bf16.msra.mxu0 0
    %822 = vmatprep.subr.bf16.mxu0 0
    %823 = vmatpush2.bf16.msra.mxu0 0
    %824 = vmatprep.subr.bf16.mxu0 0
    %825 = vmatpush2.bf16.msra.mxu0 0
    %826 = vmatprep.subr.bf16.mxu0 0
    %827 = vmatpush2.bf16.msra.mxu0 0
    %828 = vmatprep.mubr.bf16.mxu0 0
    %829 = vmatmul.mubr.bf16.gmra.mxu0 %v791
    %v830 = vpop.f32.mrf.mxu0
    %v831 = vadd.f32 %v784, %v830
    %v832 = vpop.f32.mrf.mxu0
    %v833 = vpop.f32.mrf.mxu0
    %v834 = vadd.f32 %v787, %v833
    %v835 = vpop.f32.mrf.mxu0
    %836 = vdwg.mxu0
    %837 = vrot.lane.b32.xlu0 %v315, 112
    %v838 = vpop.permute.xlu0 %837
    %839 = vrot.lane.b32.xlu0 %v316, 112
    %v840 = vpop.permute.xlu0 %839
    %841 = vrot.lane.b32.xlu0 %v325, 80
    %v842 = vpop.permute.xlu0 %841
    %843 = vrot.lane.b32.xlu0 %v326, 80
    %v844 = vpop.permute.xlu0 %843
    %v845 = vsel %vm343, %v838, 0
    %v847 = vsel %vm343, %v840, 0
    %v849 = vsel %vm343, %v842, 0
    %v851 = vsel %vm343, %v844, 0
    %853 = vmatprep.subr.mxu0 0.0
    %854 = vmatpush1.xpose.msra.mxu0 0.0
    %855 = vmatprep.subr.mxu0 0.0
    %856 = vmatpush1.xpose.msra.mxu0 0.0
    %857 = vmatprep.subr.mxu0 0.0
    %858 = vmatpush1.xpose.msra.mxu0 0.0
    %859 = vmatprep.subr.mxu0 0.0
    %860 = vmatpush1.xpose.msra.mxu0 0.0
    %861 = vmatprep.subr.mxu0 0.0
    %862 = vmatpush1.xpose.msra.mxu0 0.0
    %863 = vmatprep.subr.mxu0 0.0
    %864 = vmatpush1.xpose.msra.mxu0 0.0
    %865 = vmatprep.subr.mxu0 0.0
    %866 = vmatpush1.xpose.msra.mxu0 0.0
    %867 = vmatprep.subr.mxu0 0.0
    %868 = vmatpush1.xpose.msra.mxu0 0.0
    %869 = vmatprep.subr.mxu0 0.0
    %870 = vmatpush1.xpose.msra.mxu0 0.0
    %871 = vmatprep.subr.mxu0 0.0
    %872 = vmatpush1.xpose.msra.mxu0 0.0
    %873 = vmatprep.subr.mxu0 0.0
    %874 = vmatpush1.xpose.msra.mxu0 0.0
    %875 = vmatprep.subr.mxu0 0.0
    %876 = vmatpush1.xpose.msra.mxu0 0.0
    %877 = vmatprep.subr.mxu0 0.0
    %878 = vmatpush1.xpose.msra.mxu0 0.0
    %879 = vmatprep.subr.mxu0 0.0
    %880 = vmatpush1.xpose.msra.mxu0 0.0
    %881 = vmatprep.subr.mxu0 0.0
    %882 = vmatpush1.xpose.msra.mxu0 %v851
    %883 = vmatprep.subr.mxu0 0.0
    %884 = vmatpush1.xpose.msra.mxu0 %v849
    %885 = vmatprep.subr.mxu0 0.0
    %886 = vmatpush2.xpose.msra.mxu0 0.0
    %887 = vmatprep.subr.mxu0 0.0
    %888 = vmatpush2.xpose.msra.mxu0 0.0
    %889 = vmatprep.subr.mxu0 0.0
    %890 = vmatpush2.xpose.msra.mxu0 0.0
    %891 = vmatprep.subr.mxu0 0.0
    %892 = vmatpush2.xpose.msra.mxu0 0.0
    %893 = vmatprep.subr.mxu0 0.0
    %894 = vmatpush2.xpose.msra.mxu0 0.0
    %895 = vmatprep.subr.mxu0 0.0
    %896 = vmatpush2.xpose.msra.mxu0 0.0
    %897 = vmatprep.subr.mxu0 0.0
    %898 = vmatpush2.xpose.msra.mxu0 0.0
    %899 = vmatprep.subr.mxu0 0.0
    %900 = vmatpush2.xpose.msra.mxu0 0.0
    %901 = vmatprep.subr.mxu0 0.0
    %902 = vmatpush2.xpose.msra.mxu0 0.0
    %903 = vmatprep.subr.mxu0 0.0
    %904 = vmatpush2.xpose.msra.mxu0 0.0
    %905 = vmatprep.subr.mxu0 0.0
    %906 = vmatpush2.xpose.msra.mxu0 0.0
    %907 = vmatprep.subr.mxu0 0.0
    %908 = vmatpush2.xpose.msra.mxu0 0.0
    %909 = vmatprep.subr.mxu0 0.0
    %910 = vmatpush2.xpose.msra.mxu0 0.0
    %911 = vmatprep.subr.mxu0 0.0
    %912 = vmatpush2.xpose.msra.mxu0 0.0
    %913 = vmatprep.subr.mxu0 0.0
    %914 = vmatpush2.xpose.msra.mxu0 0.0
    %915 = vmatprep.subr.mxu0 0.0
    %916 = vmatpush2.xpose.msra.mxu0 0.0
    %917 = vmatprep.mubr.f32.mxu0 0.0
    %918 = vmatmul.mubr.f32.gmra.mxu0 %v845
    %v919 = vpop.f32.mrf.mxu0
    %v920 = vadd.f32 %v139, %v919
    %v921 = vpop.f32.mrf.mxu0
    %922 = vmatprep.mubr.f32.mxu0 0.0
    %923 = vmatmul.mubr.f32.gmra.mxu0 %v847
    %v924 = vpop.f32.mrf.mxu0
    %v925 = vadd.f32 %v140, %v924
    %v926 = vpop.f32.mrf.mxu0
    %927 = vdwg.mxu0
    %v928 = vsel %vm156, %v920, -inf
    %929 = vmax.xlane.f32.xlu0 %v928
    %v930 = vpop.xlane.xlu0 %929
    %v931 = vsel %vm156, %v925, -inf
    %932 = vmax.xlane.f32.xlu0 %v931
    %v933 = vpop.xlane.xlu0 %932
    %v934 = vsub.f32 %v920, %v930
    %v935 = vsub.f32 %v925, %v933
    %v936 = vmul.f32 %v934, 1.442695
    %v937 = vpow.pop %v936
    %v938 = vmul.f32 %v935, 1.442695
    %v939 = vpow.pop %v938
    %v940 = vsel %vm156, %v937, 0.0
    %941 = vadd.xlane.f32.xlu0 %v940
    %v942 = vpop.xlane.xlu0 %941
    %v943 = vsel %vm156, %v939, 0.0
    %944 = vadd.xlane.f32.xlu0 %v943
    %v945 = vpop.xlane.xlu0 %944
    %v946 = vrcp.pop %v942
    %v947 = vrcp.pop %v945
    %v948 = vmul.f32 %v937, %v946
    %v949 = vmul.f32 %v939, %v947
    %950 = vrot.lane.b32.xlu0 %v335, 48
    %v951 = vpop.permute.xlu0 %950
    %952 = vrot.lane.b32.xlu0 %v336, 48
    %v953 = vpop.permute.xlu0 %952
    %v957 = vsel %vm156, %v948, 0
    %v960 = vsel %vm156, %v949, 0
    %962 = vmatprep.subr.mxu0 0.0
    %963 = vmatpush1.msra.mxu0 0.0
    %964 = vmatprep.subr.mxu0 0.0
    %965 = vmatpush1.msra.mxu0 0.0
    %966 = vmatprep.subr.mxu0 0.0
    %967 = vmatpush1.msra.mxu0 0.0
    %968 = vmatprep.subr.mxu0 0.0
    %969 = vmatpush1.msra.mxu0 0.0
    %970 = vmatprep.subr.mxu0 0.0
    %971 = vmatpush1.msra.mxu0 0.0
    %972 = vmatprep.subr.mxu0 0.0
    %973 = vmatpush1.msra.mxu0 0.0
    %974 = vmatprep.subr.mxu0 0.0
    %975 = vmatpush1.msra.mxu0 0.0
    %976 = vmatprep.subr.mxu0 0.0
    %977 = vmatpush1.msra.mxu0 0.0
    %978 = vmatprep.subr.mxu0 0.0
    %979 = vmatpush1.msra.mxu0 0.0
    %980 = vmatprep.subr.mxu0 0.0
    %981 = vmatpush1.msra.mxu0 0.0
    %982 = vmatprep.subr.mxu0 0.0
    %983 = vmatpush1.msra.mxu0 0.0
    %984 = vmatprep.subr.mxu0 0.0
    %985 = vmatpush1.msra.mxu0 0.0
    %986 = vmatprep.subr.mxu0 0.0
    %987 = vmatpush1.msra.mxu0 0.0
    %988 = vmatprep.subr.mxu0 0.0
    %989 = vmatpush1.msra.mxu0 0.0
    %990 = vmatprep.subr.mxu0 0.0
    %991 = vmatpush1.msra.mxu0 %v953
    %992 = vmatprep.subr.mxu0 0.0
    %993 = vmatpush1.msra.mxu0 %v951
    %994 = vmatprep.subr.mxu0 0.0
    %995 = vmatpush2.msra.mxu0 0.0
    %996 = vmatprep.subr.mxu0 0.0
    %997 = vmatpush2.msra.mxu0 0.0
    %998 = vmatprep.subr.mxu0 0.0
    %999 = vmatpush2.msra.mxu0 0.0
    %1000 = vmatprep.subr.mxu0 0.0
    %1001 = vmatpush2.msra.mxu0 0.0
    %1002 = vmatprep.subr.mxu0 0.0
    %1003 = vmatpush2.msra.mxu0 0.0
    %1004 = vmatprep.subr.mxu0 0.0
    %1005 = vmatpush2.msra.mxu0 0.0
    %1006 = vmatprep.subr.mxu0 0.0
    %1007 = vmatpush2.msra.mxu0 0.0
    %1008 = vmatprep.subr.mxu0 0.0
    %1009 = vmatpush2.msra.mxu0 0.0
    %1010 = vmatprep.subr.mxu0 0.0
    %1011 = vmatpush2.msra.mxu0 0.0
    %1012 = vmatprep.subr.mxu0 0.0
    %1013 = vmatpush2.msra.mxu0 0.0
    %1014 = vmatprep.subr.mxu0 0.0
    %1015 = vmatpush2.msra.mxu0 0.0
    %1016 = vmatprep.subr.mxu0 0.0
    %1017 = vmatpush2.msra.mxu0 0.0
    %1018 = vmatprep.subr.mxu0 0.0
    %1019 = vmatpush2.msra.mxu0 0.0
    %1020 = vmatprep.subr.mxu0 0.0
    %1021 = vmatpush2.msra.mxu0 0.0
    %1022 = vmatprep.subr.mxu0 0.0
    %1023 = vmatpush2.msra.mxu0 0.0
    %1024 = vmatprep.subr.mxu0 0.0
    %1025 = vmatpush2.msra.mxu0 0.0
    %1026 = vmatprep.mubr.f32.mxu0 0.0
    %1027 = vmatmul.mubr.f32.gmra.mxu0 %v957
    %v1028 = vpop.f32.mrf.mxu0
    %v1029 = vadd.f32 0.0, %v1028
    %v1030 = vpop.f32.mrf.mxu0
    %1031 = vmatprep.mubr.f32.mxu0 0.0
    %1032 = vmatmul.mubr.f32.gmra.mxu0 %v960
    %v1033 = vpop.f32.mrf.mxu0
    %v1034 = vadd.f32 0.0, %v1033
    %v1035 = vpop.f32.mrf.mxu0
    %1036 = vdwg.mxu0
    %v1037 = vpack.c.bf16 %v1034, %v1029
    %v1039 = vsel %vm343, %v1037, 0
    %v1042 = vsel %vm745, %v249, 0
    %1044 = vmatprep.subr.bf16.mxu0 0
    %1045 = vmatpush1.bf16.msra.mxu0 0
    %1046 = vmatprep.subr.bf16.mxu0 0
    %1047 = vmatpush1.bf16.msra.mxu0 0
    %1048 = vmatprep.subr.bf16.mxu0 0
    %1049 = vmatpush1.bf16.msra.mxu0 0
    %1050 = vmatprep.subr.bf16.mxu0 0
    %1051 = vmatpush1.bf16.msra.mxu0 0
    %1052 = vmatprep.subr.bf16.mxu0 0
    %1053 = vmatpush1.bf16.msra.mxu0 0
    %1054 = vmatprep.subr.bf16.mxu0 0
    %1055 = vmatpush1.bf16.msra.mxu0 0
    %1056 = vmatprep.subr.bf16.mxu0 0
    %1057 = vmatpush1.bf16.msra.mxu0 0
    %1058 = vmatprep.subr.bf16.mxu0 0
    %1059 = vmatpush1.bf16.msra.mxu0 %v1042
    %1060 = vmatprep.subr.bf16.mxu0 0
    %1061 = vmatpush2.bf16.msra.mxu0 0
    %1062 = vmatprep.subr.bf16.mxu0 0
    %1063 = vmatpush2.bf16.msra.mxu0 0
    %1064 = vmatprep.subr.bf16.mxu0 0
    %1065 = vmatpush2.bf16.msra.mxu0 0
    %1066 = vmatprep.subr.bf16.mxu0 0
    %1067 = vmatpush2.bf16.msra.mxu0 0
    %1068 = vmatprep.subr.bf16.mxu0 0
    %1069 = vmatpush2.bf16.msra.mxu0 0
    %1070 = vmatprep.subr.bf16.mxu0 0
    %1071 = vmatpush2.bf16.msra.mxu0 0
    %1072 = vmatprep.subr.bf16.mxu0 0
    %1073 = vmatpush2.bf16.msra.mxu0 0
    %1074 = vmatprep.subr.bf16.mxu0 0
    %1075 = vmatpush2.bf16.msra.mxu0 0
    %1076 = vmatprep.mubr.bf16.mxu0 0
    %1077 = vmatmul.mubr.bf16.gmra.mxu0 %v1039
    %v1078 = vpop.f32.mrf.mxu0
    %v1079 = vadd.f32 0.0, %v1078
    %v1080 = vpop.f32.mrf.mxu0
    %v1081 = vpop.f32.mrf.mxu0
    %v1082 = vadd.f32 0.0, %v1081
    %v1083 = vpop.f32.mrf.mxu0
    %1084 = vdwg.mxu0
    %v1085 = vadd.f32 %v831, %v1079
    %v1086 = vadd.f32 %v834, %v1082
    %1087 = vrot.lane.b32.xlu0 %v315, 104
    %v1088 = vpop.permute.xlu0 %1087
    %1089 = vrot.lane.b32.xlu0 %v316, 104
    %v1090 = vpop.permute.xlu0 %1089
    %1091 = vrot.lane.b32.xlu0 %v325, 72
    %v1092 = vpop.permute.xlu0 %1091
    %1093 = vrot.lane.b32.xlu0 %v326, 72
    %v1094 = vpop.permute.xlu0 %1093
    %v1095 = vsel %vm343, %v1088, 0
    %v1097 = vsel %vm343, %v1090, 0
    %v1099 = vsel %vm343, %v1092, 0
    %v1101 = vsel %vm343, %v1094, 0
    %1103 = vmatprep.subr.mxu0 0.0
    %1104 = vmatpush1.xpose.msra.mxu0 0.0
    %1105 = vmatprep.subr.mxu0 0.0
    %1106 = vmatpush1.xpose.msra.mxu0 0.0
    %1107 = vmatprep.subr.mxu0 0.0
    %1108 = vmatpush1.xpose.msra.mxu0 0.0
    %1109 = vmatprep.subr.mxu0 0.0
    %1110 = vmatpush1.xpose.msra.mxu0 0.0
    %1111 = vmatprep.subr.mxu0 0.0
    %1112 = vmatpush1.xpose.msra.mxu0 0.0
    %1113 = vmatprep.subr.mxu0 0.0
    %1114 = vmatpush1.xpose.msra.mxu0 0.0
    %1115 = vmatprep.subr.mxu0 0.0
    %1116 = vmatpush1.xpose.msra.mxu0 0.0
    %1117 = vmatprep.subr.mxu0 0.0
    %1118 = vmatpush1.xpose.msra.mxu0 0.0
    %1119 = vmatprep.subr.mxu0 0.0
    %1120 = vmatpush1.xpose.msra.mxu0 0.0
    %1121 = vmatprep.subr.mxu0 0.0
    %1122 = vmatpush1.xpose.msra.mxu0 0.0
    %1123 = vmatprep.subr.mxu0 0.0
    %1124 = vmatpush1.xpose.msra.mxu0 0.0
    %1125 = vmatprep.subr.mxu0 0.0
    %1126 = vmatpush1.xpose.msra.mxu0 0.0
    %1127 = vmatprep.subr.mxu0 0.0
    %1128 = vmatpush1.xpose.msra.mxu0 0.0
    %1129 = vmatprep.subr.mxu0 0.0
    %1130 = vmatpush1.xpose.msra.mxu0 0.0
    %1131 = vmatprep.subr.mxu0 0.0
    %1132 = vmatpush1.xpose.msra.mxu0 %v1101
    %1133 = vmatprep.subr.mxu0 0.0
    %1134 = vmatpush1.xpose.msra.mxu0 %v1099
    %1135 = vmatprep.subr.mxu0 0.0
    %1136 = vmatpush2.xpose.msra.mxu0 0.0
    %1137 = vmatprep.subr.mxu0 0.0
    %1138 = vmatpush2.xpose.msra.mxu0 0.0
    %1139 = vmatprep.subr.mxu0 0.0
    %1140 = vmatpush2.xpose.msra.mxu0 0.0
    %1141 = vmatprep.subr.mxu0 0.0
    %1142 = vmatpush2.xpose.msra.mxu0 0.0
    %1143 = vmatprep.subr.mxu0 0.0
    %1144 = vmatpush2.xpose.msra.mxu0 0.0
    %1145 = vmatprep.subr.mxu0 0.0
    %1146 = vmatpush2.xpose.msra.mxu0 0.0
    %1147 = vmatprep.subr.mxu0 0.0
    %1148 = vmatpush2.xpose.msra.mxu0 0.0
    %1149 = vmatprep.subr.mxu0 0.0
    %1150 = vmatpush2.xpose.msra.mxu0 0.0
    %1151 = vmatprep.subr.mxu0 0.0
    %1152 = vmatpush2.xpose.msra.mxu0 0.0
    %1153 = vmatprep.subr.mxu0 0.0
    %1154 = vmatpush2.xpose.msra.mxu0 0.0
    %1155 = vmatprep.subr.mxu0 0.0
    %1156 = vmatpush2.xpose.msra.mxu0 0.0
    %1157 = vmatprep.subr.mxu0 0.0
    %1158 = vmatpush2.xpose.msra.mxu0 0.0
    %1159 = vmatprep.subr.mxu0 0.0
    %1160 = vmatpush2.xpose.msra.mxu0 0.0
    %1161 = vmatprep.subr.mxu0 0.0
    %1162 = vmatpush2.xpose.msra.mxu0 0.0
    %1163 = vmatprep.subr.mxu0 0.0
    %1164 = vmatpush2.xpose.msra.mxu0 0.0
    %1165 = vmatprep.subr.mxu0 0.0
    %1166 = vmatpush2.xpose.msra.mxu0 0.0
    %1167 = vmatprep.mubr.f32.mxu0 0.0
    %1168 = vmatmul.mubr.f32.gmra.mxu0 %v1095
    %v1169 = vpop.f32.mrf.mxu0
    %v1170 = vadd.f32 %v139, %v1169
    %v1171 = vpop.f32.mrf.mxu0
    %1172 = vmatprep.mubr.f32.mxu0 0.0
    %1173 = vmatmul.mubr.f32.gmra.mxu0 %v1097
    %v1174 = vpop.f32.mrf.mxu0
    %v1175 = vadd.f32 %v140, %v1174
    %v1176 = vpop.f32.mrf.mxu0
    %1177 = vdwg.mxu0
    %v1178 = vsel %vm156, %v1170, -inf
    %1179 = vmax.xlane.f32.xlu0 %v1178
    %v1180 = vpop.xlane.xlu0 %1179
    %v1181 = vsel %vm156, %v1175, -inf
    %1182 = vmax.xlane.f32.xlu0 %v1181
    %v1183 = vpop.xlane.xlu0 %1182
    %v1184 = vsub.f32 %v1170, %v1180
    %v1185 = vsub.f32 %v1175, %v1183
    %v1186 = vmul.f32 %v1184, 1.442695
    %v1187 = vpow.pop %v1186
    %v1188 = vmul.f32 %v1185, 1.442695
    %v1189 = vpow.pop %v1188
    %v1190 = vsel %vm156, %v1187, 0.0
    %1191 = vadd.xlane.f32.xlu0 %v1190
    %v1192 = vpop.xlane.xlu0 %1191
    %v1193 = vsel %vm156, %v1189, 0.0
    %1194 = vadd.xlane.f32.xlu0 %v1193
    %v1195 = vpop.xlane.xlu0 %1194
    %v1196 = vrcp.pop %v1192
    %v1197 = vrcp.pop %v1195
    %v1198 = vmul.f32 %v1187, %v1196
    %v1199 = vmul.f32 %v1189, %v1197
    %1200 = vrot.lane.b32.xlu0 %v335, 40
    %v1201 = vpop.permute.xlu0 %1200
    %1202 = vrot.lane.b32.xlu0 %v336, 40
    %v1203 = vpop.permute.xlu0 %1202
    %v1207 = vsel %vm156, %v1198, 0
    %v1210 = vsel %vm156, %v1199, 0
    %1212 = vmatprep.subr.mxu0 0.0
    %1213 = vmatpush1.msra.mxu0 0.0
    %1214 = vmatprep.subr.mxu0 0.0
    %1215 = vmatpush1.msra.mxu0 0.0
    %1216 = vmatprep.subr.mxu0 0.0
    %1217 = vmatpush1.msra.mxu0 0.0
    %1218 = vmatprep.subr.mxu0 0.0
    %1219 = vmatpush1.msra.mxu0 0.0
    %1220 = vmatprep.subr.mxu0 0.0
    %1221 = vmatpush1.msra.mxu0 0.0
    %1222 = vmatprep.subr.mxu0 0.0
    %1223 = vmatpush1.msra.mxu0 0.0
    %1224 = vmatprep.subr.mxu0 0.0
    %1225 = vmatpush1.msra.mxu0 0.0
    %1226 = vmatprep.subr.mxu0 0.0
    %1227 = vmatpush1.msra.mxu0 0.0
    %1228 = vmatprep.subr.mxu0 0.0
    %1229 = vmatpush1.msra.mxu0 0.0
    %1230 = vmatprep.subr.mxu0 0.0
    %1231 = vmatpush1.msra.mxu0 0.0
    %1232 = vmatprep.subr.mxu0 0.0
    %1233 = vmatpush1.msra.mxu0 0.0
    %1234 = vmatprep.subr.mxu0 0.0
    %1235 = vmatpush1.msra.mxu0 0.0
    %1236 = vmatprep.subr.mxu0 0.0
    %1237 = vmatpush1.msra.mxu0 0.0
    %1238 = vmatprep.subr.mxu0 0.0
    %1239 = vmatpush1.msra.mxu0 0.0
    %1240 = vmatprep.subr.mxu0 0.0
    %1241 = vmatpush1.msra.mxu0 %v1203
    %1242 = vmatprep.subr.mxu0 0.0
    %1243 = vmatpush1.msra.mxu0 %v1201
    %1244 = vmatprep.subr.mxu0 0.0
    %1245 = vmatpush2.msra.mxu0 0.0
    %1246 = vmatprep.subr.mxu0 0.0
    %1247 = vmatpush2.msra.mxu0 0.0
    %1248 = vmatprep.subr.mxu0 0.0
    %1249 = vmatpush2.msra.mxu0 0.0
    %1250 = vmatprep.subr.mxu0 0.0
    %1251 = vmatpush2.msra.mxu0 0.0
    %1252 = vmatprep.subr.mxu0 0.0
    %1253 = vmatpush2.msra.mxu0 0.0
    %1254 = vmatprep.subr.mxu0 0.0
    %1255 = vmatpush2.msra.mxu0 0.0
    %1256 = vmatprep.subr.mxu0 0.0
    %1257 = vmatpush2.msra.mxu0 0.0
    %1258 = vmatprep.subr.mxu0 0.0
    %1259 = vmatpush2.msra.mxu0 0.0
    %1260 = vmatprep.subr.mxu0 0.0
    %1261 = vmatpush2.msra.mxu0 0.0
    %1262 = vmatprep.subr.mxu0 0.0
    %1263 = vmatpush2.msra.mxu0 0.0
    %1264 = vmatprep.subr.mxu0 0.0
    %1265 = vmatpush2.msra.mxu0 0.0
    %1266 = vmatprep.subr.mxu0 0.0
    %1267 = vmatpush2.msra.mxu0 0.0
    %1268 = vmatprep.subr.mxu0 0.0
    %1269 = vmatpush2.msra.mxu0 0.0
    %1270 = vmatprep.subr.mxu0 0.0
    %1271 = vmatpush2.msra.mxu0 0.0
    %1272 = vmatprep.subr.mxu0 0.0
    %1273 = vmatpush2.msra.mxu0 0.0
    %1274 = vmatprep.subr.mxu0 0.0
    %1275 = vmatpush2.msra.mxu0 0.0
    %1276 = vmatprep.mubr.f32.mxu0 0.0
    %1277 = vmatmul.mubr.f32.gmra.mxu0 %v1207
    %v1278 = vpop.f32.mrf.mxu0
    %v1279 = vadd.f32 0.0, %v1278
    %v1280 = vpop.f32.mrf.mxu0
    %1281 = vmatprep.mubr.f32.mxu0 0.0
    %1282 = vmatmul.mubr.f32.gmra.mxu0 %v1210
    %v1283 = vpop.f32.mrf.mxu0
    %v1284 = vadd.f32 0.0, %v1283
    %v1285 = vpop.f32.mrf.mxu0
    %1286 = vdwg.mxu0
    %v1287 = vpack.c.bf16 %v1284, %v1279
    %v1289 = vsel %vm343, %v1287, 0
    %v1292 = vsel %vm745, %v250, 0
    %1294 = vmatprep.subr.bf16.mxu0 0
    %1295 = vmatpush1.bf16.msra.mxu0 0
    %1296 = vmatprep.subr.bf16.mxu0 0
    %1297 = vmatpush1.bf16.msra.mxu0 0
    %1298 = vmatprep.subr.bf16.mxu0 0
    %1299 = vmatpush1.bf16.msra.mxu0 0
    %1300 = vmatprep.subr.bf16.mxu0 0
    %1301 = vmatpush1.bf16.msra.mxu0 0
    %1302 = vmatprep.subr.bf16.mxu0 0
    %1303 = vmatpush1.bf16.msra.mxu0 0
    %1304 = vmatprep.subr.bf16.mxu0 0
    %1305 = vmatpush1.bf16.msra.mxu0 0
    %1306 = vmatprep.subr.bf16.mxu0 0
    %1307 = vmatpush1.bf16.msra.mxu0 0
    %1308 = vmatprep.subr.bf16.mxu0 0
    %1309 = vmatpush1.bf16.msra.mxu0 %v1292
    %1310 = vmatprep.subr.bf16.mxu0 0
    %1311 = vmatpush2.bf16.msra.mxu0 0
    %1312 = vmatprep.subr.bf16.mxu0 0
    %1313 = vmatpush2.bf16.msra.mxu0 0
    %1314 = vmatprep.subr.bf16.mxu0 0
    %1315 = vmatpush2.bf16.msra.mxu0 0
    %1316 = vmatprep.subr.bf16.mxu0 0
    %1317 = vmatpush2.bf16.msra.mxu0 0
    %1318 = vmatprep.subr.bf16.mxu0 0
    %1319 = vmatpush2.bf16.msra.mxu0 0
    %1320 = vmatprep.subr.bf16.mxu0 0
    %1321 = vmatpush2.bf16.msra.mxu0 0
    %1322 = vmatprep.subr.bf16.mxu0 0
    %1323 = vmatpush2.bf16.msra.mxu0 0
    %1324 = vmatprep.subr.bf16.mxu0 0
    %1325 = vmatpush2.bf16.msra.mxu0 0
    %1326 = vmatprep.mubr.bf16.mxu0 0
    %1327 = vmatmul.mubr.bf16.gmra.mxu0 %v1289
    %v1328 = vpop.f32.mrf.mxu0
    %v1329 = vadd.f32 0.0, %v1328
    %v1330 = vpop.f32.mrf.mxu0
    %v1331 = vpop.f32.mrf.mxu0
    %v1332 = vadd.f32 0.0, %v1331
    %v1333 = vpop.f32.mrf.mxu0
    %1334 = vdwg.mxu0
    %v1335 = vadd.f32 %v1085, %v1329
    %v1336 = vadd.f32 %v1086, %v1332
    %v1337 = vlaneseq
    %v1338 = vshrl.u32 %v1337, 7
    %v1339 = vsub.s32 3, %v1338
    %v1340 = vrot.slane %v251, %v1339
    %v1341 = vadd.f32 %v1335, %v1340
    %v1342 = vadd.f32 %v1336, %v1340
    %v1343 = vadd.f32 %v241, %v1341
    %v1344 = vadd.f32 %v242, %v1342
    %v1345 = vsel %vm201, %v1343, 0.0
    %1346 = vadd.xlane.f32.xlu0 %v1345
    %v1347 = vpop.xlane.xlu0 %1346
    %v1348 = vsel %vm201, %v1344, 0.0
    %1349 = vadd.xlane.f32.xlu0 %v1348
    %v1350 = vpop.xlane.xlu0 %1349
    %v1351 = vmul.f32 %v1347, %v208
    %v1352 = vmul.f32 %v1350, %v208
    %v1353 = vsub.f32 %v1343, %v1351
    %v1354 = vsub.f32 %v1344, %v1352
    %v1355 = vmul.f32 %v1353, %v1353
    %v1356 = vmul.f32 %v1354, %v1354
    %v1357 = vsel %vm201, %v1355, 0.0
    %1358 = vadd.xlane.f32.xlu0 %v1357
    %v1359 = vpop.xlane.xlu0 %1358
    %v1360 = vsel %vm201, %v1356, 0.0
    %1361 = vadd.xlane.f32.xlu0 %v1360
    %v1362 = vpop.xlane.xlu0 %1361
    %v1363 = vmul.f32 %v1359, %v208
    %v1364 = vmul.f32 %v1362, %v208
    %v1365 = vadd.f32 %v1363, 1e-05
    %v1366 = vadd.f32 %v1364, 1e-05
    %v1367 = vrsqrt.pop %v1365
    %v1368 = vrsqrt.pop %v1366
    %v1369 = vmul.f32 %v1353, %v1367
    %v1370 = vmul.f32 %v1354, %v1368
    %v1371 = vlaneseq
    %v1372 = vshrl.u32 %v1371, 7
    %v1373 = vsub.s32 4, %v1372
    %v1374 = vrot.slane %v251, %v1373
    %v1375 = vmul.f32 %v1369, %v1374
    %v1376 = vmul.f32 %v1370, %v1374
    %v1377 = vlaneseq
    %v1378 = vshrl.u32 %v1377, 7
    %v1379 = vsub.s32 5, %v1378
    %v1380 = vrot.slane %v251, %v1379
    %v1381 = vadd.f32 %v1375, %v1380
    %v1382 = vadd.f32 %v1376, %v1380
    %s1383 = scalar_lea.vmem [#allocation10], 16
    %v1384 = vld [vmem:[%s1383] sm:$0xf]
    %v1385 = vld [vmem:[%s1383 + $0x4] sm:$0xf]
    %v1386 = vld [vmem:[%s1383 + $0x8] sm:$0xf]
    %v1387 = vld [vmem:[%s1383 + $0xc] sm:$0xf]
    %s1388 = scalar_lea.vmem [#allocation11], 16
    %v1389 = vld [vmem:[%s1388] sm:$0xf]
    %v1390 = vld [vmem:[%s1388 + $0x4] sm:$0xf]
    %v1391 = vld [vmem:[%s1388 + $0x8] sm:$0xf]
    %v1392 = vld [vmem:[%s1388 + $0xc] sm:$0xf]
    %s1393 = scalar_lea.vmem [#allocation13], 8
    %v1394 = vld [vmem:[%s1393] sm:$0xff]
    %v1395 = vpack.c.bf16 %v1382, %v1381
    %v1400 = vunpack.c.l.b16 %v1384
    %v1401 = vunpack.c.l.b16 %v1385
    %v1402 = vunpack.c.l.b16 %v1386
    %v1403 = vunpack.c.l.b16 %v1387
    %v1404 = vpack.c.b16 %v1401, %v1400
    %v1405 = vpack.c.b16 %v1403, %v1402
    %v1409 = vsel %vm201, %v1395, 0
    %1411 = vmatprep.subr.bf16.mxu0 0
    %1412 = vmatpush1.bf16.msra.mxu0 0
    %1413 = vmatprep.subr.bf16.mxu0 0
    %1414 = vmatpush1.bf16.msra.mxu0 0
    %1415 = vmatprep.subr.bf16.mxu0 0
    %1416 = vmatpush1.bf16.msra.mxu0 0
    %1417 = vmatprep.subr.bf16.mxu0 0
    %1418 = vmatpush1.bf16.msra.mxu0 0
    %1419 = vmatprep.subr.bf16.mxu0 0
    %1420 = vmatpush1.bf16.msra.mxu0 0
    %1421 = vmatprep.subr.bf16.mxu0 0
    %1422 = vmatpush1.bf16.msra.mxu0 0
    %1423 = vmatprep.subr.bf16.mxu0 0
    %1424 = vmatpush1.bf16.msra.mxu0 %v1405
    %1425 = vmatprep.subr.bf16.mxu0 0
    %1426 = vmatpush1.bf16.msra.mxu0 %v1404
    %1427 = vmatprep.subr.bf16.mxu0 0
    %1428 = vmatpush2.bf16.msra.mxu0 0
    %1429 = vmatprep.subr.bf16.mxu0 0
    %1430 = vmatpush2.bf16.msra.mxu0 0
    %1431 = vmatprep.subr.bf16.mxu0 0
    %1432 = vmatpush2.bf16.msra.mxu0 0
    %1433 = vmatprep.subr.bf16.mxu0 0
    %1434 = vmatpush2.bf16.msra.mxu0 0
    %1435 = vmatprep.subr.bf16.mxu0 0
    %1436 = vmatpush2.bf16.msra.mxu0 0
    %1437 = vmatprep.subr.bf16.mxu0 0
    %1438 = vmatpush2.bf16.msra.mxu0 0
    %1439 = vmatprep.subr.bf16.mxu0 0
    %1440 = vmatpush2.bf16.msra.mxu0 0
    %1441 = vmatprep.subr.bf16.mxu0 0
    %1442 = vmatpush2.bf16.msra.mxu0 0
    %1443 = vmatprep.mubr.bf16.mxu0 0
    %1444 = vmatmul.mubr.bf16.gmra.mxu0 %v1409
    %v1445 = vpop.f32.mrf.mxu0
    %v1446 = vadd.f32 0.0, %v1445
    %v1447 = vpop.f32.mrf.mxu0
    %v1448 = vpop.f32.mrf.mxu0
    %v1449 = vadd.f32 0.0, %v1448
    %v1450 = vpop.f32.mrf.mxu0
    %1451 = vdwg.mxu0
    %v1452 = vlaneseq
    %v1453 = vshrl.u32 %v1452, 7
    %v1454 = vsub.s32 0, %v1453
    %v1455 = vrot.slane %v1394, %v1454
    %v1456 = vadd.f32 %v1446, %v1455
    %v1457 = vadd.f32 %v1449, %v1455
    %v1458 = vmul.f32 %v1456, 0.35355338
    %v1459 = vmul.f32 %v1457, 0.35355338
    %v1460 = vlaneseq
    %v1461 = vshrl.u32 %v1460, 7
    %v1462 = vsub.s32 1, %v1461
    %v1463 = vrot.slane %v1394, %v1462
    %1465 = vrot.lane.b32.xlu0 %v1463, 32
    %v1466 = vpop.permute.xlu0 %1465
    %v1468 = vadd.f32 %v1446, %v1466
    %v1469 = vadd.f32 %v1449, %v1466
    %v1470 = vlaneseq
    %v1471 = vshrl.u32 %v1470, 7
    %v1472 = vsub.s32 2, %v1471
    %v1473 = vrot.slane %v1394, %v1472
    %1475 = vrot.lane.b32.xlu0 %v1473, 64
    %v1476 = vpop.permute.xlu0 %1475
    %v1478 = vadd.f32 %v1446, %v1476
    %v1479 = vadd.f32 %v1449, %v1476
    %1482 = vrot.lane.b32.xlu0 %v1468, 96
    %v1483 = vpop.permute.xlu0 %1482
    %1484 = vrot.lane.b32.xlu0 %v1469, 96
    %v1485 = vpop.permute.xlu0 %1484
    %v1487 = vsel %vm343, %v1458, 0
    %v1490 = vsel %vm343, %v1459, 0
    %v1492 = vsel %vm343, %v1483, 0
    %v1494 = vsel %vm343, %v1485, 0
    %1496 = vmatprep.subr.mxu0 0.0
    %1497 = vmatpush1.xpose.msra.mxu0 0.0
    %1498 = vmatprep.subr.mxu0 0.0
    %1499 = vmatpush1.xpose.msra.mxu0 0.0
    %1500 = vmatprep.subr.mxu0 0.0
    %1501 = vmatpush1.xpose.msra.mxu0 0.0
    %1502 = vmatprep.subr.mxu0 0.0
    %1503 = vmatpush1.xpose.msra.mxu0 0.0
    %1504 = vmatprep.subr.mxu0 0.0
    %1505 = vmatpush1.xpose.msra.mxu0 0.0
    %1506 = vmatprep.subr.mxu0 0.0
    %1507 = vmatpush1.xpose.msra.mxu0 0.0
    %1508 = vmatprep.subr.mxu0 0.0
    %1509 = vmatpush1.xpose.msra.mxu0 0.0
    %1510 = vmatprep.subr.mxu0 0.0
    %1511 = vmatpush1.xpose.msra.mxu0 0.0
    %1512 = vmatprep.subr.mxu0 0.0
    %1513 = vmatpush1.xpose.msra.mxu0 0.0
    %1514 = vmatprep.subr.mxu0 0.0
    %1515 = vmatpush1.xpose.msra.mxu0 0.0
    %1516 = vmatprep.subr.mxu0 0.0
    %1517 = vmatpush1.xpose.msra.mxu0 0.0
    %1518 = vmatprep.subr.mxu0 0.0
    %1519 = vmatpush1.xpose.msra.mxu0 0.0
    %1520 = vmatprep.subr.mxu0 0.0
    %1521 = vmatpush1.xpose.msra.mxu0 0.0
    %1522 = vmatprep.subr.mxu0 0.0
    %1523 = vmatpush1.xpose.msra.mxu0 0.0
    %1524 = vmatprep.subr.mxu0 0.0
    %1525 = vmatpush1.xpose.msra.mxu0 %v1494
    %1526 = vmatprep.subr.mxu0 0.0
    %1527 = vmatpush1.xpose.msra.mxu0 %v1492
    %1528 = vmatprep.subr.mxu0 0.0
    %1529 = vmatpush2.xpose.msra.mxu0 0.0
    %1530 = vmatprep.subr.mxu0 0.0
    %1531 = vmatpush2.xpose.msra.mxu0 0.0
    %1532 = vmatprep.subr.mxu0 0.0
    %1533 = vmatpush2.xpose.msra.mxu0 0.0
    %1534 = vmatprep.subr.mxu0 0.0
    %1535 = vmatpush2.xpose.msra.mxu0 0.0
    %1536 = vmatprep.subr.mxu0 0.0
    %1537 = vmatpush2.xpose.msra.mxu0 0.0
    %1538 = vmatprep.subr.mxu0 0.0
    %1539 = vmatpush2.xpose.msra.mxu0 0.0
    %1540 = vmatprep.subr.mxu0 0.0
    %1541 = vmatpush2.xpose.msra.mxu0 0.0
    %1542 = vmatprep.subr.mxu0 0.0
    %1543 = vmatpush2.xpose.msra.mxu0 0.0
    %1544 = vmatprep.subr.mxu0 0.0
    %1545 = vmatpush2.xpose.msra.mxu0 0.0
    %1546 = vmatprep.subr.mxu0 0.0
    %1547 = vmatpush2.xpose.msra.mxu0 0.0
    %1548 = vmatprep.subr.mxu0 0.0
    %1549 = vmatpush2.xpose.msra.mxu0 0.0
    %1550 = vmatprep.subr.mxu0 0.0
    %1551 = vmatpush2.xpose.msra.mxu0 0.0
    %1552 = vmatprep.subr.mxu0 0.0
    %1553 = vmatpush2.xpose.msra.mxu0 0.0
    %1554 = vmatprep.subr.mxu0 0.0
    %1555 = vmatpush2.xpose.msra.mxu0 0.0
    %1556 = vmatprep.subr.mxu0 0.0
    %1557 = vmatpush2.xpose.msra.mxu0 0.0
    %1558 = vmatprep.subr.mxu0 0.0
    %1559 = vmatpush2.xpose.msra.mxu0 0.0
    %1560 = vmatprep.mubr.f32.mxu0 0.0
    %1561 = vmatmul.mubr.f32.gmra.mxu0 %v1487
    %v1562 = vpop.f32.mrf.mxu0
    %v1563 = vadd.f32 %v139, %v1562
    %v1564 = vpop.f32.mrf.mxu0
    %1565 = vmatprep.mubr.f32.mxu0 0.0
    %1566 = vmatmul.mubr.f32.gmra.mxu0 %v1490
    %v1567 = vpop.f32.mrf.mxu0
    %v1568 = vadd.f32 %v140, %v1567
    %v1569 = vpop.f32.mrf.mxu0
    %1570 = vdwg.mxu0
    %v1571 = vsel %vm156, %v1563, -inf
    %1572 = vmax.xlane.f32.xlu0 %v1571
    %v1573 = vpop.xlane.xlu0 %1572
    %v1574 = vsel %vm156, %v1568, -inf
    %1575 = vmax.xlane.f32.xlu0 %v1574
    %v1576 = vpop.xlane.xlu0 %1575
    %v1577 = vsub.f32 %v1563, %v1573
    %v1578 = vsub.f32 %v1568, %v1576
    %v1579 = vmul.f32 %v1577, 1.442695
    %v1580 = vpow.pop %v1579
    %v1581 = vmul.f32 %v1578, 1.442695
    %v1582 = vpow.pop %v1581
    %v1583 = vsel %vm156, %v1580, 0.0
    %1584 = vadd.xlane.f32.xlu0 %v1583
    %v1585 = vpop.xlane.xlu0 %1584
    %v1586 = vsel %vm156, %v1582, 0.0
    %1587 = vadd.xlane.f32.xlu0 %v1586
    %v1588 = vpop.xlane.xlu0 %1587
    %v1589 = vrcp.pop %v1585
    %v1590 = vrcp.pop %v1588
    %v1591 = vmul.f32 %v1580, %v1589
    %v1592 = vmul.f32 %v1582, %v1590
    %1595 = vrot.lane.b32.xlu0 %v1478, 64
    %v1596 = vpop.permute.xlu0 %1595
    %1597 = vrot.lane.b32.xlu0 %v1479, 64
    %v1598 = vpop.permute.xlu0 %1597
    %v1602 = vsel %vm156, %v1591, 0
    %v1605 = vsel %vm156, %v1592, 0
    %1607 = vmatprep.subr.mxu0 0.0
    %1608 = vmatpush1.msra.mxu0 0.0
    %1609 = vmatprep.subr.mxu0 0.0
    %1610 = vmatpush1.msra.mxu0 0.0
    %1611 = vmatprep.subr.mxu0 0.0
    %1612 = vmatpush1.msra.mxu0 0.0
    %1613 = vmatprep.subr.mxu0 0.0
    %1614 = vmatpush1.msra.mxu0 0.0
    %1615 = vmatprep.subr.mxu0 0.0
    %1616 = vmatpush1.msra.mxu0 0.0
    %1617 = vmatprep.subr.mxu0 0.0
    %1618 = vmatpush1.msra.mxu0 0.0
    %1619 = vmatprep.subr.mxu0 0.0
    %1620 = vmatpush1.msra.mxu0 0.0
    %1621 = vmatprep.subr.mxu0 0.0
    %1622 = vmatpush1.msra.mxu0 0.0
    %1623 = vmatprep.subr.mxu0 0.0
    %1624 = vmatpush1.msra.mxu0 0.0
    %1625 = vmatprep.subr.mxu0 0.0
    %1626 = vmatpush1.msra.mxu0 0.0
    %1627 = vmatprep.subr.mxu0 0.0
    %1628 = vmatpush1.msra.mxu0 0.0
    %1629 = vmatprep.subr.mxu0 0.0
    %1630 = vmatpush1.msra.mxu0 0.0
    %1631 = vmatprep.subr.mxu0 0.0
    %1632 = vmatpush1.msra.mxu0 0.0
    %1633 = vmatprep.subr.mxu0 0.0
    %1634 = vmatpush1.msra.mxu0 0.0
    %1635 = vmatprep.subr.mxu0 0.0
    %1636 = vmatpush1.msra.mxu0 %v1598
    %1637 = vmatprep.subr.mxu0 0.0
    %1638 = vmatpush1.msra.mxu0 %v1596
    %1639 = vmatprep.subr.mxu0 0.0
    %1640 = vmatpush2.msra.mxu0 0.0
    %1641 = vmatprep.subr.mxu0 0.0
    %1642 = vmatpush2.msra.mxu0 0.0
    %1643 = vmatprep.subr.mxu0 0.0
    %1644 = vmatpush2.msra.mxu0 0.0
    %1645 = vmatprep.subr.mxu0 0.0
    %1646 = vmatpush2.msra.mxu0 0.0
    %1647 = vmatprep.subr.mxu0 0.0
    %1648 = vmatpush2.msra.mxu0 0.0
    %1649 = vmatprep.subr.mxu0 0.0
    %1650 = vmatpush2.msra.mxu0 0.0
    %1651 = vmatprep.subr.mxu0 0.0
    %1652 = vmatpush2.msra.mxu0 0.0
    %1653 = vmatprep.subr.mxu0 0.0
    %1654 = vmatpush2.msra.mxu0 0.0
    %1655 = vmatprep.subr.mxu0 0.0
    %1656 = vmatpush2.msra.mxu0 0.0
    %1657 = vmatprep.subr.mxu0 0.0
    %1658 = vmatpush2.msra.mxu0 0.0
    %1659 = vmatprep.subr.mxu0 0.0
    %1660 = vmatpush2.msra.mxu0 0.0
    %1661 = vmatprep.subr.mxu0 0.0
    %1662 = vmatpush2.msra.mxu0 0.0
    %1663 = vmatprep.subr.mxu0 0.0
    %1664 = vmatpush2.msra.mxu0 0.0
    %1665 = vmatprep.subr.mxu0 0.0
    %1666 = vmatpush2.msra.mxu0 0.0
    %1667 = vmatprep.subr.mxu0 0.0
    %1668 = vmatpush2.msra.mxu0 0.0
    %1669 = vmatprep.subr.mxu0 0.0
    %1670 = vmatpush2.msra.mxu0 0.0
    %1671 = vmatprep.mubr.f32.mxu0 0.0
    %1672 = vmatmul.mubr.f32.gmra.mxu0 %v1602
    %v1673 = vpop.f32.mrf.mxu0
    %v1674 = vadd.f32 0.0, %v1673
    %v1675 = vpop.f32.mrf.mxu0
    %1676 = vmatprep.mubr.f32.mxu0 0.0
    %1677 = vmatmul.mubr.f32.gmra.mxu0 %v1605
    %v1678 = vpop.f32.mrf.mxu0
    %v1679 = vadd.f32 0.0, %v1678
    %v1680 = vpop.f32.mrf.mxu0
    %1681 = vdwg.mxu0
    %v1682 = vpack.c.bf16 %v1679, %v1674
    %1683 = vrot.lane.b32.xlu0 %v1458, 120
    %v1684 = vpop.permute.xlu0 %1683
    %1685 = vrot.lane.b32.xlu0 %v1459, 120
    %v1686 = vpop.permute.xlu0 %1685
    %1687 = vrot.lane.b32.xlu0 %v1468, 88
    %v1688 = vpop.permute.xlu0 %1687
    %1689 = vrot.lane.b32.xlu0 %v1469, 88
    %v1690 = vpop.permute.xlu0 %1689
    %v1691 = vsel %vm343, %v1684, 0
    %v1693 = vsel %vm343, %v1686, 0
    %v1695 = vsel %vm343, %v1688, 0
    %v1697 = vsel %vm343, %v1690, 0
    %1699 = vmatprep.subr.mxu0 0.0
    %1700 = vmatpush1.xpose.msra.mxu0 0.0
    %1701 = vmatprep.subr.mxu0 0.0
    %1702 = vmatpush1.xpose.msra.mxu0 0.0
    %1703 = vmatprep.subr.mxu0 0.0
    %1704 = vmatpush1.xpose.msra.mxu0 0.0
    %1705 = vmatprep.subr.mxu0 0.0
    %1706 = vmatpush1.xpose.msra.mxu0 0.0
    %1707 = vmatprep.subr.mxu0 0.0
    %1708 = vmatpush1.xpose.msra.mxu0 0.0
    %1709 = vmatprep.subr.mxu0 0.0
    %1710 = vmatpush1.xpose.msra.mxu0 0.0
    %1711 = vmatprep.subr.mxu0 0.0
    %1712 = vmatpush1.xpose.msra.mxu0 0.0
    %1713 = vmatprep.subr.mxu0 0.0
    %1714 = vmatpush1.xpose.msra.mxu0 0.0
    %1715 = vmatprep.subr.mxu0 0.0
    %1716 = vmatpush1.xpose.msra.mxu0 0.0
    %1717 = vmatprep.subr.mxu0 0.0
    %1718 = vmatpush1.xpose.msra.mxu0 0.0
    %1719 = vmatprep.subr.mxu0 0.0
    %1720 = vmatpush1.xpose.msra.mxu0 0.0
    %1721 = vmatprep.subr.mxu0 0.0
    %1722 = vmatpush1.xpose.msra.mxu0 0.0
    %1723 = vmatprep.subr.mxu0 0.0
    %1724 = vmatpush1.xpose.msra.mxu0 0.0
    %1725 = vmatprep.subr.mxu0 0.0
    %1726 = vmatpush1.xpose.msra.mxu0 0.0
    %1727 = vmatprep.subr.mxu0 0.0
    %1728 = vmatpush1.xpose.msra.mxu0 %v1697
    %1729 = vmatprep.subr.mxu0 0.0
    %1730 = vmatpush1.xpose.msra.mxu0 %v1695
    %1731 = vmatprep.subr.mxu0 0.0
    %1732 = vmatpush2.xpose.msra.mxu0 0.0
    %1733 = vmatprep.subr.mxu0 0.0
    %1734 = vmatpush2.xpose.msra.mxu0 0.0
    %1735 = vmatprep.subr.mxu0 0.0
    %1736 = vmatpush2.xpose.msra.mxu0 0.0
    %1737 = vmatprep.subr.mxu0 0.0
    %1738 = vmatpush2.xpose.msra.mxu0 0.0
    %1739 = vmatprep.subr.mxu0 0.0
    %1740 = vmatpush2.xpose.msra.mxu0 0.0
    %1741 = vmatprep.subr.mxu0 0.0
    %1742 = vmatpush2.xpose.msra.mxu0 0.0
    %1743 = vmatprep.subr.mxu0 0.0
    %1744 = vmatpush2.xpose.msra.mxu0 0.0
    %1745 = vmatprep.subr.mxu0 0.0
    %1746 = vmatpush2.xpose.msra.mxu0 0.0
    %1747 = vmatprep.subr.mxu0 0.0
    %1748 = vmatpush2.xpose.msra.mxu0 0.0
    %1749 = vmatprep.subr.mxu0 0.0
    %1750 = vmatpush2.xpose.msra.mxu0 0.0
    %1751 = vmatprep.subr.mxu0 0.0
    %1752 = vmatpush2.xpose.msra.mxu0 0.0
    %1753 = vmatprep.subr.mxu0 0.0
    %1754 = vmatpush2.xpose.msra.mxu0 0.0
    %1755 = vmatprep.subr.mxu0 0.0
    %1756 = vmatpush2.xpose.msra.mxu0 0.0
    %1757 = vmatprep.subr.mxu0 0.0
    %1758 = vmatpush2.xpose.msra.mxu0 0.0
    %1759 = vmatprep.subr.mxu0 0.0
    %1760 = vmatpush2.xpose.msra.mxu0 0.0
    %1761 = vmatprep.subr.mxu0 0.0
    %1762 = vmatpush2.xpose.msra.mxu0 0.0
    %1763 = vmatprep.mubr.f32.mxu0 0.0
    %1764 = vmatmul.mubr.f32.gmra.mxu0 %v1691
    %v1765 = vpop.f32.mrf.mxu0
    %v1766 = vadd.f32 %v139, %v1765
    %v1767 = vpop.f32.mrf.mxu0
    %1768 = vmatprep.mubr.f32.mxu0 0.0
    %1769 = vmatmul.mubr.f32.gmra.mxu0 %v1693
    %v1770 = vpop.f32.mrf.mxu0
    %v1771 = vadd.f32 %v140, %v1770
    %v1772 = vpop.f32.mrf.mxu0
    %1773 = vdwg.mxu0
    %v1774 = vsel %vm156, %v1766, -inf
    %1775 = vmax.xlane.f32.xlu0 %v1774
    %v1776 = vpop.xlane.xlu0 %1775
    %v1777 = vsel %vm156, %v1771, -inf
    %1778 = vmax.xlane.f32.xlu0 %v1777
    %v1779 = vpop.xlane.xlu0 %1778
    %v1780 = vsub.f32 %v1766, %v1776
    %v1781 = vsub.f32 %v1771, %v1779
    %v1782 = vmul.f32 %v1780, 1.442695
    %v1783 = vpow.pop %v1782
    %v1784 = vmul.f32 %v1781, 1.442695
    %v1785 = vpow.pop %v1784
    %v1786 = vsel %vm156, %v1783, 0.0
    %1787 = vadd.xlane.f32.xlu0 %v1786
    %v1788 = vpop.xlane.xlu0 %1787
    %v1789 = vsel %vm156, %v1785, 0.0
    %1790 = vadd.xlane.f32.xlu0 %v1789
    %v1791 = vpop.xlane.xlu0 %1790
    %v1792 = vrcp.pop %v1788
    %v1793 = vrcp.pop %v1791
    %v1794 = vmul.f32 %v1783, %v1792
    %v1795 = vmul.f32 %v1785, %v1793
    %1796 = vrot.lane.b32.xlu0 %v1478, 56
    %v1797 = vpop.permute.xlu0 %1796
    %1798 = vrot.lane.b32.xlu0 %v1479, 56
    %v1799 = vpop.permute.xlu0 %1798
    %v1803 = vsel %vm156, %v1794, 0
    %v1806 = vsel %vm156, %v1795, 0
    %1808 = vmatprep.subr.mxu0 0.0
    %1809 = vmatpush1.msra.mxu0 0.0
    %1810 = vmatprep.subr.mxu0 0.0
    %1811 = vmatpush1.msra.mxu0 0.0
    %1812 = vmatprep.subr.mxu0 0.0
    %1813 = vmatpush1.msra.mxu0 0.0
    %1814 = vmatprep.subr.mxu0 0.0
    %1815 = vmatpush1.msra.mxu0 0.0
    %1816 = vmatprep.subr.mxu0 0.0
    %1817 = vmatpush1.msra.mxu0 0.0
    %1818 = vmatprep.subr.mxu0 0.0
    %1819 = vmatpush1.msra.mxu0 0.0
    %1820 = vmatprep.subr.mxu0 0.0
    %1821 = vmatpush1.msra.mxu0 0.0
    %1822 = vmatprep.subr.mxu0 0.0
    %1823 = vmatpush1.msra.mxu0 0.0
    %1824 = vmatprep.subr.mxu0 0.0
    %1825 = vmatpush1.msra.mxu0 0.0
    %1826 = vmatprep.subr.mxu0 0.0
    %1827 = vmatpush1.msra.mxu0 0.0
    %1828 = vmatprep.subr.mxu0 0.0
    %1829 = vmatpush1.msra.mxu0 0.0
    %1830 = vmatprep.subr.mxu0 0.0
    %1831 = vmatpush1.msra.mxu0 0.0
    %1832 = vmatprep.subr.mxu0 0.0
    %1833 = vmatpush1.msra.mxu0 0.0
    %1834 = vmatprep.subr.mxu0 0.0
    %1835 = vmatpush1.msra.mxu0 0.0
    %1836 = vmatprep.subr.mxu0 0.0
    %1837 = vmatpush1.msra.mxu0 %v1799
    %1838 = vmatprep.subr.mxu0 0.0
    %1839 = vmatpush1.msra.mxu0 %v1797
    %1840 = vmatprep.subr.mxu0 0.0
    %1841 = vmatpush2.msra.mxu0 0.0
    %1842 = vmatprep.subr.mxu0 0.0
    %1843 = vmatpush2.msra.mxu0 0.0
    %1844 = vmatprep.subr.mxu0 0.0
    %1845 = vmatpush2.msra.mxu0 0.0
    %1846 = vmatprep.subr.mxu0 0.0
    %1847 = vmatpush2.msra.mxu0 0.0
    %1848 = vmatprep.subr.mxu0 0.0
    %1849 = vmatpush2.msra.mxu0 0.0
    %1850 = vmatprep.subr.mxu0 0.0
    %1851 = vmatpush2.msra.mxu0 0.0
    %1852 = vmatprep.subr.mxu0 0.0
    %1853 = vmatpush2.msra.mxu0 0.0
    %1854 = vmatprep.subr.mxu0 0.0
    %1855 = vmatpush2.msra.mxu0 0.0
    %1856 = vmatprep.subr.mxu0 0.0
    %1857 = vmatpush2.msra.mxu0 0.0
    %1858 = vmatprep.subr.mxu0 0.0
    %1859 = vmatpush2.msra.mxu0 0.0
    %1860 = vmatprep.subr.mxu0 0.0
    %1861 = vmatpush2.msra.mxu0 0.0
    %1862 = vmatprep.subr.mxu0 0.0
    %1863 = vmatpush2.msra.mxu0 0.0
    %1864 = vmatprep.subr.mxu0 0.0
    %1865 = vmatpush2.msra.mxu0 0.0
    %1866 = vmatprep.subr.mxu0 0.0
    %1867 = vmatpush2.msra.mxu0 0.0
    %1868 = vmatprep.subr.mxu0 0.0
    %1869 = vmatpush2.msra.mxu0 0.0
    %1870 = vmatprep.subr.mxu0 0.0
    %1871 = vmatpush2.msra.mxu0 0.0
    %1872 = vmatprep.mubr.f32.mxu0 0.0
    %1873 = vmatmul.mubr.f32.gmra.mxu0 %v1803
    %v1874 = vpop.f32.mrf.mxu0
    %v1875 = vadd.f32 0.0, %v1874
    %v1876 = vpop.f32.mrf.mxu0
    %1877 = vmatprep.mubr.f32.mxu0 0.0
    %1878 = vmatmul.mubr.f32.gmra.mxu0 %v1806
    %v1879 = vpop.f32.mrf.mxu0
    %v1880 = vadd.f32 0.0, %v1879
    %v1881 = vpop.f32.mrf.mxu0
    %1882 = vdwg.mxu0
    %v1883 = vpack.c.bf16 %v1880, %v1875
    %v1885 = vsel %vm343, %v1883, 0
    %v1888 = vsel %vm745, %v1390, 0
    %1890 = vmatprep.subr.bf16.mxu0 0
    %1891 = vmatpush1.bf16.msra.mxu0 0
    %1892 = vmatprep.subr.bf16.mxu0 0
    %1893 = vmatpush1.bf16.msra.mxu0 0
    %1894 = vmatprep.subr.bf16.mxu0 0
    %1895 = vmatpush1.bf16.msra.mxu0 0
    %1896 = vmatprep.subr.bf16.mxu0 0
    %1897 = vmatpush1.bf16.msra.mxu0 0
    %1898 = vmatprep.subr.bf16.mxu0 0
    %1899 = vmatpush1.bf16.msra.mxu0 0
    %1900 = vmatprep.subr.bf16.mxu0 0
    %1901 = vmatpush1.bf16.msra.mxu0 0
    %1902 = vmatprep.subr.bf16.mxu0 0
    %1903 = vmatpush1.bf16.msra.mxu0 0
    %1904 = vmatprep.subr.bf16.mxu0 0
    %1905 = vmatpush1.bf16.msra.mxu0 %v1888
    %1906 = vmatprep.subr.bf16.mxu0 0
    %1907 = vmatpush2.bf16.msra.mxu0 0
    %1908 = vmatprep.subr.bf16.mxu0 0
    %1909 = vmatpush2.bf16.msra.mxu0 0
    %1910 = vmatprep.subr.bf16.mxu0 0
    %1911 = vmatpush2.bf16.msra.mxu0 0
    %1912 = vmatprep.subr.bf16.mxu0 0
    %1913 = vmatpush2.bf16.msra.mxu0 0
    %1914 = vmatprep.subr.bf16.mxu0 0
    %1915 = vmatpush2.bf16.msra.mxu0 0
    %1916 = vmatprep.subr.bf16.mxu0 0
    %1917 = vmatpush2.bf16.msra.mxu0 0
    %1918 = vmatprep.subr.bf16.mxu0 0
    %1919 = vmatpush2.bf16.msra.mxu0 0
    %1920 = vmatprep.subr.bf16.mxu0 0
    %1921 = vmatpush2.bf16.msra.mxu0 0
    %1922 = vmatprep.mubr.bf16.mxu0 0
    %1923 = vmatmul.mubr.bf16.gmra.mxu0 %v1885
    %v1924 = vpop.f32.mrf.mxu0
    %v1925 = vadd.f32 0.0, %v1924
    %v1926 = vpop.f32.mrf.mxu0
    %v1927 = vpop.f32.mrf.mxu0
    %v1928 = vadd.f32 0.0, %v1927
    %v1929 = vpop.f32.mrf.mxu0
    %1930 = vdwg.mxu0
    %v1932 = vsel %vm343, %v1682, 0
    %v1935 = vsel %vm745, %v1389, 0
    %1937 = vmatprep.subr.bf16.mxu0 0
    %1938 = vmatpush1.bf16.msra.mxu0 0
    %1939 = vmatprep.subr.bf16.mxu0 0
    %1940 = vmatpush1.bf16.msra.mxu0 0
    %1941 = vmatprep.subr.bf16.mxu0 0
    %1942 = vmatpush1.bf16.msra.mxu0 0
    %1943 = vmatprep.subr.bf16.mxu0 0
    %1944 = vmatpush1.bf16.msra.mxu0 0
    %1945 = vmatprep.subr.bf16.mxu0 0
    %1946 = vmatpush1.bf16.msra.mxu0 0
    %1947 = vmatprep.subr.bf16.mxu0 0
    %1948 = vmatpush1.bf16.msra.mxu0 0
    %1949 = vmatprep.subr.bf16.mxu0 0
    %1950 = vmatpush1.bf16.msra.mxu0 0
    %1951 = vmatprep.subr.bf16.mxu0 0
    %1952 = vmatpush1.bf16.msra.mxu0 %v1935
    %1953 = vmatprep.subr.bf16.mxu0 0
    %1954 = vmatpush2.bf16.msra.mxu0 0
    %1955 = vmatprep.subr.bf16.mxu0 0
    %1956 = vmatpush2.bf16.msra.mxu0 0
    %1957 = vmatprep.subr.bf16.mxu0 0
    %1958 = vmatpush2.bf16.msra.mxu0 0
    %1959 = vmatprep.subr.bf16.mxu0 0
    %1960 = vmatpush2.bf16.msra.mxu0 0
    %1961 = vmatprep.subr.bf16.mxu0 0
    %1962 = vmatpush2.bf16.msra.mxu0 0
    %1963 = vmatprep.subr.bf16.mxu0 0
    %1964 = vmatpush2.bf16.msra.mxu0 0
    %1965 = vmatprep.subr.bf16.mxu0 0
    %1966 = vmatpush2.bf16.msra.mxu0 0
    %1967 = vmatprep.subr.bf16.mxu0 0
    %1968 = vmatpush2.bf16.msra.mxu0 0
    %1969 = vmatprep.mubr.bf16.mxu0 0
    %1970 = vmatmul.mubr.bf16.gmra.mxu0 %v1932
    %v1971 = vpop.f32.mrf.mxu0
    %v1972 = vadd.f32 %v1925, %v1971
    %v1973 = vpop.f32.mrf.mxu0
    %v1974 = vpop.f32.mrf.mxu0
    %v1975 = vadd.f32 %v1928, %v1974
    %v1976 = vpop.f32.mrf.mxu0
    %1977 = vdwg.mxu0
    %1978 = vrot.lane.b32.xlu0 %v1458, 112
    %v1979 = vpop.permute.xlu0 %1978
    %1980 = vrot.lane.b32.xlu0 %v1459, 112
    %v1981 = vpop.permute.xlu0 %1980
    %1982 = vrot.lane.b32.xlu0 %v1468, 80
    %v1983 = vpop.permute.xlu0 %1982
    %1984 = vrot.lane.b32.xlu0 %v1469, 80
    %v1985 = vpop.permute.xlu0 %1984
    %v1986 = vsel %vm343, %v1979, 0
    %v1988 = vsel %vm343, %v1981, 0
    %v1990 = vsel %vm343, %v1983, 0
    %v1992 = vsel %vm343, %v1985, 0
    %1994 = vmatprep.subr.mxu0 0.0
    %1995 = vmatpush1.xpose.msra.mxu0 0.0
    %1996 = vmatprep.subr.mxu0 0.0
    %1997 = vmatpush1.xpose.msra.mxu0 0.0
    %1998 = vmatprep.subr.mxu0 0.0
    %1999 = vmatpush1.xpose.msra.mxu0 0.0
    %2000 = vmatprep.subr.mxu0 0.0
    %2001 = vmatpush1.xpose.msra.mxu0 0.0
    %2002 = vmatprep.subr.mxu0 0.0
    %2003 = vmatpush1.xpose.msra.mxu0 0.0
    %2004 = vmatprep.subr.mxu0 0.0
    %2005 = vmatpush1.xpose.msra.mxu0 0.0
    %2006 = vmatprep.subr.mxu0 0.0
    %2007 = vmatpush1.xpose.msra.mxu0 0.0
    %2008 = vmatprep.subr.mxu0 0.0
    %2009 = vmatpush1.xpose.msra.mxu0 0.0
    %2010 = vmatprep.subr.mxu0 0.0
    %2011 = vmatpush1.xpose.msra.mxu0 0.0
    %2012 = vmatprep.subr.mxu0 0.0
    %2013 = vmatpush1.xpose.msra.mxu0 0.0
    %2014 = vmatprep.subr.mxu0 0.0
    %2015 = vmatpush1.xpose.msra.mxu0 0.0
    %2016 = vmatprep.subr.mxu0 0.0
    %2017 = vmatpush1.xpose.msra.mxu0 0.0
    %2018 = vmatprep.subr.mxu0 0.0
    %2019 = vmatpush1.xpose.msra.mxu0 0.0
    %2020 = vmatprep.subr.mxu0 0.0
    %2021 = vmatpush1.xpose.msra.mxu0 0.0
    %2022 = vmatprep.subr.mxu0 0.0
    %2023 = vmatpush1.xpose.msra.mxu0 %v1992
    %2024 = vmatprep.subr.mxu0 0.0
    %2025 = vmatpush1.xpose.msra.mxu0 %v1990
    %2026 = vmatprep.subr.mxu0 0.0
    %2027 = vmatpush2.xpose.msra.mxu0 0.0
    %2028 = vmatprep.subr.mxu0 0.0
    %2029 = vmatpush2.xpose.msra.mxu0 0.0
    %2030 = vmatprep.subr.mxu0 0.0
    %2031 = vmatpush2.xpose.msra.mxu0 0.0
    %2032 = vmatprep.subr.mxu0 0.0
    %2033 = vmatpush2.xpose.msra.mxu0 0.0
    %2034 = vmatprep.subr.mxu0 0.0
    %2035 = vmatpush2.xpose.msra.mxu0 0.0
    %2036 = vmatprep.subr.mxu0 0.0
    %2037 = vmatpush2.xpose.msra.mxu0 0.0
    %2038 = vmatprep.subr.mxu0 0.0
    %2039 = vmatpush2.xpose.msra.mxu0 0.0
    %2040 = vmatprep.subr.mxu0 0.0
    %2041 = vmatpush2.xpose.msra.mxu0 0.0
    %2042 = vmatprep.subr.mxu0 0.0
    %2043 = vmatpush2.xpose.msra.mxu0 0.0
    %2044 = vmatprep.subr.mxu0 0.0
    %2045 = vmatpush2.xpose.msra.mxu0 0.0
    %2046 = vmatprep.subr.mxu0 0.0
    %2047 = vmatpush2.xpose.msra.mxu0 0.0
    %2048 = vmatprep.subr.mxu0 0.0
    %2049 = vmatpush2.xpose.msra.mxu0 0.0
    %2050 = vmatprep.subr.mxu0 0.0
    %2051 = vmatpush2.xpose.msra.mxu0 0.0
    %2052 = vmatprep.subr.mxu0 0.0
    %2053 = vmatpush2.xpose.msra.mxu0 0.0
    %2054 = vmatprep.subr.mxu0 0.0
    %2055 = vmatpush2.xpose.msra.mxu0 0.0
    %2056 = vmatprep.subr.mxu0 0.0
    %2057 = vmatpush2.xpose.msra.mxu0 0.0
    %2058 = vmatprep.mubr.f32.mxu0 0.0
    %2059 = vmatmul.mubr.f32.gmra.mxu0 %v1986
    %v2060 = vpop.f32.mrf.mxu0
    %v2061 = vadd.f32 %v139, %v2060
    %v2062 = vpop.f32.mrf.mxu0
    %2063 = vmatprep.mubr.f32.mxu0 0.0
    %2064 = vmatmul.mubr.f32.gmra.mxu0 %v1988
    %v2065 = vpop.f32.mrf.mxu0
    %v2066 = vadd.f32 %v140, %v2065
    %v2067 = vpop.f32.mrf.mxu0
    %2068 = vdwg.mxu0
    %v2069 = vsel %vm156, %v2061, -inf
    %2070 = vmax.xlane.f32.xlu0 %v2069
    %v2071 = vpop.xlane.xlu0 %2070
    %v2072 = vsel %vm156, %v2066, -inf
    %2073 = vmax.xlane.f32.xlu0 %v2072
    %v2074 = vpop.xlane.xlu0 %2073
    %v2075 = vsub.f32 %v2061, %v2071
    %v2076 = vsub.f32 %v2066, %v2074
    %v2077 = vmul.f32 %v2075, 1.442695
    %v2078 = vpow.pop %v2077
    %v2079 = vmul.f32 %v2076, 1.442695
    %v2080 = vpow.pop %v2079
    %v2081 = vsel %vm156, %v2078, 0.0
    %2082 = vadd.xlane.f32.xlu0 %v2081
    %v2083 = vpop.xlane.xlu0 %2082
    %v2084 = vsel %vm156, %v2080, 0.0
    %2085 = vadd.xlane.f32.xlu0 %v2084
    %v2086 = vpop.xlane.xlu0 %2085
    %v2087 = vrcp.pop %v2083
    %v2088 = vrcp.pop %v2086
    %v2089 = vmul.f32 %v2078, %v2087
    %v2090 = vmul.f32 %v2080, %v2088
    %2091 = vrot.lane.b32.xlu0 %v1478, 48
    %v2092 = vpop.permute.xlu0 %2091
    %2093 = vrot.lane.b32.xlu0 %v1479, 48
    %v2094 = vpop.permute.xlu0 %2093
    %v2098 = vsel %vm156, %v2089, 0
    %v2101 = vsel %vm156, %v2090, 0
    %2103 = vmatprep.subr.mxu0 0.0
    %2104 = vmatpush1.msra.mxu0 0.0
    %2105 = vmatprep.subr.mxu0 0.0
    %2106 = vmatpush1.msra.mxu0 0.0
    %2107 = vmatprep.subr.mxu0 0.0
    %2108 = vmatpush1.msra.mxu0 0.0
    %2109 = vmatprep.subr.mxu0 0.0
    %2110 = vmatpush1.msra.mxu0 0.0
    %2111 = vmatprep.subr.mxu0 0.0
    %2112 = vmatpush1.msra.mxu0 0.0
    %2113 = vmatprep.subr.mxu0 0.0
    %2114 = vmatpush1.msra.mxu0 0.0
    %2115 = vmatprep.subr.mxu0 0.0
    %2116 = vmatpush1.msra.mxu0 0.0
    %2117 = vmatprep.subr.mxu0 0.0
    %2118 = vmatpush1.msra.mxu0 0.0
    %2119 = vmatprep.subr.mxu0 0.0
    %2120 = vmatpush1.msra.mxu0 0.0
    %2121 = vmatprep.subr.mxu0 0.0
    %2122 = vmatpush1.msra.mxu0 0.0
    %2123 = vmatprep.subr.mxu0 0.0
    %2124 = vmatpush1.msra.mxu0 0.0
    %2125 = vmatprep.subr.mxu0 0.0
    %2126 = vmatpush1.msra.mxu0 0.0
    %2127 = vmatprep.subr.mxu0 0.0
    %2128 = vmatpush1.msra.mxu0 0.0
    %2129 = vmatprep.subr.mxu0 0.0
    %2130 = vmatpush1.msra.mxu0 0.0
    %2131 = vmatprep.subr.mxu0 0.0
    %2132 = vmatpush1.msra.mxu0 %v2094
    %2133 = vmatprep.subr.mxu0 0.0
    %2134 = vmatpush1.msra.mxu0 %v2092
    %2135 = vmatprep.subr.mxu0 0.0
    %2136 = vmatpush2.msra.mxu0 0.0
    %2137 = vmatprep.subr.mxu0 0.0
    %2138 = vmatpush2.msra.mxu0 0.0
    %2139 = vmatprep.subr.mxu0 0.0
    %2140 = vmatpush2.msra.mxu0 0.0
    %2141 = vmatprep.subr.mxu0 0.0
    %2142 = vmatpush2.msra.mxu0 0.0
    %2143 = vmatprep.subr.mxu0 0.0
    %2144 = vmatpush2.msra.mxu0 0.0
    %2145 = vmatprep.subr.mxu0 0.0
    %2146 = vmatpush2.msra.mxu0 0.0
    %2147 = vmatprep.subr.mxu0 0.0
    %2148 = vmatpush2.msra.mxu0 0.0
    %2149 = vmatprep.subr.mxu0 0.0
    %2150 = vmatpush2.msra.mxu0 0.0
    %2151 = vmatprep.subr.mxu0 0.0
    %2152 = vmatpush2.msra.mxu0 0.0
    %2153 = vmatprep.subr.mxu0 0.0
    %2154 = vmatpush2.msra.mxu0 0.0
    %2155 = vmatprep.subr.mxu0 0.0
    %2156 = vmatpush2.msra.mxu0 0.0
    %2157 = vmatprep.subr.mxu0 0.0
    %2158 = vmatpush2.msra.mxu0 0.0
    %2159 = vmatprep.subr.mxu0 0.0
    %2160 = vmatpush2.msra.mxu0 0.0
    %2161 = vmatprep.subr.mxu0 0.0
    %2162 = vmatpush2.msra.mxu0 0.0
    %2163 = vmatprep.subr.mxu0 0.0
    %2164 = vmatpush2.msra.mxu0 0.0
    %2165 = vmatprep.subr.mxu0 0.0
    %2166 = vmatpush2.msra.mxu0 0.0
    %2167 = vmatprep.mubr.f32.mxu0 0.0
    %2168 = vmatmul.mubr.f32.gmra.mxu0 %v2098
    %v2169 = vpop.f32.mrf.mxu0
    %v2170 = vadd.f32 0.0, %v2169
    %v2171 = vpop.f32.mrf.mxu0
    %2172 = vmatprep.mubr.f32.mxu0 0.0
    %2173 = vmatmul.mubr.f32.gmra.mxu0 %v2101
    %v2174 = vpop.f32.mrf.mxu0
    %v2175 = vadd.f32 0.0, %v2174
    %v2176 = vpop.f32.mrf.mxu0
    %2177 = vdwg.mxu0
    %v2178 = vpack.c.bf16 %v2175, %v2170
    %v2180 = vsel %vm343, %v2178, 0
    %v2183 = vsel %vm745, %v1391, 0
    %2185 = vmatprep.subr.bf16.mxu0 0
    %2186 = vmatpush1.bf16.msra.mxu0 0
    %2187 = vmatprep.subr.bf16.mxu0 0
    %2188 = vmatpush1.bf16.msra.mxu0 0
    %2189 = vmatprep.subr.bf16.mxu0 0
    %2190 = vmatpush1.bf16.msra.mxu0 0
    %2191 = vmatprep.subr.bf16.mxu0 0
    %2192 = vmatpush1.bf16.msra.mxu0 0
    %2193 = vmatprep.subr.bf16.mxu0 0
    %2194 = vmatpush1.bf16.msra.mxu0 0
    %2195 = vmatprep.subr.bf16.mxu0 0
    %2196 = vmatpush1.bf16.msra.mxu0 0
    %2197 = vmatprep.subr.bf16.mxu0 0
    %2198 = vmatpush1.bf16.msra.mxu0 0
    %2199 = vmatprep.subr.bf16.mxu0 0
    %2200 = vmatpush1.bf16.msra.mxu0 %v2183
    %2201 = vmatprep.subr.bf16.mxu0 0
    %2202 = vmatpush2.bf16.msra.mxu0 0
    %2203 = vmatprep.subr.bf16.mxu0 0
    %2204 = vmatpush2.bf16.msra.mxu0 0
    %2205 = vmatprep.subr.bf16.mxu0 0
    %2206 = vmatpush2.bf16.msra.mxu0 0
    %2207 = vmatprep.subr.bf16.mxu0 0
    %2208 = vmatpush2.bf16.msra.mxu0 0
    %2209 = vmatprep.subr.bf16.mxu0 0
    %2210 = vmatpush2.bf16.msra.mxu0 0
    %2211 = vmatprep.subr.bf16.mxu0 0
    %2212 = vmatpush2.bf16.msra.mxu0 0
    %2213 = vmatprep.subr.bf16.mxu0 0
    %2214 = vmatpush2.bf16.msra.mxu0 0
    %2215 = vmatprep.subr.bf16.mxu0 0
    %2216 = vmatpush2.bf16.msra.mxu0 0
    %2217 = vmatprep.mubr.bf16.mxu0 0
    %2218 = vmatmul.mubr.bf16.gmra.mxu0 %v2180
    %v2219 = vpop.f32.mrf.mxu0
    %v2220 = vadd.f32 0.0, %v2219
    %v2221 = vpop.f32.mrf.mxu0
    %v2222 = vpop.f32.mrf.mxu0
    %v2223 = vadd.f32 0.0, %v2222
    %v2224 = vpop.f32.mrf.mxu0
    %2225 = vdwg.mxu0
    %v2226 = vadd.f32 %v1972, %v2220
    %v2227 = vadd.f32 %v1975, %v2223
    %2228 = vrot.lane.b32.xlu0 %v1458, 104
    %v2229 = vpop.permute.xlu0 %2228
    %2230 = vrot.lane.b32.xlu0 %v1459, 104
    %v2231 = vpop.permute.xlu0 %2230
    %2232 = vrot.lane.b32.xlu0 %v1468, 72
    %v2233 = vpop.permute.xlu0 %2232
    %2234 = vrot.lane.b32.xlu0 %v1469, 72
    %v2235 = vpop.permute.xlu0 %2234
    %v2236 = vsel %vm343, %v2229, 0
    %v2238 = vsel %vm343, %v2231, 0
    %v2240 = vsel %vm343, %v2233, 0
    %v2242 = vsel %vm343, %v2235, 0
    %2244 = vmatprep.subr.mxu0 0.0
    %2245 = vmatpush1.xpose.msra.mxu0 0.0
    %2246 = vmatprep.subr.mxu0 0.0
    %2247 = vmatpush1.xpose.msra.mxu0 0.0
    %2248 = vmatprep.subr.mxu0 0.0
    %2249 = vmatpush1.xpose.msra.mxu0 0.0
    %2250 = vmatprep.subr.mxu0 0.0
    %2251 = vmatpush1.xpose.msra.mxu0 0.0
    %2252 = vmatprep.subr.mxu0 0.0
    %2253 = vmatpush1.xpose.msra.mxu0 0.0
    %2254 = vmatprep.subr.mxu0 0.0
    %2255 = vmatpush1.xpose.msra.mxu0 0.0
    %2256 = vmatprep.subr.mxu0 0.0
    %2257 = vmatpush1.xpose.msra.mxu0 0.0
    %2258 = vmatprep.subr.mxu0 0.0
    %2259 = vmatpush1.xpose.msra.mxu0 0.0
    %2260 = vmatprep.subr.mxu0 0.0
    %2261 = vmatpush1.xpose.msra.mxu0 0.0
    %2262 = vmatprep.subr.mxu0 0.0
    %2263 = vmatpush1.xpose.msra.mxu0 0.0
    %2264 = vmatprep.subr.mxu0 0.0
    %2265 = vmatpush1.xpose.msra.mxu0 0.0
    %2266 = vmatprep.subr.mxu0 0.0
    %2267 = vmatpush1.xpose.msra.mxu0 0.0
    %2268 = vmatprep.subr.mxu0 0.0
    %2269 = vmatpush1.xpose.msra.mxu0 0.0
    %2270 = vmatprep.subr.mxu0 0.0
    %2271 = vmatpush1.xpose.msra.mxu0 0.0
    %2272 = vmatprep.subr.mxu0 0.0
    %2273 = vmatpush1.xpose.msra.mxu0 %v2242
    %2274 = vmatprep.subr.mxu0 0.0
    %2275 = vmatpush1.xpose.msra.mxu0 %v2240
    %2276 = vmatprep.subr.mxu0 0.0
    %2277 = vmatpush2.xpose.msra.mxu0 0.0
    %2278 = vmatprep.subr.mxu0 0.0
    %2279 = vmatpush2.xpose.msra.mxu0 0.0
    %2280 = vmatprep.subr.mxu0 0.0
    %2281 = vmatpush2.xpose.msra.mxu0 0.0
    %2282 = vmatprep.subr.mxu0 0.0
    %2283 = vmatpush2.xpose.msra.mxu0 0.0
    %2284 = vmatprep.subr.mxu0 0.0
    %2285 = vmatpush2.xpose.msra.mxu0 0.0
    %2286 = vmatprep.subr.mxu0 0.0
    %2287 = vmatpush2.xpose.msra.mxu0 0.0
    %2288 = vmatprep.subr.mxu0 0.0
    %2289 = vmatpush2.xpose.msra.mxu0 0.0
    %2290 = vmatprep.subr.mxu0 0.0
    %2291 = vmatpush2.xpose.msra.mxu0 0.0
    %2292 = vmatprep.subr.mxu0 0.0
    %2293 = vmatpush2.xpose.msra.mxu0 0.0
    %2294 = vmatprep.subr.mxu0 0.0
    %2295 = vmatpush2.xpose.msra.mxu0 0.0
    %2296 = vmatprep.subr.mxu0 0.0
    %2297 = vmatpush2.xpose.msra.mxu0 0.0
    %2298 = vmatprep.subr.mxu0 0.0
    %2299 = vmatpush2.xpose.msra.mxu0 0.0
    %2300 = vmatprep.subr.mxu0 0.0
    %2301 = vmatpush2.xpose.msra.mxu0 0.0
    %2302 = vmatprep.subr.mxu0 0.0
    %2303 = vmatpush2.xpose.msra.mxu0 0.0
    %2304 = vmatprep.subr.mxu0 0.0
    %2305 = vmatpush2.xpose.msra.mxu0 0.0
    %2306 = vmatprep.subr.mxu0 0.0
    %2307 = vmatpush2.xpose.msra.mxu0 0.0
    %2308 = vmatprep.mubr.f32.mxu0 0.0
    %2309 = vmatmul.mubr.f32.gmra.mxu0 %v2236
    %v2310 = vpop.f32.mrf.mxu0
    %v2311 = vadd.f32 %v139, %v2310
    %v2312 = vpop.f32.mrf.mxu0
    %2313 = vmatprep.mubr.f32.mxu0 0.0
    %2314 = vmatmul.mubr.f32.gmra.mxu0 %v2238
    %v2315 = vpop.f32.mrf.mxu0
    %v2316 = vadd.f32 %v140, %v2315
    %v2317 = vpop.f32.mrf.mxu0
    %2318 = vdwg.mxu0
    %v2319 = vsel %vm156, %v2311, -inf
    %2320 = vmax.xlane.f32.xlu0 %v2319
    %v2321 = vpop.xlane.xlu0 %2320
    %v2322 = vsel %vm156, %v2316, -inf
    %2323 = vmax.xlane.f32.xlu0 %v2322
    %v2324 = vpop.xlane.xlu0 %2323
    %v2325 = vsub.f32 %v2311, %v2321
    %v2326 = vsub.f32 %v2316, %v2324
    %v2327 = vmul.f32 %v2325, 1.442695
    %v2328 = vpow.pop %v2327
    %v2329 = vmul.f32 %v2326, 1.442695
    %v2330 = vpow.pop %v2329
    %v2331 = vsel %vm156, %v2328, 0.0
    %2332 = vadd.xlane.f32.xlu0 %v2331
    %v2333 = vpop.xlane.xlu0 %2332
    %v2334 = vsel %vm156, %v2330, 0.0
    %2335 = vadd.xlane.f32.xlu0 %v2334
    %v2336 = vpop.xlane.xlu0 %2335
    %v2337 = vrcp.pop %v2333
    %v2338 = vrcp.pop %v2336
    %v2339 = vmul.f32 %v2328, %v2337
    %v2340 = vmul.f32 %v2330, %v2338
    %2341 = vrot.lane.b32.xlu0 %v1478, 40
    %v2342 = vpop.permute.xlu0 %2341
    %2343 = vrot.lane.b32.xlu0 %v1479, 40
    %v2344 = vpop.permute.xlu0 %2343
    %v2348 = vsel %vm156, %v2339, 0
    %v2351 = vsel %vm156, %v2340, 0
    %2353 = vmatprep.subr.mxu0 0.0
    %2354 = vmatpush1.msra.mxu0 0.0
    %2355 = vmatprep.subr.mxu0 0.0
    %2356 = vmatpush1.msra.mxu0 0.0
    %2357 = vmatprep.subr.mxu0 0.0
    %2358 = vmatpush1.msra.mxu0 0.0
    %2359 = vmatprep.subr.mxu0 0.0
    %2360 = vmatpush1.msra.mxu0 0.0
    %2361 = vmatprep.subr.mxu0 0.0
    %2362 = vmatpush1.msra.mxu0 0.0
    %2363 = vmatprep.subr.mxu0 0.0
    %2364 = vmatpush1.msra.mxu0 0.0
    %2365 = vmatprep.subr.mxu0 0.0
    %2366 = vmatpush1.msra.mxu0 0.0
    %2367 = vmatprep.subr.mxu0 0.0
    %2368 = vmatpush1.msra.mxu0 0.0
    %2369 = vmatprep.subr.mxu0 0.0
    %2370 = vmatpush1.msra.mxu0 0.0
    %2371 = vmatprep.subr.mxu0 0.0
    %2372 = vmatpush1.msra.mxu0 0.0
    %2373 = vmatprep.subr.mxu0 0.0
    %2374 = vmatpush1.msra.mxu0 0.0
    %2375 = vmatprep.subr.mxu0 0.0
    %2376 = vmatpush1.msra.mxu0 0.0
    %2377 = vmatprep.subr.mxu0 0.0
    %2378 = vmatpush1.msra.mxu0 0.0
    %2379 = vmatprep.subr.mxu0 0.0
    %2380 = vmatpush1.msra.mxu0 0.0
    %2381 = vmatprep.subr.mxu0 0.0
    %2382 = vmatpush1.msra.mxu0 %v2344
    %2383 = vmatprep.subr.mxu0 0.0
    %2384 = vmatpush1.msra.mxu0 %v2342
    %2385 = vmatprep.subr.mxu0 0.0
    %2386 = vmatpush2.msra.mxu0 0.0
    %2387 = vmatprep.subr.mxu0 0.0
    %2388 = vmatpush2.msra.mxu0 0.0
    %2389 = vmatprep.subr.mxu0 0.0
    %2390 = vmatpush2.msra.mxu0 0.0
    %2391 = vmatprep.subr.mxu0 0.0
    %2392 = vmatpush2.msra.mxu0 0.0
    %2393 = vmatprep.subr.mxu0 0.0
    %2394 = vmatpush2.msra.mxu0 0.0
    %2395 = vmatprep.subr.mxu0 0.0
    %2396 = vmatpush2.msra.mxu0 0.0
    %2397 = vmatprep.subr.mxu0 0.0
    %2398 = vmatpush2.msra.mxu0 0.0
    %2399 = vmatprep.subr.mxu0 0.0
    %2400 = vmatpush2.msra.mxu0 0.0
    %2401 = vmatprep.subr.mxu0 0.0
    %2402 = vmatpush2.msra.mxu0 0.0
    %2403 = vmatprep.subr.mxu0 0.0
    %2404 = vmatpush2.msra.mxu0 0.0
    %2405 = vmatprep.subr.mxu0 0.0
    %2406 = vmatpush2.msra.mxu0 0.0
    %2407 = vmatprep.subr.mxu0 0.0
    %2408 = vmatpush2.msra.mxu0 0.0
    %2409 = vmatprep.subr.mxu0 0.0
    %2410 = vmatpush2.msra.mxu0 0.0
    %2411 = vmatprep.subr.mxu0 0.0
    %2412 = vmatpush2.msra.mxu0 0.0
    %2413 = vmatprep.subr.mxu0 0.0
    %2414 = vmatpush2.msra.mxu0 0.0
    %2415 = vmatprep.subr.mxu0 0.0
    %2416 = vmatpush2.msra.mxu0 0.0
    %2417 = vmatprep.mubr.f32.mxu0 0.0
    %2418 = vmatmul.mubr.f32.gmra.mxu0 %v2348
    %v2419 = vpop.f32.mrf.mxu0
    %v2420 = vadd.f32 0.0, %v2419
    %v2421 = vpop.f32.mrf.mxu0
    %2422 = vmatprep.mubr.f32.mxu0 0.0
    %2423 = vmatmul.mubr.f32.gmra.mxu0 %v2351
    %v2424 = vpop.f32.mrf.mxu0
    %v2425 = vadd.f32 0.0, %v2424
    %v2426 = vpop.f32.mrf.mxu0
    %2427 = vdwg.mxu0
    %v2428 = vpack.c.bf16 %v2425, %v2420
    %v2430 = vsel %vm343, %v2428, 0
    %v2433 = vsel %vm745, %v1392, 0
    %2435 = vmatprep.subr.bf16.mxu0 0
    %2436 = vmatpush1.bf16.msra.mxu0 0
    %2437 = vmatprep.subr.bf16.mxu0 0
    %2438 = vmatpush1.bf16.msra.mxu0 0
    %2439 = vmatprep.subr.bf16.mxu0 0
    %2440 = vmatpush1.bf16.msra.mxu0 0
    %2441 = vmatprep.subr.bf16.mxu0 0
    %2442 = vmatpush1.bf16.msra.mxu0 0
    %2443 = vmatprep.subr.bf16.mxu0 0
    %2444 = vmatpush1.bf16.msra.mxu0 0
    %2445 = vmatprep.subr.bf16.mxu0 0
    %2446 = vmatpush1.bf16.msra.mxu0 0
    %2447 = vmatprep.subr.bf16.mxu0 0
    %2448 = vmatpush1.bf16.msra.mxu0 0
    %2449 = vmatprep.subr.bf16.mxu0 0
    %2450 = vmatpush1.bf16.msra.mxu0 %v2433
    %2451 = vmatprep.subr.bf16.mxu0 0
    %2452 = vmatpush2.bf16.msra.mxu0 0
    %2453 = vmatprep.subr.bf16.mxu0 0
    %2454 = vmatpush2.bf16.msra.mxu0 0
    %2455 = vmatprep.subr.bf16.mxu0 0
    %2456 = vmatpush2.bf16.msra.mxu0 0
    %2457 = vmatprep.subr.bf16.mxu0 0
    %2458 = vmatpush2.bf16.msra.mxu0 0
    %2459 = vmatprep.subr.bf16.mxu0 0
    %2460 = vmatpush2.bf16.msra.mxu0 0
    %2461 = vmatprep.subr.bf16.mxu0 0
    %2462 = vmatpush2.bf16.msra.mxu0 0
    %2463 = vmatprep.subr.bf16.mxu0 0
    %2464 = vmatpush2.bf16.msra.mxu0 0
    %2465 = vmatprep.subr.bf16.mxu0 0
    %2466 = vmatpush2.bf16.msra.mxu0 0
    %2467 = vmatprep.mubr.bf16.mxu0 0
    %2468 = vmatmul.mubr.bf16.gmra.mxu0 %v2430
    %v2469 = vpop.f32.mrf.mxu0
    %v2470 = vadd.f32 0.0, %v2469
    %v2471 = vpop.f32.mrf.mxu0
    %v2472 = vpop.f32.mrf.mxu0
    %v2473 = vadd.f32 0.0, %v2472
    %v2474 = vpop.f32.mrf.mxu0
    %2475 = vdwg.mxu0
    %v2476 = vadd.f32 %v2226, %v2470
    %v2477 = vadd.f32 %v2227, %v2473
    %v2478 = vlaneseq
    %v2479 = vshrl.u32 %v2478, 7
    %v2480 = vsub.s32 3, %v2479
    %v2481 = vrot.slane %v1394, %v2480
    %v2482 = vadd.f32 %v2476, %v2481
    %v2483 = vadd.f32 %v2477, %v2481
    %v2484 = vadd.f32 %v1381, %v2482
    %v2485 = vadd.f32 %v1382, %v2483
    %v2486 = vsel %vm201, %v2484, 0.0
    %2487 = vadd.xlane.f32.xlu0 %v2486
    %v2488 = vpop.xlane.xlu0 %2487
    %v2489 = vsel %vm201, %v2485, 0.0
    %2490 = vadd.xlane.f32.xlu0 %v2489
    %v2491 = vpop.xlane.xlu0 %2490
    %v2492 = vmul.f32 %v2488, %v208
    %v2493 = vmul.f32 %v2491, %v208
    %v2494 = vsub.f32 %v2484, %v2492
    %v2495 = vsub.f32 %v2485, %v2493
    %v2496 = vmul.f32 %v2494, %v2494
    %v2497 = vmul.f32 %v2495, %v2495
    %v2498 = vsel %vm201, %v2496, 0.0
    %2499 = vadd.xlane.f32.xlu0 %v2498
    %v2500 = vpop.xlane.xlu0 %2499
    %v2501 = vsel %vm201, %v2497, 0.0
    %2502 = vadd.xlane.f32.xlu0 %v2501
    %v2503 = vpop.xlane.xlu0 %2502
    %v2504 = vmul.f32 %v2500, %v208
    %v2505 = vmul.f32 %v2503, %v208
    %v2506 = vadd.f32 %v2504, 1e-05
    %v2507 = vadd.f32 %v2505, 1e-05
    %v2508 = vrsqrt.pop %v2506
    %v2509 = vrsqrt.pop %v2507
    %v2510 = vmul.f32 %v2494, %v2508
    %v2511 = vmul.f32 %v2495, %v2509
    %v2512 = vlaneseq
    %v2513 = vshrl.u32 %v2512, 7
    %v2514 = vsub.s32 4, %v2513
    %v2515 = vrot.slane %v1394, %v2514
    %v2516 = vmul.f32 %v2510, %v2515
    %v2517 = vmul.f32 %v2511, %v2515
    %v2518 = vlaneseq
    %v2519 = vshrl.u32 %v2518, 7
    %v2520 = vsub.s32 5, %v2519
    %v2521 = vrot.slane %v1394, %v2520
    %v2522 = vadd.f32 %v2516, %v2521
    %v2523 = vadd.f32 %v2517, %v2521
    %s2524 = scalar_lea.vmem [#allocation10], 32
    %v2525 = vld [vmem:[%s2524] sm:$0xf]
    %v2526 = vld [vmem:[%s2524 + $0x4] sm:$0xf]
    %v2527 = vld [vmem:[%s2524 + $0x8] sm:$0xf]
    %v2528 = vld [vmem:[%s2524 + $0xc] sm:$0xf]
    %s2529 = scalar_lea.vmem [#allocation11], 32
    %v2530 = vld [vmem:[%s2529] sm:$0xf]
    %v2531 = vld [vmem:[%s2529 + $0x4] sm:$0xf]
    %v2532 = vld [vmem:[%s2529 + $0x8] sm:$0xf]
    %v2533 = vld [vmem:[%s2529 + $0xc] sm:$0xf]
    %s2534 = scalar_lea.vmem [#allocation13], 16
    %v2535 = vld [vmem:[%s2534] sm:$0xff]
    %v2536 = vpack.c.bf16 %v2523, %v2522
    %v2541 = vunpack.c.l.b16 %v2525
    %v2542 = vunpack.c.l.b16 %v2526
    %v2543 = vunpack.c.l.b16 %v2527
    %v2544 = vunpack.c.l.b16 %v2528
    %v2545 = vpack.c.b16 %v2542, %v2541
    %v2546 = vpack.c.b16 %v2544, %v2543
    %v2550 = vsel %vm201, %v2536, 0
    %2552 = vmatprep.subr.bf16.mxu0 0
    %2553 = vmatpush1.bf16.msra.mxu0 0
    %2554 = vmatprep.subr.bf16.mxu0 0
    %2555 = vmatpush1.bf16.msra.mxu0 0
    %2556 = vmatprep.subr.bf16.mxu0 0
    %2557 = vmatpush1.bf16.msra.mxu0 0
    %2558 = vmatprep.subr.bf16.mxu0 0
    %2559 = vmatpush1.bf16.msra.mxu0 0
    %2560 = vmatprep.subr.bf16.mxu0 0
    %2561 = vmatpush1.bf16.msra.mxu0 0
    %2562 = vmatprep.subr.bf16.mxu0 0
    %2563 = vmatpush1.bf16.msra.mxu0 0
    %2564 = vmatprep.subr.bf16.mxu0 0
    %2565 = vmatpush1.bf16.msra.mxu0 %v2546
    %2566 = vmatprep.subr.bf16.mxu0 0
    %2567 = vmatpush1.bf16.msra.mxu0 %v2545
    %2568 = vmatprep.subr.bf16.mxu0 0
    %2569 = vmatpush2.bf16.msra.mxu0 0
    %2570 = vmatprep.subr.bf16.mxu0 0
    %2571 = vmatpush2.bf16.msra.mxu0 0
    %2572 = vmatprep.subr.bf16.mxu0 0
    %2573 = vmatpush2.bf16.msra.mxu0 0
    %2574 = vmatprep.subr.bf16.mxu0 0
    %2575 = vmatpush2.bf16.msra.mxu0 0
    %2576 = vmatprep.subr.bf16.mxu0 0
    %2577 = vmatpush2.bf16.msra.mxu0 0
    %2578 = vmatprep.subr.bf16.mxu0 0
    %2579 = vmatpush2.bf16.msra.mxu0 0
    %2580 = vmatprep.subr.bf16.mxu0 0
    %2581 = vmatpush2.bf16.msra.mxu0 0
    %2582 = vmatprep.subr.bf16.mxu0 0
    %2583 = vmatpush2.bf16.msra.mxu0 0
    %2584 = vmatprep.mubr.bf16.mxu0 0
    %2585 = vmatmul.mubr.bf16.gmra.mxu0 %v2550
    %v2586 = vpop.f32.mrf.mxu0
    %v2587 = vadd.f32 0.0, %v2586
    %v2588 = vpop.f32.mrf.mxu0
    %v2589 = vpop.f32.mrf.mxu0
    %v2590 = vadd.f32 0.0, %v2589
    %v2591 = vpop.f32.mrf.mxu0
    %2592 = vdwg.mxu0
    %v2593 = vlaneseq
    %v2594 = vshrl.u32 %v2593, 7
    %v2595 = vsub.s32 0, %v2594
    %v2596 = vrot.slane %v2535, %v2595
    %v2597 = vadd.f32 %v2587, %v2596
    %v2598 = vadd.f32 %v2590, %v2596
    %v2599 = vmul.f32 %v2597, 0.35355338
    %v2600 = vmul.f32 %v2598, 0.35355338
    %v2601 = vlaneseq
    %v2602 = vshrl.u32 %v2601, 7
    %v2603 = vsub.s32 1, %v2602
    %v2604 = vrot.slane %v2535, %v2603
    %2606 = vrot.lane.b32.xlu0 %v2604, 32
    %v2607 = vpop.permute.xlu0 %2606
    %v2609 = vadd.f32 %v2587, %v2607
    %v2610 = vadd.f32 %v2590, %v2607
    %v2611 = vlaneseq
    %v2612 = vshrl.u32 %v2611, 7
    %v2613 = vsub.s32 2, %v2612
    %v2614 = vrot.slane %v2535, %v2613
    %2616 = vrot.lane.b32.xlu0 %v2614, 64
    %v2617 = vpop.permute.xlu0 %2616
    %v2619 = vadd.f32 %v2587, %v2617
    %v2620 = vadd.f32 %v2590, %v2617
    %2623 = vrot.lane.b32.xlu0 %v2609, 96
    %v2624 = vpop.permute.xlu0 %2623
    %2625 = vrot.lane.b32.xlu0 %v2610, 96
    %v2626 = vpop.permute.xlu0 %2625
    %v2628 = vsel %vm343, %v2599, 0
    %v2631 = vsel %vm343, %v2600, 0
    %v2633 = vsel %vm343, %v2624, 0
    %v2635 = vsel %vm343, %v2626, 0
    %2637 = vmatprep.subr.mxu0 0.0
    %2638 = vmatpush1.xpose.msra.mxu0 0.0
    %2639 = vmatprep.subr.mxu0 0.0
    %2640 = vmatpush1.xpose.msra.mxu0 0.0
    %2641 = vmatprep.subr.mxu0 0.0
    %2642 = vmatpush1.xpose.msra.mxu0 0.0
    %2643 = vmatprep.subr.mxu0 0.0
    %2644 = vmatpush1.xpose.msra.mxu0 0.0
    %2645 = vmatprep.subr.mxu0 0.0
    %2646 = vmatpush1.xpose.msra.mxu0 0.0
    %2647 = vmatprep.subr.mxu0 0.0
    %2648 = vmatpush1.xpose.msra.mxu0 0.0
    %2649 = vmatprep.subr.mxu0 0.0
    %2650 = vmatpush1.xpose.msra.mxu0 0.0
    %2651 = vmatprep.subr.mxu0 0.0
    %2652 = vmatpush1.xpose.msra.mxu0 0.0
    %2653 = vmatprep.subr.mxu0 0.0
    %2654 = vmatpush1.xpose.msra.mxu0 0.0
    %2655 = vmatprep.subr.mxu0 0.0
    %2656 = vmatpush1.xpose.msra.mxu0 0.0
    %2657 = vmatprep.subr.mxu0 0.0
    %2658 = vmatpush1.xpose.msra.mxu0 0.0
    %2659 = vmatprep.subr.mxu0 0.0
    %2660 = vmatpush1.xpose.msra.mxu0 0.0
    %2661 = vmatprep.subr.mxu0 0.0
    %2662 = vmatpush1.xpose.msra.mxu0 0.0
    %2663 = vmatprep.subr.mxu0 0.0
    %2664 = vmatpush1.xpose.msra.mxu0 0.0
    %2665 = vmatprep.subr.mxu0 0.0
    %2666 = vmatpush1.xpose.msra.mxu0 %v2635
    %2667 = vmatprep.subr.mxu0 0.0
    %2668 = vmatpush1.xpose.msra.mxu0 %v2633
    %2669 = vmatprep.subr.mxu0 0.0
    %2670 = vmatpush2.xpose.msra.mxu0 0.0
    %2671 = vmatprep.subr.mxu0 0.0
    %2672 = vmatpush2.xpose.msra.mxu0 0.0
    %2673 = vmatprep.subr.mxu0 0.0
    %2674 = vmatpush2.xpose.msra.mxu0 0.0
    %2675 = vmatprep.subr.mxu0 0.0
    %2676 = vmatpush2.xpose.msra.mxu0 0.0
    %2677 = vmatprep.subr.mxu0 0.0
    %2678 = vmatpush2.xpose.msra.mxu0 0.0
    %2679 = vmatprep.subr.mxu0 0.0
    %2680 = vmatpush2.xpose.msra.mxu0 0.0
    %2681 = vmatprep.subr.mxu0 0.0
    %2682 = vmatpush2.xpose.msra.mxu0 0.0
    %2683 = vmatprep.subr.mxu0 0.0
    %2684 = vmatpush2.xpose.msra.mxu0 0.0
    %2685 = vmatprep.subr.mxu0 0.0
    %2686 = vmatpush2.xpose.msra.mxu0 0.0
    %2687 = vmatprep.subr.mxu0 0.0
    %2688 = vmatpush2.xpose.msra.mxu0 0.0
    %2689 = vmatprep.subr.mxu0 0.0
    %2690 = vmatpush2.xpose.msra.mxu0 0.0
    %2691 = vmatprep.subr.mxu0 0.0
    %2692 = vmatpush2.xpose.msra.mxu0 0.0
    %2693 = vmatprep.subr.mxu0 0.0
    %2694 = vmatpush2.xpose.msra.mxu0 0.0
    %2695 = vmatprep.subr.mxu0 0.0
    %2696 = vmatpush2.xpose.msra.mxu0 0.0
    %2697 = vmatprep.subr.mxu0 0.0
    %2698 = vmatpush2.xpose.msra.mxu0 0.0
    %2699 = vmatprep.subr.mxu0 0.0
    %2700 = vmatpush2.xpose.msra.mxu0 0.0
    %2701 = vmatprep.mubr.f32.mxu0 0.0
    %2702 = vmatmul.mubr.f32.gmra.mxu0 %v2628
    %v2703 = vpop.f32.mrf.mxu0
    %v2704 = vadd.f32 %v139, %v2703
    %v2705 = vpop.f32.mrf.mxu0
    %2706 = vmatprep.mubr.f32.mxu0 0.0
    %2707 = vmatmul.mubr.f32.gmra.mxu0 %v2631
    %v2708 = vpop.f32.mrf.mxu0
    %v2709 = vadd.f32 %v140, %v2708
    %v2710 = vpop.f32.mrf.mxu0
    %2711 = vdwg.mxu0
    %v2712 = vsel %vm156, %v2704, -inf
    %2713 = vmax.xlane.f32.xlu0 %v2712
    %v2714 = vpop.xlane.xlu0 %2713
    %v2715 = vsel %vm156, %v2709, -inf
    %2716 = vmax.xlane.f32.xlu0 %v2715
    %v2717 = vpop.xlane.xlu0 %2716
    %v2718 = vsub.f32 %v2704, %v2714
    %v2719 = vsub.f32 %v2709, %v2717
    %v2720 = vmul.f32 %v2718, 1.442695
    %v2721 = vpow.pop %v2720
    %v2722 = vmul.f32 %v2719, 1.442695
    %v2723 = vpow.pop %v2722
    %v2724 = vsel %vm156, %v2721, 0.0
    %2725 = vadd.xlane.f32.xlu0 %v2724
    %v2726 = vpop.xlane.xlu0 %2725
    %v2727 = vsel %vm156, %v2723, 0.0
    %2728 = vadd.xlane.f32.xlu0 %v2727
    %v2729 = vpop.xlane.xlu0 %2728
    %v2730 = vrcp.pop %v2726
    %v2731 = vrcp.pop %v2729
    %v2732 = vmul.f32 %v2721, %v2730
    %v2733 = vmul.f32 %v2723, %v2731
    %2736 = vrot.lane.b32.xlu0 %v2619, 64
    %v2737 = vpop.permute.xlu0 %2736
    %2738 = vrot.lane.b32.xlu0 %v2620, 64
    %v2739 = vpop.permute.xlu0 %2738
    %v2743 = vsel %vm156, %v2732, 0
    %v2746 = vsel %vm156, %v2733, 0
    %2748 = vmatprep.subr.mxu0 0.0
    %2749 = vmatpush1.msra.mxu0 0.0
    %2750 = vmatprep.subr.mxu0 0.0
    %2751 = vmatpush1.msra.mxu0 0.0
    %2752 = vmatprep.subr.mxu0 0.0
    %2753 = vmatpush1.msra.mxu0 0.0
    %2754 = vmatprep.subr.mxu0 0.0
    %2755 = vmatpush1.msra.mxu0 0.0
    %2756 = vmatprep.subr.mxu0 0.0
    %2757 = vmatpush1.msra.mxu0 0.0
    %2758 = vmatprep.subr.mxu0 0.0
    %2759 = vmatpush1.msra.mxu0 0.0
    %2760 = vmatprep.subr.mxu0 0.0
    %2761 = vmatpush1.msra.mxu0 0.0
    %2762 = vmatprep.subr.mxu0 0.0
    %2763 = vmatpush1.msra.mxu0 0.0
    %2764 = vmatprep.subr.mxu0 0.0
    %2765 = vmatpush1.msra.mxu0 0.0
    %2766 = vmatprep.subr.mxu0 0.0
    %2767 = vmatpush1.msra.mxu0 0.0
    %2768 = vmatprep.subr.mxu0 0.0
    %2769 = vmatpush1.msra.mxu0 0.0
    %2770 = vmatprep.subr.mxu0 0.0
    %2771 = vmatpush1.msra.mxu0 0.0
    %2772 = vmatprep.subr.mxu0 0.0
    %2773 = vmatpush1.msra.mxu0 0.0
    %2774 = vmatprep.subr.mxu0 0.0
    %2775 = vmatpush1.msra.mxu0 0.0
    %2776 = vmatprep.subr.mxu0 0.0
    %2777 = vmatpush1.msra.mxu0 %v2739
    %2778 = vmatprep.subr.mxu0 0.0
    %2779 = vmatpush1.msra.mxu0 %v2737
    %2780 = vmatprep.subr.mxu0 0.0
    %2781 = vmatpush2.msra.mxu0 0.0
    %2782 = vmatprep.subr.mxu0 0.0
    %2783 = vmatpush2.msra.mxu0 0.0
    %2784 = vmatprep.subr.mxu0 0.0
    %2785 = vmatpush2.msra.mxu0 0.0
    %2786 = vmatprep.subr.mxu0 0.0
    %2787 = vmatpush2.msra.mxu0 0.0
    %2788 = vmatprep.subr.mxu0 0.0
    %2789 = vmatpush2.msra.mxu0 0.0
    %2790 = vmatprep.subr.mxu0 0.0
    %2791 = vmatpush2.msra.mxu0 0.0
    %2792 = vmatprep.subr.mxu0 0.0
    %2793 = vmatpush2.msra.mxu0 0.0
    %2794 = vmatprep.subr.mxu0 0.0
    %2795 = vmatpush2.msra.mxu0 0.0
    %2796 = vmatprep.subr.mxu0 0.0
    %2797 = vmatpush2.msra.mxu0 0.0
    %2798 = vmatprep.subr.mxu0 0.0
    %2799 = vmatpush2.msra.mxu0 0.0
    %2800 = vmatprep.subr.mxu0 0.0
    %2801 = vmatpush2.msra.mxu0 0.0
    %2802 = vmatprep.subr.mxu0 0.0
    %2803 = vmatpush2.msra.mxu0 0.0
    %2804 = vmatprep.subr.mxu0 0.0
    %2805 = vmatpush2.msra.mxu0 0.0
    %2806 = vmatprep.subr.mxu0 0.0
    %2807 = vmatpush2.msra.mxu0 0.0
    %2808 = vmatprep.subr.mxu0 0.0
    %2809 = vmatpush2.msra.mxu0 0.0
    %2810 = vmatprep.subr.mxu0 0.0
    %2811 = vmatpush2.msra.mxu0 0.0
    %2812 = vmatprep.mubr.f32.mxu0 0.0
    %2813 = vmatmul.mubr.f32.gmra.mxu0 %v2743
    %v2814 = vpop.f32.mrf.mxu0
    %v2815 = vadd.f32 0.0, %v2814
    %v2816 = vpop.f32.mrf.mxu0
    %2817 = vmatprep.mubr.f32.mxu0 0.0
    %2818 = vmatmul.mubr.f32.gmra.mxu0 %v2746
    %v2819 = vpop.f32.mrf.mxu0
    %v2820 = vadd.f32 0.0, %v2819
    %v2821 = vpop.f32.mrf.mxu0
    %2822 = vdwg.mxu0
    %v2823 = vpack.c.bf16 %v2820, %v2815
    %2824 = vrot.lane.b32.xlu0 %v2599, 120
    %v2825 = vpop.permute.xlu0 %2824
    %2826 = vrot.lane.b32.xlu0 %v2600, 120
    %v2827 = vpop.permute.xlu0 %2826
    %2828 = vrot.lane.b32.xlu0 %v2609, 88
    %v2829 = vpop.permute.xlu0 %2828
    %2830 = vrot.lane.b32.xlu0 %v2610, 88
    %v2831 = vpop.permute.xlu0 %2830
    %v2832 = vsel %vm343, %v2825, 0
    %v2834 = vsel %vm343, %v2827, 0
    %v2836 = vsel %vm343, %v2829, 0
    %v2838 = vsel %vm343, %v2831, 0
    %2840 = vmatprep.subr.mxu0 0.0
    %2841 = vmatpush1.xpose.msra.mxu0 0.0
    %2842 = vmatprep.subr.mxu0 0.0
    %2843 = vmatpush1.xpose.msra.mxu0 0.0
    %2844 = vmatprep.subr.mxu0 0.0
    %2845 = vmatpush1.xpose.msra.mxu0 0.0
    %2846 = vmatprep.subr.mxu0 0.0
    %2847 = vmatpush1.xpose.msra.mxu0 0.0
    %2848 = vmatprep.subr.mxu0 0.0
    %2849 = vmatpush1.xpose.msra.mxu0 0.0
    %2850 = vmatprep.subr.mxu0 0.0
    %2851 = vmatpush1.xpose.msra.mxu0 0.0
    %2852 = vmatprep.subr.mxu0 0.0
    %2853 = vmatpush1.xpose.msra.mxu0 0.0
    %2854 = vmatprep.subr.mxu0 0.0
    %2855 = vmatpush1.xpose.msra.mxu0 0.0
    %2856 = vmatprep.subr.mxu0 0.0
    %2857 = vmatpush1.xpose.msra.mxu0 0.0
    %2858 = vmatprep.subr.mxu0 0.0
    %2859 = vmatpush1.xpose.msra.mxu0 0.0
    %2860 = vmatprep.subr.mxu0 0.0
    %2861 = vmatpush1.xpose.msra.mxu0 0.0
    %2862 = vmatprep.subr.mxu0 0.0
    %2863 = vmatpush1.xpose.msra.mxu0 0.0
    %2864 = vmatprep.subr.mxu0 0.0
    %2865 = vmatpush1.xpose.msra.mxu0 0.0
    %2866 = vmatprep.subr.mxu0 0.0
    %2867 = vmatpush1.xpose.msra.mxu0 0.0
    %2868 = vmatprep.subr.mxu0 0.0
    %2869 = vmatpush1.xpose.msra.mxu0 %v2838
    %2870 = vmatprep.subr.mxu0 0.0
    %2871 = vmatpush1.xpose.msra.mxu0 %v2836
    %2872 = vmatprep.subr.mxu0 0.0
    %2873 = vmatpush2.xpose.msra.mxu0 0.0
    %2874 = vmatprep.subr.mxu0 0.0
    %2875 = vmatpush2.xpose.msra.mxu0 0.0
    %2876 = vmatprep.subr.mxu0 0.0
    %2877 = vmatpush2.xpose.msra.mxu0 0.0
    %2878 = vmatprep.subr.mxu0 0.0
    %2879 = vmatpush2.xpose.msra.mxu0 0.0
    %2880 = vmatprep.subr.mxu0 0.0
    %2881 = vmatpush2.xpose.msra.mxu0 0.0
    %2882 = vmatprep.subr.mxu0 0.0
    %2883 = vmatpush2.xpose.msra.mxu0 0.0
    %2884 = vmatprep.subr.mxu0 0.0
    %2885 = vmatpush2.xpose.msra.mxu0 0.0
    %2886 = vmatprep.subr.mxu0 0.0
    %2887 = vmatpush2.xpose.msra.mxu0 0.0
    %2888 = vmatprep.subr.mxu0 0.0
    %2889 = vmatpush2.xpose.msra.mxu0 0.0
    %2890 = vmatprep.subr.mxu0 0.0
    %2891 = vmatpush2.xpose.msra.mxu0 0.0
    %2892 = vmatprep.subr.mxu0 0.0
    %2893 = vmatpush2.xpose.msra.mxu0 0.0
    %2894 = vmatprep.subr.mxu0 0.0
    %2895 = vmatpush2.xpose.msra.mxu0 0.0
    %2896 = vmatprep.subr.mxu0 0.0
    %2897 = vmatpush2.xpose.msra.mxu0 0.0
    %2898 = vmatprep.subr.mxu0 0.0
    %2899 = vmatpush2.xpose.msra.mxu0 0.0
    %2900 = vmatprep.subr.mxu0 0.0
    %2901 = vmatpush2.xpose.msra.mxu0 0.0
    %2902 = vmatprep.subr.mxu0 0.0
    %2903 = vmatpush2.xpose.msra.mxu0 0.0
    %2904 = vmatprep.mubr.f32.mxu0 0.0
    %2905 = vmatmul.mubr.f32.gmra.mxu0 %v2832
    %v2906 = vpop.f32.mrf.mxu0
    %v2907 = vadd.f32 %v139, %v2906
    %v2908 = vpop.f32.mrf.mxu0
    %2909 = vmatprep.mubr.f32.mxu0 0.0
    %2910 = vmatmul.mubr.f32.gmra.mxu0 %v2834
    %v2911 = vpop.f32.mrf.mxu0
    %v2912 = vadd.f32 %v140, %v2911
    %v2913 = vpop.f32.mrf.mxu0
    %2914 = vdwg.mxu0
    %v2915 = vsel %vm156, %v2907, -inf
    %2916 = vmax.xlane.f32.xlu0 %v2915
    %v2917 = vpop.xlane.xlu0 %2916
    %v2918 = vsel %vm156, %v2912, -inf
    %2919 = vmax.xlane.f32.xlu0 %v2918
    %v2920 = vpop.xlane.xlu0 %2919
    %v2921 = vsub.f32 %v2907, %v2917
    %v2922 = vsub.f32 %v2912, %v2920
    %v2923 = vmul.f32 %v2921, 1.442695
    %v2924 = vpow.pop %v2923
    %v2925 = vmul.f32 %v2922, 1.442695
    %v2926 = vpow.pop %v2925
    %v2927 = vsel %vm156, %v2924, 0.0
    %2928 = vadd.xlane.f32.xlu0 %v2927
    %v2929 = vpop.xlane.xlu0 %2928
    %v2930 = vsel %vm156, %v2926, 0.0
    %2931 = vadd.xlane.f32.xlu0 %v2930
    %v2932 = vpop.xlane.xlu0 %2931
    %v2933 = vrcp.pop %v2929
    %v2934 = vrcp.pop %v2932
    %v2935 = vmul.f32 %v2924, %v2933
    %v2936 = vmul.f32 %v2926, %v2934
    %2937 = vrot.lane.b32.xlu0 %v2619, 56
    %v2938 = vpop.permute.xlu0 %2937
    %2939 = vrot.lane.b32.xlu0 %v2620, 56
    %v2940 = vpop.permute.xlu0 %2939
    %v2944 = vsel %vm156, %v2935, 0
    %v2947 = vsel %vm156, %v2936, 0
    %2949 = vmatprep.subr.mxu0 0.0
    %2950 = vmatpush1.msra.mxu0 0.0
    %2951 = vmatprep.subr.mxu0 0.0
    %2952 = vmatpush1.msra.mxu0 0.0
    %2953 = vmatprep.subr.mxu0 0.0
    %2954 = vmatpush1.msra.mxu0 0.0
    %2955 = vmatprep.subr.mxu0 0.0
    %2956 = vmatpush1.msra.mxu0 0.0
    %2957 = vmatprep.subr.mxu0 0.0
    %2958 = vmatpush1.msra.mxu0 0.0
    %2959 = vmatprep.subr.mxu0 0.0
    %2960 = vmatpush1.msra.mxu0 0.0
    %2961 = vmatprep.subr.mxu0 0.0
    %2962 = vmatpush1.msra.mxu0 0.0
    %2963 = vmatprep.subr.mxu0 0.0
    %2964 = vmatpush1.msra.mxu0 0.0
    %2965 = vmatprep.subr.mxu0 0.0
    %2966 = vmatpush1.msra.mxu0 0.0
    %2967 = vmatprep.subr.mxu0 0.0
    %2968 = vmatpush1.msra.mxu0 0.0
    %2969 = vmatprep.subr.mxu0 0.0
    %2970 = vmatpush1.msra.mxu0 0.0
    %2971 = vmatprep.subr.mxu0 0.0
    %2972 = vmatpush1.msra.mxu0 0.0
    %2973 = vmatprep.subr.mxu0 0.0
    %2974 = vmatpush1.msra.mxu0 0.0
    %2975 = vmatprep.subr.mxu0 0.0
    %2976 = vmatpush1.msra.mxu0 0.0
    %2977 = vmatprep.subr.mxu0 0.0
    %2978 = vmatpush1.msra.mxu0 %v2940
    %2979 = vmatprep.subr.mxu0 0.0
    %2980 = vmatpush1.msra.mxu0 %v2938
    %2981 = vmatprep.subr.mxu0 0.0
    %2982 = vmatpush2.msra.mxu0 0.0
    %2983 = vmatprep.subr.mxu0 0.0
    %2984 = vmatpush2.msra.mxu0 0.0
    %2985 = vmatprep.subr.mxu0 0.0
    %2986 = vmatpush2.msra.mxu0 0.0
    %2987 = vmatprep.subr.mxu0 0.0
    %2988 = vmatpush2.msra.mxu0 0.0
    %2989 = vmatprep.subr.mxu0 0.0
    %2990 = vmatpush2.msra.mxu0 0.0
    %2991 = vmatprep.subr.mxu0 0.0
    %2992 = vmatpush2.msra.mxu0 0.0
    %2993 = vmatprep.subr.mxu0 0.0
    %2994 = vmatpush2.msra.mxu0 0.0
    %2995 = vmatprep.subr.mxu0 0.0
    %2996 = vmatpush2.msra.mxu0 0.0
    %2997 = vmatprep.subr.mxu0 0.0
    %2998 = vmatpush2.msra.mxu0 0.0
    %2999 = vmatprep.subr.mxu0 0.0
    %3000 = vmatpush2.msra.mxu0 0.0
    %3001 = vmatprep.subr.mxu0 0.0
    %3002 = vmatpush2.msra.mxu0 0.0
    %3003 = vmatprep.subr.mxu0 0.0
    %3004 = vmatpush2.msra.mxu0 0.0
    %3005 = vmatprep.subr.mxu0 0.0
    %3006 = vmatpush2.msra.mxu0 0.0
    %3007 = vmatprep.subr.mxu0 0.0
    %3008 = vmatpush2.msra.mxu0 0.0
    %3009 = vmatprep.subr.mxu0 0.0
    %3010 = vmatpush2.msra.mxu0 0.0
    %3011 = vmatprep.subr.mxu0 0.0
    %3012 = vmatpush2.msra.mxu0 0.0
    %3013 = vmatprep.mubr.f32.mxu0 0.0
    %3014 = vmatmul.mubr.f32.gmra.mxu0 %v2944
    %v3015 = vpop.f32.mrf.mxu0
    %v3016 = vadd.f32 0.0, %v3015
    %v3017 = vpop.f32.mrf.mxu0
    %3018 = vmatprep.mubr.f32.mxu0 0.0
    %3019 = vmatmul.mubr.f32.gmra.mxu0 %v2947
    %v3020 = vpop.f32.mrf.mxu0
    %v3021 = vadd.f32 0.0, %v3020
    %v3022 = vpop.f32.mrf.mxu0
    %3023 = vdwg.mxu0
    %v3024 = vpack.c.bf16 %v3021, %v3016
    %v3026 = vsel %vm343, %v3024, 0
    %v3029 = vsel %vm745, %v2531, 0
    %3031 = vmatprep.subr.bf16.mxu0 0
    %3032 = vmatpush1.bf16.msra.mxu0 0
    %3033 = vmatprep.subr.bf16.mxu0 0
    %3034 = vmatpush1.bf16.msra.mxu0 0
    %3035 = vmatprep.subr.bf16.mxu0 0
    %3036 = vmatpush1.bf16.msra.mxu0 0
    %3037 = vmatprep.subr.bf16.mxu0 0
    %3038 = vmatpush1.bf16.msra.mxu0 0
    %3039 = vmatprep.subr.bf16.mxu0 0
    %3040 = vmatpush1.bf16.msra.mxu0 0
    %3041 = vmatprep.subr.bf16.mxu0 0
    %3042 = vmatpush1.bf16.msra.mxu0 0
    %3043 = vmatprep.subr.bf16.mxu0 0
    %3044 = vmatpush1.bf16.msra.mxu0 0
    %3045 = vmatprep.subr.bf16.mxu0 0
    %3046 = vmatpush1.bf16.msra.mxu0 %v3029
    %3047 = vmatprep.subr.bf16.mxu0 0
    %3048 = vmatpush2.bf16.msra.mxu0 0
    %3049 = vmatprep.subr.bf16.mxu0 0
    %3050 = vmatpush2.bf16.msra.mxu0 0
    %3051 = vmatprep.subr.bf16.mxu0 0
    %3052 = vmatpush2.bf16.msra.mxu0 0
    %3053 = vmatprep.subr.bf16.mxu0 0
    %3054 = vmatpush2.bf16.msra.mxu0 0
    %3055 = vmatprep.subr.bf16.mxu0 0
    %3056 = vmatpush2.bf16.msra.mxu0 0
    %3057 = vmatprep.subr.bf16.mxu0 0
    %3058 = vmatpush2.bf16.msra.mxu0 0
    %3059 = vmatprep.subr.bf16.mxu0 0
    %3060 = vmatpush2.bf16.msra.mxu0 0
    %3061 = vmatprep.subr.bf16.mxu0 0
    %3062 = vmatpush2.bf16.msra.mxu0 0
    %3063 = vmatprep.mubr.bf16.mxu0 0
    %3064 = vmatmul.mubr.bf16.gmra.mxu0 %v3026
    %v3065 = vpop.f32.mrf.mxu0
    %v3066 = vadd.f32 0.0, %v3065
    %v3067 = vpop.f32.mrf.mxu0
    %v3068 = vpop.f32.mrf.mxu0
    %v3069 = vadd.f32 0.0, %v3068
    %v3070 = vpop.f32.mrf.mxu0
    %3071 = vdwg.mxu0
    %v3073 = vsel %vm343, %v2823, 0
    %v3076 = vsel %vm745, %v2530, 0
    %3078 = vmatprep.subr.bf16.mxu0 0
    %3079 = vmatpush1.bf16.msra.mxu0 0
    %3080 = vmatprep.subr.bf16.mxu0 0
    %3081 = vmatpush1.bf16.msra.mxu0 0
    %3082 = vmatprep.subr.bf16.mxu0 0
    %3083 = vmatpush1.bf16.msra.mxu0 0
    %3084 = vmatprep.subr.bf16.mxu0 0
    %3085 = vmatpush1.bf16.msra.mxu0 0
    %3086 = vmatprep.subr.bf16.mxu0 0
    %3087 = vmatpush1.bf16.msra.mxu0 0
    %3088 = vmatprep.subr.bf16.mxu0 0
    %3089 = vmatpush1.bf16.msra.mxu0 0
    %3090 = vmatprep.subr.bf16.mxu0 0
    %3091 = vmatpush1.bf16.msra.mxu0 0
    %3092 = vmatprep.subr.bf16.mxu0 0
    %3093 = vmatpush1.bf16.msra.mxu0 %v3076
    %3094 = vmatprep.subr.bf16.mxu0 0
    %3095 = vmatpush2.bf16.msra.mxu0 0
    %3096 = vmatprep.subr.bf16.mxu0 0
    %3097 = vmatpush2.bf16.msra.mxu0 0
    %3098 = vmatprep.subr.bf16.mxu0 0
    %3099 = vmatpush2.bf16.msra.mxu0 0
    %3100 = vmatprep.subr.bf16.mxu0 0
    %3101 = vmatpush2.bf16.msra.mxu0 0
    %3102 = vmatprep.subr.bf16.mxu0 0
    %3103 = vmatpush2.bf16.msra.mxu0 0
    %3104 = vmatprep.subr.bf16.mxu0 0
    %3105 = vmatpush2.bf16.msra.mxu0 0
    %3106 = vmatprep.subr.bf16.mxu0 0
    %3107 = vmatpush2.bf16.msra.mxu0 0
    %3108 = vmatprep.subr.bf16.mxu0 0
    %3109 = vmatpush2.bf16.msra.mxu0 0
    %3110 = vmatprep.mubr.bf16.mxu0 0
    %3111 = vmatmul.mubr.bf16.gmra.mxu0 %v3073
    %v3112 = vpop.f32.mrf.mxu0
    %v3113 = vadd.f32 %v3066, %v3112
    %v3114 = vpop.f32.mrf.mxu0
    %v3115 = vpop.f32.mrf.mxu0
    %v3116 = vadd.f32 %v3069, %v3115
    %v3117 = vpop.f32.mrf.mxu0
    %3118 = vdwg.mxu0
    %3119 = vrot.lane.b32.xlu0 %v2599, 112
    %v3120 = vpop.permute.xlu0 %3119
    %3121 = vrot.lane.b32.xlu0 %v2600, 112
    %v3122 = vpop.permute.xlu0 %3121
    %3123 = vrot.lane.b32.xlu0 %v2609, 80
    %v3124 = vpop.permute.xlu0 %3123
    %3125 = vrot.lane.b32.xlu0 %v2610, 80
    %v3126 = vpop.permute.xlu0 %3125
    %v3127 = vsel %vm343, %v3120, 0
    %v3129 = vsel %vm343, %v3122, 0
    %v3131 = vsel %vm343, %v3124, 0
    %v3133 = vsel %vm343, %v3126, 0
    %3135 = vmatprep.subr.mxu0 0.0
    %3136 = vmatpush1.xpose.msra.mxu0 0.0
    %3137 = vmatprep.subr.mxu0 0.0
    %3138 = vmatpush1.xpose.msra.mxu0 0.0
    %3139 = vmatprep.subr.mxu0 0.0
    %3140 = vmatpush1.xpose.msra.mxu0 0.0
    %3141 = vmatprep.subr.mxu0 0.0
    %3142 = vmatpush1.xpose.msra.mxu0 0.0
    %3143 = vmatprep.subr.mxu0 0.0
    %3144 = vmatpush1.xpose.msra.mxu0 0.0
    %3145 = vmatprep.subr.mxu0 0.0
    %3146 = vmatpush1.xpose.msra.mxu0 0.0
    %3147 = vmatprep.subr.mxu0 0.0
    %3148 = vmatpush1.xpose.msra.mxu0 0.0
    %3149 = vmatprep.subr.mxu0 0.0
    %3150 = vmatpush1.xpose.msra.mxu0 0.0
    %3151 = vmatprep.subr.mxu0 0.0
    %3152 = vmatpush1.xpose.msra.mxu0 0.0
    %3153 = vmatprep.subr.mxu0 0.0
    %3154 = vmatpush1.xpose.msra.mxu0 0.0
    %3155 = vmatprep.subr.mxu0 0.0
    %3156 = vmatpush1.xpose.msra.mxu0 0.0
    %3157 = vmatprep.subr.mxu0 0.0
    %3158 = vmatpush1.xpose.msra.mxu0 0.0
    %3159 = vmatprep.subr.mxu0 0.0
    %3160 = vmatpush1.xpose.msra.mxu0 0.0
    %3161 = vmatprep.subr.mxu0 0.0
    %3162 = vmatpush1.xpose.msra.mxu0 0.0
    %3163 = vmatprep.subr.mxu0 0.0
    %3164 = vmatpush1.xpose.msra.mxu0 %v3133
    %3165 = vmatprep.subr.mxu0 0.0
    %3166 = vmatpush1.xpose.msra.mxu0 %v3131
    %3167 = vmatprep.subr.mxu0 0.0
    %3168 = vmatpush2.xpose.msra.mxu0 0.0
    %3169 = vmatprep.subr.mxu0 0.0
    %3170 = vmatpush2.xpose.msra.mxu0 0.0
    %3171 = vmatprep.subr.mxu0 0.0
    %3172 = vmatpush2.xpose.msra.mxu0 0.0
    %3173 = vmatprep.subr.mxu0 0.0
    %3174 = vmatpush2.xpose.msra.mxu0 0.0
    %3175 = vmatprep.subr.mxu0 0.0
    %3176 = vmatpush2.xpose.msra.mxu0 0.0
    %3177 = vmatprep.subr.mxu0 0.0
    %3178 = vmatpush2.xpose.msra.mxu0 0.0
    %3179 = vmatprep.subr.mxu0 0.0
    %3180 = vmatpush2.xpose.msra.mxu0 0.0
    %3181 = vmatprep.subr.mxu0 0.0
    %3182 = vmatpush2.xpose.msra.mxu0 0.0
    %3183 = vmatprep.subr.mxu0 0.0
    %3184 = vmatpush2.xpose.msra.mxu0 0.0
    %3185 = vmatprep.subr.mxu0 0.0
    %3186 = vmatpush2.xpose.msra.mxu0 0.0
    %3187 = vmatprep.subr.mxu0 0.0
    %3188 = vmatpush2.xpose.msra.mxu0 0.0
    %3189 = vmatprep.subr.mxu0 0.0
    %3190 = vmatpush2.xpose.msra.mxu0 0.0
    %3191 = vmatprep.subr.mxu0 0.0
    %3192 = vmatpush2.xpose.msra.mxu0 0.0
    %3193 = vmatprep.subr.mxu0 0.0
    %3194 = vmatpush2.xpose.msra.mxu0 0.0
    %3195 = vmatprep.subr.mxu0 0.0
    %3196 = vmatpush2.xpose.msra.mxu0 0.0
    %3197 = vmatprep.subr.mxu0 0.0
    %3198 = vmatpush2.xpose.msra.mxu0 0.0
    %3199 = vmatprep.mubr.f32.mxu0 0.0
    %3200 = vmatmul.mubr.f32.gmra.mxu0 %v3127
    %v3201 = vpop.f32.mrf.mxu0
    %v3202 = vadd.f32 %v139, %v3201
    %v3203 = vpop.f32.mrf.mxu0
    %3204 = vmatprep.mubr.f32.mxu0 0.0
    %3205 = vmatmul.mubr.f32.gmra.mxu0 %v3129
    %v3206 = vpop.f32.mrf.mxu0
    %v3207 = vadd.f32 %v140, %v3206
    %v3208 = vpop.f32.mrf.mxu0
    %3209 = vdwg.mxu0
    %v3210 = vsel %vm156, %v3202, -inf
    %3211 = vmax.xlane.f32.xlu0 %v3210
    %v3212 = vpop.xlane.xlu0 %3211
    %v3213 = vsel %vm156, %v3207, -inf
    %3214 = vmax.xlane.f32.xlu0 %v3213
    %v3215 = vpop.xlane.xlu0 %3214
    %v3216 = vsub.f32 %v3202, %v3212
    %v3217 = vsub.f32 %v3207, %v3215
    %v3218 = vmul.f32 %v3216, 1.442695
    %v3219 = vpow.pop %v3218
    %v3220 = vmul.f32 %v3217, 1.442695
    %v3221 = vpow.pop %v3220
    %v3222 = vsel %vm156, %v3219, 0.0
    %3223 = vadd.xlane.f32.xlu0 %v3222
    %v3224 = vpop.xlane.xlu0 %3223
    %v3225 = vsel %vm156, %v3221, 0.0
    %3226 = vadd.xlane.f32.xlu0 %v3225
    %v3227 = vpop.xlane.xlu0 %3226
    %v3228 = vrcp.pop %v3224
    %v3229 = vrcp.pop %v3227
    %v3230 = vmul.f32 %v3219, %v3228
    %v3231 = vmul.f32 %v3221, %v3229
    %3232 = vrot.lane.b32.xlu0 %v2619, 48
    %v3233 = vpop.permute.xlu0 %3232
    %3234 = vrot.lane.b32.xlu0 %v2620, 48
    %v3235 = vpop.permute.xlu0 %3234
    %v3239 = vsel %vm156, %v3230, 0
    %v3242 = vsel %vm156, %v3231, 0
    %3244 = vmatprep.subr.mxu0 0.0
    %3245 = vmatpush1.msra.mxu0 0.0
    %3246 = vmatprep.subr.mxu0 0.0
    %3247 = vmatpush1.msra.mxu0 0.0
    %3248 = vmatprep.subr.mxu0 0.0
    %3249 = vmatpush1.msra.mxu0 0.0
    %3250 = vmatprep.subr.mxu0 0.0
    %3251 = vmatpush1.msra.mxu0 0.0
    %3252 = vmatprep.subr.mxu0 0.0
    %3253 = vmatpush1.msra.mxu0 0.0
    %3254 = vmatprep.subr.mxu0 0.0
    %3255 = vmatpush1.msra.mxu0 0.0
    %3256 = vmatprep.subr.mxu0 0.0
    %3257 = vmatpush1.msra.mxu0 0.0
    %3258 = vmatprep.subr.mxu0 0.0
    %3259 = vmatpush1.msra.mxu0 0.0
    %3260 = vmatprep.subr.mxu0 0.0
    %3261 = vmatpush1.msra.mxu0 0.0
    %3262 = vmatprep.subr.mxu0 0.0
    %3263 = vmatpush1.msra.mxu0 0.0
    %3264 = vmatprep.subr.mxu0 0.0
    %3265 = vmatpush1.msra.mxu0 0.0
    %3266 = vmatprep.subr.mxu0 0.0
    %3267 = vmatpush1.msra.mxu0 0.0
    %3268 = vmatprep.subr.mxu0 0.0
    %3269 = vmatpush1.msra.mxu0 0.0
    %3270 = vmatprep.subr.mxu0 0.0
    %3271 = vmatpush1.msra.mxu0 0.0
    %3272 = vmatprep.subr.mxu0 0.0
    %3273 = vmatpush1.msra.mxu0 %v3235
    %3274 = vmatprep.subr.mxu0 0.0
    %3275 = vmatpush1.msra.mxu0 %v3233
    %3276 = vmatprep.subr.mxu0 0.0
    %3277 = vmatpush2.msra.mxu0 0.0
    %3278 = vmatprep.subr.mxu0 0.0
    %3279 = vmatpush2.msra.mxu0 0.0
    %3280 = vmatprep.subr.mxu0 0.0
    %3281 = vmatpush2.msra.mxu0 0.0
    %3282 = vmatprep.subr.mxu0 0.0
    %3283 = vmatpush2.msra.mxu0 0.0
    %3284 = vmatprep.subr.mxu0 0.0
    %3285 = vmatpush2.msra.mxu0 0.0
    %3286 = vmatprep.subr.mxu0 0.0
    %3287 = vmatpush2.msra.mxu0 0.0
    %3288 = vmatprep.subr.mxu0 0.0
    %3289 = vmatpush2.msra.mxu0 0.0
    %3290 = vmatprep.subr.mxu0 0.0
    %3291 = vmatpush2.msra.mxu0 0.0
    %3292 = vmatprep.subr.mxu0 0.0
    %3293 = vmatpush2.msra.mxu0 0.0
    %3294 = vmatprep.subr.mxu0 0.0
    %3295 = vmatpush2.msra.mxu0 0.0
    %3296 = vmatprep.subr.mxu0 0.0
    %3297 = vmatpush2.msra.mxu0 0.0
    %3298 = vmatprep.subr.mxu0 0.0
    %3299 = vmatpush2.msra.mxu0 0.0
    %3300 = vmatprep.subr.mxu0 0.0
    %3301 = vmatpush2.msra.mxu0 0.0
    %3302 = vmatprep.subr.mxu0 0.0
    %3303 = vmatpush2.msra.mxu0 0.0
    %3304 = vmatprep.subr.mxu0 0.0
    %3305 = vmatpush2.msra.mxu0 0.0
    %3306 = vmatprep.subr.mxu0 0.0
    %3307 = vmatpush2.msra.mxu0 0.0
    %3308 = vmatprep.mubr.f32.mxu0 0.0
    %3309 = vmatmul.mubr.f32.gmra.mxu0 %v3239
    %v3310 = vpop.f32.mrf.mxu0
    %v3311 = vadd.f32 0.0, %v3310
    %v3312 = vpop.f32.mrf.mxu0
    %3313 = vmatprep.mubr.f32.mxu0 0.0
    %3314 = vmatmul.mubr.f32.gmra.mxu0 %v3242
    %v3315 = vpop.f32.mrf.mxu0
    %v3316 = vadd.f32 0.0, %v3315
    %v3317 = vpop.f32.mrf.mxu0
    %3318 = vdwg.mxu0
    %v3319 = vpack.c.bf16 %v3316, %v3311
    %v3321 = vsel %vm343, %v3319, 0
    %v3324 = vsel %vm745, %v2532, 0
    %3326 = vmatprep.subr.bf16.mxu0 0
    %3327 = vmatpush1.bf16.msra.mxu0 0
    %3328 = vmatprep.subr.bf16.mxu0 0
    %3329 = vmatpush1.bf16.msra.mxu0 0
    %3330 = vmatprep.subr.bf16.mxu0 0
    %3331 = vmatpush1.bf16.msra.mxu0 0
    %3332 = vmatprep.subr.bf16.mxu0 0
    %3333 = vmatpush1.bf16.msra.mxu0 0
    %3334 = vmatprep.subr.bf16.mxu0 0
    %3335 = vmatpush1.bf16.msra.mxu0 0
    %3336 = vmatprep.subr.bf16.mxu0 0
    %3337 = vmatpush1.bf16.msra.mxu0 0
    %3338 = vmatprep.subr.bf16.mxu0 0
    %3339 = vmatpush1.bf16.msra.mxu0 0
    %3340 = vmatprep.subr.bf16.mxu0 0
    %3341 = vmatpush1.bf16.msra.mxu0 %v3324
    %3342 = vmatprep.subr.bf16.mxu0 0
    %3343 = vmatpush2.bf16.msra.mxu0 0
    %3344 = vmatprep.subr.bf16.mxu0 0
    %3345 = vmatpush2.bf16.msra.mxu0 0
    %3346 = vmatprep.subr.bf16.mxu0 0
    %3347 = vmatpush2.bf16.msra.mxu0 0
    %3348 = vmatprep.subr.bf16.mxu0 0
    %3349 = vmatpush2.bf16.msra.mxu0 0
    %3350 = vmatprep.subr.bf16.mxu0 0
    %3351 = vmatpush2.bf16.msra.mxu0 0
    %3352 = vmatprep.subr.bf16.mxu0 0
    %3353 = vmatpush2.bf16.msra.mxu0 0
    %3354 = vmatprep.subr.bf16.mxu0 0
    %3355 = vmatpush2.bf16.msra.mxu0 0
    %3356 = vmatprep.subr.bf16.mxu0 0
    %3357 = vmatpush2.bf16.msra.mxu0 0
    %3358 = vmatprep.mubr.bf16.mxu0 0
    %3359 = vmatmul.mubr.bf16.gmra.mxu0 %v3321
    %v3360 = vpop.f32.mrf.mxu0
    %v3361 = vadd.f32 0.0, %v3360
    %v3362 = vpop.f32.mrf.mxu0
    %v3363 = vpop.f32.mrf.mxu0
    %v3364 = vadd.f32 0.0, %v3363
    %v3365 = vpop.f32.mrf.mxu0
    %3366 = vdwg.mxu0
    %v3367 = vadd.f32 %v3113, %v3361
    %v3368 = vadd.f32 %v3116, %v3364
    %3369 = vrot.lane.b32.xlu0 %v2599, 104
    %v3370 = vpop.permute.xlu0 %3369
    %3371 = vrot.lane.b32.xlu0 %v2600, 104
    %v3372 = vpop.permute.xlu0 %3371
    %3373 = vrot.lane.b32.xlu0 %v2609, 72
    %v3374 = vpop.permute.xlu0 %3373
    %3375 = vrot.lane.b32.xlu0 %v2610, 72
    %v3376 = vpop.permute.xlu0 %3375
    %v3377 = vsel %vm343, %v3370, 0
    %v3379 = vsel %vm343, %v3372, 0
    %v3381 = vsel %vm343, %v3374, 0
    %v3383 = vsel %vm343, %v3376, 0
    %3385 = vmatprep.subr.mxu0 0.0
    %3386 = vmatpush1.xpose.msra.mxu0 0.0
    %3387 = vmatprep.subr.mxu0 0.0
    %3388 = vmatpush1.xpose.msra.mxu0 0.0
    %3389 = vmatprep.subr.mxu0 0.0
    %3390 = vmatpush1.xpose.msra.mxu0 0.0
    %3391 = vmatprep.subr.mxu0 0.0
    %3392 = vmatpush1.xpose.msra.mxu0 0.0
    %3393 = vmatprep.subr.mxu0 0.0
    %3394 = vmatpush1.xpose.msra.mxu0 0.0
    %3395 = vmatprep.subr.mxu0 0.0
    %3396 = vmatpush1.xpose.msra.mxu0 0.0
    %3397 = vmatprep.subr.mxu0 0.0
    %3398 = vmatpush1.xpose.msra.mxu0 0.0
    %3399 = vmatprep.subr.mxu0 0.0
    %3400 = vmatpush1.xpose.msra.mxu0 0.0
    %3401 = vmatprep.subr.mxu0 0.0
    %3402 = vmatpush1.xpose.msra.mxu0 0.0
    %3403 = vmatprep.subr.mxu0 0.0
    %3404 = vmatpush1.xpose.msra.mxu0 0.0
    %3405 = vmatprep.subr.mxu0 0.0
    %3406 = vmatpush1.xpose.msra.mxu0 0.0
    %3407 = vmatprep.subr.mxu0 0.0
    %3408 = vmatpush1.xpose.msra.mxu0 0.0
    %3409 = vmatprep.subr.mxu0 0.0
    %3410 = vmatpush1.xpose.msra.mxu0 0.0
    %3411 = vmatprep.subr.mxu0 0.0
    %3412 = vmatpush1.xpose.msra.mxu0 0.0
    %3413 = vmatprep.subr.mxu0 0.0
    %3414 = vmatpush1.xpose.msra.mxu0 %v3383
    %3415 = vmatprep.subr.mxu0 0.0
    %3416 = vmatpush1.xpose.msra.mxu0 %v3381
    %3417 = vmatprep.subr.mxu0 0.0
    %3418 = vmatpush2.xpose.msra.mxu0 0.0
    %3419 = vmatprep.subr.mxu0 0.0
    %3420 = vmatpush2.xpose.msra.mxu0 0.0
    %3421 = vmatprep.subr.mxu0 0.0
    %3422 = vmatpush2.xpose.msra.mxu0 0.0
    %3423 = vmatprep.subr.mxu0 0.0
    %3424 = vmatpush2.xpose.msra.mxu0 0.0
    %3425 = vmatprep.subr.mxu0 0.0
    %3426 = vmatpush2.xpose.msra.mxu0 0.0
    %3427 = vmatprep.subr.mxu0 0.0
    %3428 = vmatpush2.xpose.msra.mxu0 0.0
    %3429 = vmatprep.subr.mxu0 0.0
    %3430 = vmatpush2.xpose.msra.mxu0 0.0
    %3431 = vmatprep.subr.mxu0 0.0
    %3432 = vmatpush2.xpose.msra.mxu0 0.0
    %3433 = vmatprep.subr.mxu0 0.0
    %3434 = vmatpush2.xpose.msra.mxu0 0.0
    %3435 = vmatprep.subr.mxu0 0.0
    %3436 = vmatpush2.xpose.msra.mxu0 0.0
    %3437 = vmatprep.subr.mxu0 0.0
    %3438 = vmatpush2.xpose.msra.mxu0 0.0
    %3439 = vmatprep.subr.mxu0 0.0
    %3440 = vmatpush2.xpose.msra.mxu0 0.0
    %3441 = vmatprep.subr.mxu0 0.0
    %3442 = vmatpush2.xpose.msra.mxu0 0.0
    %3443 = vmatprep.subr.mxu0 0.0
    %3444 = vmatpush2.xpose.msra.mxu0 0.0
    %3445 = vmatprep.subr.mxu0 0.0
    %3446 = vmatpush2.xpose.msra.mxu0 0.0
    %3447 = vmatprep.subr.mxu0 0.0
    %3448 = vmatpush2.xpose.msra.mxu0 0.0
    %3449 = vmatprep.mubr.f32.mxu0 0.0
    %3450 = vmatmul.mubr.f32.gmra.mxu0 %v3377
    %v3451 = vpop.f32.mrf.mxu0
    %v3452 = vadd.f32 %v139, %v3451
    %v3453 = vpop.f32.mrf.mxu0
    %3454 = vmatprep.mubr.f32.mxu0 0.0
    %3455 = vmatmul.mubr.f32.gmra.mxu0 %v3379
    %v3456 = vpop.f32.mrf.mxu0
    %v3457 = vadd.f32 %v140, %v3456
    %v3458 = vpop.f32.mrf.mxu0
    %3459 = vdwg.mxu0
    %v3460 = vsel %vm156, %v3452, -inf
    %3461 = vmax.xlane.f32.xlu0 %v3460
    %v3462 = vpop.xlane.xlu0 %3461
    %v3463 = vsel %vm156, %v3457, -inf
    %3464 = vmax.xlane.f32.xlu0 %v3463
    %v3465 = vpop.xlane.xlu0 %3464
    %v3466 = vsub.f32 %v3452, %v3462
    %v3467 = vsub.f32 %v3457, %v3465
    %v3468 = vmul.f32 %v3466, 1.442695
    %v3469 = vpow.pop %v3468
    %v3470 = vmul.f32 %v3467, 1.442695
    %v3471 = vpow.pop %v3470
    %v3472 = vsel %vm156, %v3469, 0.0
    %3473 = vadd.xlane.f32.xlu0 %v3472
    %v3474 = vpop.xlane.xlu0 %3473
    %v3475 = vsel %vm156, %v3471, 0.0
    %3476 = vadd.xlane.f32.xlu0 %v3475
    %v3477 = vpop.xlane.xlu0 %3476
    %v3478 = vrcp.pop %v3474
    %v3479 = vrcp.pop %v3477
    %v3480 = vmul.f32 %v3469, %v3478
    %v3481 = vmul.f32 %v3471, %v3479
    %3482 = vrot.lane.b32.xlu0 %v2619, 40
    %v3483 = vpop.permute.xlu0 %3482
    %3484 = vrot.lane.b32.xlu0 %v2620, 40
    %v3485 = vpop.permute.xlu0 %3484
    %v3489 = vsel %vm156, %v3480, 0
    %v3492 = vsel %vm156, %v3481, 0
    %3494 = vmatprep.subr.mxu0 0.0
    %3495 = vmatpush1.msra.mxu0 0.0
    %3496 = vmatprep.subr.mxu0 0.0
    %3497 = vmatpush1.msra.mxu0 0.0
    %3498 = vmatprep.subr.mxu0 0.0
    %3499 = vmatpush1.msra.mxu0 0.0
    %3500 = vmatprep.subr.mxu0 0.0
    %3501 = vmatpush1.msra.mxu0 0.0
    %3502 = vmatprep.subr.mxu0 0.0
    %3503 = vmatpush1.msra.mxu0 0.0
    %3504 = vmatprep.subr.mxu0 0.0
    %3505 = vmatpush1.msra.mxu0 0.0
    %3506 = vmatprep.subr.mxu0 0.0
    %3507 = vmatpush1.msra.mxu0 0.0
    %3508 = vmatprep.subr.mxu0 0.0
    %3509 = vmatpush1.msra.mxu0 0.0
    %3510 = vmatprep.subr.mxu0 0.0
    %3511 = vmatpush1.msra.mxu0 0.0
    %3512 = vmatprep.subr.mxu0 0.0
    %3513 = vmatpush1.msra.mxu0 0.0
    %3514 = vmatprep.subr.mxu0 0.0
    %3515 = vmatpush1.msra.mxu0 0.0
    %3516 = vmatprep.subr.mxu0 0.0
    %3517 = vmatpush1.msra.mxu0 0.0
    %3518 = vmatprep.subr.mxu0 0.0
    %3519 = vmatpush1.msra.mxu0 0.0
    %3520 = vmatprep.subr.mxu0 0.0
    %3521 = vmatpush1.msra.mxu0 0.0
    %3522 = vmatprep.subr.mxu0 0.0
    %3523 = vmatpush1.msra.mxu0 %v3485
    %3524 = vmatprep.subr.mxu0 0.0
    %3525 = vmatpush1.msra.mxu0 %v3483
    %3526 = vmatprep.subr.mxu0 0.0
    %3527 = vmatpush2.msra.mxu0 0.0
    %3528 = vmatprep.subr.mxu0 0.0
    %3529 = vmatpush2.msra.mxu0 0.0
    %3530 = vmatprep.subr.mxu0 0.0
    %3531 = vmatpush2.msra.mxu0 0.0
    %3532 = vmatprep.subr.mxu0 0.0
    %3533 = vmatpush2.msra.mxu0 0.0
    %3534 = vmatprep.subr.mxu0 0.0
    %3535 = vmatpush2.msra.mxu0 0.0
    %3536 = vmatprep.subr.mxu0 0.0
    %3537 = vmatpush2.msra.mxu0 0.0
    %3538 = vmatprep.subr.mxu0 0.0
    %3539 = vmatpush2.msra.mxu0 0.0
    %3540 = vmatprep.subr.mxu0 0.0
    %3541 = vmatpush2.msra.mxu0 0.0
    %3542 = vmatprep.subr.mxu0 0.0
    %3543 = vmatpush2.msra.mxu0 0.0
    %3544 = vmatprep.subr.mxu0 0.0
    %3545 = vmatpush2.msra.mxu0 0.0
    %3546 = vmatprep.subr.mxu0 0.0
    %3547 = vmatpush2.msra.mxu0 0.0
    %3548 = vmatprep.subr.mxu0 0.0
    %3549 = vmatpush2.msra.mxu0 0.0
    %3550 = vmatprep.subr.mxu0 0.0
    %3551 = vmatpush2.msra.mxu0 0.0
    %3552 = vmatprep.subr.mxu0 0.0
    %3553 = vmatpush2.msra.mxu0 0.0
    %3554 = vmatprep.subr.mxu0 0.0
    %3555 = vmatpush2.msra.mxu0 0.0
    %3556 = vmatprep.subr.mxu0 0.0
    %3557 = vmatpush2.msra.mxu0 0.0
    %3558 = vmatprep.mubr.f32.mxu0 0.0
    %3559 = vmatmul.mubr.f32.gmra.mxu0 %v3489
    %v3560 = vpop.f32.mrf.mxu0
    %v3561 = vadd.f32 0.0, %v3560
    %v3562 = vpop.f32.mrf.mxu0
    %3563 = vmatprep.mubr.f32.mxu0 0.0
    %3564 = vmatmul.mubr.f32.gmra.mxu0 %v3492
    %v3565 = vpop.f32.mrf.mxu0
    %v3566 = vadd.f32 0.0, %v3565
    %v3567 = vpop.f32.mrf.mxu0
    %3568 = vdwg.mxu0
    %v3569 = vpack.c.bf16 %v3566, %v3561
    %v3571 = vsel %vm343, %v3569, 0
    %v3574 = vsel %vm745, %v2533, 0
    %3576 = vmatprep.subr.bf16.mxu0 0
    %3577 = vmatpush1.bf16.msra.mxu0 0
    %3578 = vmatprep.subr.bf16.mxu0 0
    %3579 = vmatpush1.bf16.msra.mxu0 0
    %3580 = vmatprep.subr.bf16.mxu0 0
    %3581 = vmatpush1.bf16.msra.mxu0 0
    %3582 = vmatprep.subr.bf16.mxu0 0
    %3583 = vmatpush1.bf16.msra.mxu0 0
    %3584 = vmatprep.subr.bf16.mxu0 0
    %3585 = vmatpush1.bf16.msra.mxu0 0
    %3586 = vmatprep.subr.bf16.mxu0 0
    %3587 = vmatpush1.bf16.msra.mxu0 0
    %3588 = vmatprep.subr.bf16.mxu0 0
    %3589 = vmatpush1.bf16.msra.mxu0 0
    %3590 = vmatprep.subr.bf16.mxu0 0
    %3591 = vmatpush1.bf16.msra.mxu0 %v3574
    %3592 = vmatprep.subr.bf16.mxu0 0
    %3593 = vmatpush2.bf16.msra.mxu0 0
    %3594 = vmatprep.subr.bf16.mxu0 0
    %3595 = vmatpush2.bf16.msra.mxu0 0
    %3596 = vmatprep.subr.bf16.mxu0 0
    %3597 = vmatpush2.bf16.msra.mxu0 0
    %3598 = vmatprep.subr.bf16.mxu0 0
    %3599 = vmatpush2.bf16.msra.mxu0 0
    %3600 = vmatprep.subr.bf16.mxu0 0
    %3601 = vmatpush2.bf16.msra.mxu0 0
    %3602 = vmatprep.subr.bf16.mxu0 0
    %3603 = vmatpush2.bf16.msra.mxu0 0
    %3604 = vmatprep.subr.bf16.mxu0 0
    %3605 = vmatpush2.bf16.msra.mxu0 0
    %3606 = vmatprep.subr.bf16.mxu0 0
    %3607 = vmatpush2.bf16.msra.mxu0 0
    %3608 = vmatprep.mubr.bf16.mxu0 0
    %3609 = vmatmul.mubr.bf16.gmra.mxu0 %v3571
    %v3610 = vpop.f32.mrf.mxu0
    %v3611 = vadd.f32 0.0, %v3610
    %v3612 = vpop.f32.mrf.mxu0
    %v3613 = vpop.f32.mrf.mxu0
    %v3614 = vadd.f32 0.0, %v3613
    %v3615 = vpop.f32.mrf.mxu0
    %3616 = vdwg.mxu0
    %v3617 = vadd.f32 %v3367, %v3611
    %v3618 = vadd.f32 %v3368, %v3614
    %v3619 = vlaneseq
    %v3620 = vshrl.u32 %v3619, 7
    %v3621 = vsub.s32 3, %v3620
    %v3622 = vrot.slane %v2535, %v3621
    %v3623 = vadd.f32 %v3617, %v3622
    %v3624 = vadd.f32 %v3618, %v3622
    %v3625 = vadd.f32 %v2522, %v3623
    %v3626 = vadd.f32 %v2523, %v3624
    %v3627 = vsel %vm201, %v3625, 0.0
    %3628 = vadd.xlane.f32.xlu0 %v3627
    %v3629 = vpop.xlane.xlu0 %3628
    %v3630 = vsel %vm201, %v3626, 0.0
    %3631 = vadd.xlane.f32.xlu0 %v3630
    %v3632 = vpop.xlane.xlu0 %3631
    %v3633 = vmul.f32 %v3629, %v208
    %v3634 = vmul.f32 %v3632, %v208
    %v3635 = vsub.f32 %v3625, %v3633
    %v3636 = vsub.f32 %v3626, %v3634
    %v3637 = vmul.f32 %v3635, %v3635
    %v3638 = vmul.f32 %v3636, %v3636
    %v3639 = vsel %vm201, %v3637, 0.0
    %3640 = vadd.xlane.f32.xlu0 %v3639
    %v3641 = vpop.xlane.xlu0 %3640
    %v3642 = vsel %vm201, %v3638, 0.0
    %3643 = vadd.xlane.f32.xlu0 %v3642
    %v3644 = vpop.xlane.xlu0 %3643
    %v3645 = vmul.f32 %v3641, %v208
    %v3646 = vmul.f32 %v3644, %v208
    %v3647 = vadd.f32 %v3645, 1e-05
    %v3648 = vadd.f32 %v3646, 1e-05
    %v3649 = vrsqrt.pop %v3647
    %v3650 = vrsqrt.pop %v3648
    %v3651 = vmul.f32 %v3635, %v3649
    %v3652 = vmul.f32 %v3636, %v3650
    %v3653 = vlaneseq
    %v3654 = vshrl.u32 %v3653, 7
    %v3655 = vsub.s32 4, %v3654
    %v3656 = vrot.slane %v2535, %v3655
    %v3657 = vmul.f32 %v3651, %v3656
    %v3658 = vmul.f32 %v3652, %v3656
    %v3659 = vlaneseq
    %v3660 = vshrl.u32 %v3659, 7
    %v3661 = vsub.s32 5, %v3660
    %v3662 = vrot.slane %v2535, %v3661
    %v3663 = vadd.f32 %v3657, %v3662
    %v3664 = vadd.f32 %v3658, %v3662
    %v3665 = vpack.c.bf16 %v3664, %v3663
    %v3666 = vld [vmem:[#allocation14] sm:$0xf]
    %v3667 = vld [vmem:[#allocation14 + $0x4] sm:$0xf]
    %v3668 = vld [vmem:[#allocation14 + $0x8] sm:$0xf]
    %v3669 = vld [vmem:[#allocation14 + $0xc] sm:$0xf]
    %v3670 = vlaneseq
    %v3671 = vshrl.u32 %v3670, 7
    %v3672 = vsub.s32 3, %v3671
    %v3673 = vrot.slane %v138, %v3672
    %v3678 = vunpack.c.l.b16 %v3666
    %v3679 = vunpack.c.l.b16 %v3667
    %v3680 = vunpack.c.l.b16 %v3668
    %v3681 = vunpack.c.l.b16 %v3669
    %v3682 = vpack.c.b16 %v3679, %v3678
    %v3683 = vpack.c.b16 %v3681, %v3680
    %v3687 = vsel %vm201, %v3665, 0
    %3689 = vmatprep.subr.bf16.mxu0 0
    %3690 = vmatpush1.bf16.msra.mxu0 0
    %3691 = vmatprep.subr.bf16.mxu0 0
    %3692 = vmatpush1.bf16.msra.mxu0 0
    %3693 = vmatprep.subr.bf16.mxu0 0
    %3694 = vmatpush1.bf16.msra.mxu0 0
    %3695 = vmatprep.subr.bf16.mxu0 0
    %3696 = vmatpush1.bf16.msra.mxu0 0
    %3697 = vmatprep.subr.bf16.mxu0 0
    %3698 = vmatpush1.bf16.msra.mxu0 0
    %3699 = vmatprep.subr.bf16.mxu0 0
    %3700 = vmatpush1.bf16.msra.mxu0 0
    %3701 = vmatprep.subr.bf16.mxu0 0
    %3702 = vmatpush1.bf16.msra.mxu0 %v3683
    %3703 = vmatprep.subr.bf16.mxu0 0
    %3704 = vmatpush1.bf16.msra.mxu0 %v3682
    %3705 = vmatprep.subr.bf16.mxu0 0
    %3706 = vmatpush2.bf16.msra.mxu0 0
    %3707 = vmatprep.subr.bf16.mxu0 0
    %3708 = vmatpush2.bf16.msra.mxu0 0
    %3709 = vmatprep.subr.bf16.mxu0 0
    %3710 = vmatpush2.bf16.msra.mxu0 0
    %3711 = vmatprep.subr.bf16.mxu0 0
    %3712 = vmatpush2.bf16.msra.mxu0 0
    %3713 = vmatprep.subr.bf16.mxu0 0
    %3714 = vmatpush2.bf16.msra.mxu0 0
    %3715 = vmatprep.subr.bf16.mxu0 0
    %3716 = vmatpush2.bf16.msra.mxu0 0
    %3717 = vmatprep.subr.bf16.mxu0 0
    %3718 = vmatpush2.bf16.msra.mxu0 0
    %3719 = vmatprep.subr.bf16.mxu0 0
    %3720 = vmatpush2.bf16.msra.mxu0 0
    %3721 = vmatprep.mubr.bf16.mxu0 0
    %3722 = vmatmul.mubr.bf16.gmra.mxu0 %v3687
    %v3723 = vpop.f32.mrf.mxu0
    %v3724 = vadd.f32 %v3673, %v3723
    %v3725 = vpop.f32.mrf.mxu0
    %v3726 = vpop.f32.mrf.mxu0
    %v3727 = vadd.f32 %v3673, %v3726
    %v3728 = vpop.f32.mrf.mxu0
    %3729 = vdwg.mxu0
    %v3730 = vsel %vm201, %v3724, 0.0
    %3731 = vadd.xlane.f32.xlu0 %v3730
    %v3732 = vpop.xlane.xlu0 %3731
    %v3733 = vsel %vm201, %v3727, 0.0
    %3734 = vadd.xlane.f32.xlu0 %v3733
    %v3735 = vpop.xlane.xlu0 %3734
    %v3736 = vmul.f32 %v3732, %v208
    %v3737 = vmul.f32 %v3735, %v208
    %v3738 = vsub.f32 %v3724, %v3736
    %v3739 = vsub.f32 %v3727, %v3737
    %v3740 = vmul.f32 %v3738, %v3738
    %v3741 = vmul.f32 %v3739, %v3739
    %v3742 = vsel %vm201, %v3740, 0.0
    %3743 = vadd.xlane.f32.xlu0 %v3742
    %v3744 = vpop.xlane.xlu0 %3743
    %v3745 = vsel %vm201, %v3741, 0.0
    %3746 = vadd.xlane.f32.xlu0 %v3745
    %v3747 = vpop.xlane.xlu0 %3746
    %v3748 = vmul.f32 %v3744, %v208
    %v3749 = vmul.f32 %v3747, %v208
    %v3750 = vadd.f32 %v3748, 1e-05
    %v3751 = vadd.f32 %v3749, 1e-05
    %v3752 = vrsqrt.pop %v3750
    %v3753 = vrsqrt.pop %v3751
    %v3754 = vmul.f32 %v3738, %v3752
    %v3755 = vmul.f32 %v3739, %v3753
    %v3756 = vlaneseq
    %v3757 = vshrl.u32 %v3756, 7
    %v3758 = vsub.s32 4, %v3757
    %v3759 = vrot.slane %v138, %v3758
    %v3760 = vmul.f32 %v3754, %v3759
    %v3761 = vmul.f32 %v3755, %v3759
    %v3762 = vlaneseq
    %v3763 = vshrl.u32 %v3762, 7
    %v3764 = vsub.s32 5, %v3763
    %v3765 = vrot.slane %v138, %v3764
    %v3766 = vadd.f32 %v3760, %v3765
    %v3767 = vadd.f32 %v3761, %v3765
    %3768 = vst.msk [vmem:[#allocation16] sm:$0xff] %vm201, %v3766
    %3769 = vst.msk [vmem:[#allocation16 + $0x8] sm:$0xff] %vm201, %v3767
    // Predicated region
    $region66: #{tpu_custom_call.1} parent=1 // pred_check
      _
    $region67: #{tpu_custom_call.1} parent=1 // pred_check_branch
      %3771 = sbr.rel (0) target = $region69
    $region68: #{tpu_custom_call.1} parent=1 // pred_region
      %s3773 = ssub.s32 256, 256
      %3774 = vsyncadd [#allocation4], %s3773
      %s3775 = sshll.u32 [#allocation16], 4
      %s3776 = int_to_ptr.vmem [resolvable:$true] %s3775
      %3781 = dma.vmem_to_hbm [thread:$0]  %s3776, 256, %s8, [#allocation4], 128, 128, 8
    $region69: #{tpu_custom_call.1} parent=1 // pred_fallthru
      _
    // Predicated region
    $region70: #{tpu_custom_call.1} parent=1 // pred_check
      _
    $region71: #{tpu_custom_call.1} parent=1 // pred_check_branch
      %3783 = sbr.rel (0) target = $region73
    $region72: #{tpu_custom_call.1} parent=1 // pred_region
      %3784 = dma.done [#allocation4], 256
    $region73: #{tpu_custom_call.1} parent=1 // pred_fallthru
      _
    %3785 = vsyncpa [#allocation3], 1
    %3786 = vsyncpa [#allocation6], 1
    %3787 = vsyncpa [#allocation9], 1
    %3788 = vsyncpa [#allocation12], 1
    %3789 = vsyncpa [#allocation15], 1
    %3790 = vsyncpa [#allocation4], 1

</llo_original>
